<compile_context>
chip_gen: v5e
topology: v5e:2x2
jax: 0.10.0
libtpu: 0.0.40
codegen_flags: <defaults>
</compile_context>

<pallas_src>
import functools
import math

import jax
import jax.numpy as jnp
from jax import lax
from jax.experimental import pallas as pl
from jax.experimental.pallas import tpu as pltpu

_NEG_BIG = -1e30               # additive key-mask bias (no -inf NaN hazard)
_LN_EPS = 1e-5
_MATMUL_DTYPE = jnp.bfloat16   # MXU operand dtype (weights)
_ACT_DTYPE = jnp.bfloat16      # inter-kernel activation dtype in HBM
_VMEM_LIMIT = 64 * 1024 * 1024


# ----------------------------------------------------------------------------
# Small helpers
# ----------------------------------------------------------------------------
def _cparams(n_axes):
    return pltpu.CompilerParams(
        dimension_semantics=("parallel",) * n_axes,
        vmem_limit_bytes=_VMEM_LIMIT)


def _choose_tile(M, cap=512):
    """(tile, padded_M): tile is a multiple of 8 dividing padded_M, <= cap."""
    Mp = ((M + 7) // 8) * 8
    t = min(cap, Mp)
    t -= t % 8
    t = max(t, 8)
    while Mp % t:
        t -= 8
    return t, Mp


def _choose_q_tile(S, cap=128):
    """Query-row tile for attention: multiple of 8 dividing S (else full S)."""
    if S % 8:
        return S
    t = min(cap, S)
    t -= t % 8
    t = max(t, 8)
    while S % t:
        t -= 8
    return t


# ----------------------------------------------------------------------------
# Kernel 1: fused QKV projection  (x @ [Wq|Wk|Wv] + b, split into 3 bf16 slabs)
# ----------------------------------------------------------------------------
def _qkv_kernel(x_ref, w_ref, b_ref, q_ref, k_ref, v_ref, *, hdk):
    x = x_ref[...]                                     # bf16 (tm, K)
    w = w_ref[...]                                     # bf16 (K, N)
    acc = jnp.dot(x, w, preferred_element_type=jnp.float32) + b_ref[...]
    q_ref[...] = acc[:, :hdk].astype(q_ref.dtype)
    k_ref[...] = acc[:, hdk:2 * hdk].astype(k_ref.dtype)
    v_ref[...] = acc[:, 2 * hdk:].astype(v_ref.dtype)


def qkv_projection(x, w_qkv, b_qkv, hdk, hdv):
    M, K = x.shape
    N = w_qkv.shape[1]
    tm, Mp = _choose_tile(M)
    xp = x if Mp == M else jnp.pad(x, ((0, Mp - M), (0, 0)))
    q, k, v = pl.pallas_call(
        functools.partial(_qkv_kernel, hdk=hdk),
        out_shape=(
            jax.ShapeDtypeStruct((Mp, hdk), _ACT_DTYPE),
            jax.ShapeDtypeStruct((Mp, hdk), _ACT_DTYPE),
            jax.ShapeDtypeStruct((Mp, hdv), _ACT_DTYPE),
        ),
        grid=(Mp // tm,),
        in_specs=[
            pl.BlockSpec((tm, K), lambda i: (i, 0)),
            pl.BlockSpec((K, N), lambda i: (0, 0)),
            pl.BlockSpec((1, N), lambda i: (0, 0)),
        ],
        out_specs=(
            pl.BlockSpec((tm, hdk), lambda i: (i, 0)),
            pl.BlockSpec((tm, hdk), lambda i: (i, 0)),
            pl.BlockSpec((tm, hdv), lambda i: (i, 0)),
        ),
        compiler_params=_cparams(1),
        cost_estimate=pl.CostEstimate(
            flops=2 * Mp * K * N, transcendentals=0,
            bytes_accessed=2 * (Mp * K + K * N + Mp * N) + 4 * N),
    )(xp, w_qkv, b_qkv.reshape(1, N))
    if Mp != M:
        q, k, v = q[:M], k[:M], v[:M]
    return q, k, v


# ----------------------------------------------------------------------------
# Kernel 2: attention, grid = (batch, query_tile); heads looped in-kernel.
#   - q is pre-scaled by 1/sqrt(d_k) (folded into Wq/bq at prep time)
#   - softmax normalisation deferred to after P@V (O(tq*d_v) multiplies)
#   - per-head result stored into its lane slice as soon as it is computed
# ----------------------------------------------------------------------------
def _attention_kernel(q_ref, k_ref, v_ref, bias_ref, o_ref, *, h, d_k, d_v):
    bias = bias_ref[...]                               # (1, S) f32: 0 / -1e30
    for i in range(h):
        q = q_ref[:, i * d_k:(i + 1) * d_k]            # bf16 (tq, d_k)
        k = k_ref[:, i * d_k:(i + 1) * d_k]            # bf16 (S, d_k)
        v = v_ref[:, i * d_v:(i + 1) * d_v]            # bf16 (S, d_v)
        # q @ k^T expressed directly: contract the last dims (no explicit .T).
        s = lax.dot_general(q, k, (((1,), (1,)), ((), ())),
                            preferred_element_type=jnp.float32) + bias
        m = jnp.max(s, axis=-1, keepdims=True)
        p = jnp.exp(s - m)                             # unnormalized, f32
        inv = pl.reciprocal(jnp.sum(p, axis=-1, keepdims=True), approx=True)
        pv = jnp.dot(p.astype(v.dtype), v, preferred_element_type=jnp.float32)
        o_ref[:, i * d_v:(i + 1) * d_v] = (pv * inv).astype(o_ref.dtype)


def attention(q, k, v, bias, h, d_k, d_v):
    NB, S, HDK = q.shape
    HDV = v.shape[-1]
    tq = _choose_q_tile(S)
    return pl.pallas_call(
        functools.partial(_attention_kernel, h=h, d_k=d_k, d_v=d_v),
        out_shape=jax.ShapeDtypeStruct((NB, S, HDV), _ACT_DTYPE),
        grid=(NB, S // tq),
        in_specs=[
            pl.BlockSpec((None, tq, HDK), lambda b, qi: (b, qi, 0)),
            pl.BlockSpec((None, S, HDK), lambda b, qi: (b, 0, 0)),
            pl.BlockSpec((None, S, HDV), lambda b, qi: (b, 0, 0)),
            pl.BlockSpec((None, 1, S), lambda b, qi: (b, 0, 0)),
        ],
        out_specs=pl.BlockSpec((None, tq, HDV), lambda b, qi: (b, qi, 0)),
        compiler_params=_cparams(2),
        cost_estimate=pl.CostEstimate(
            flops=2 * NB * h * S * S * (d_k + d_v),
            transcendentals=NB * h * S * S,
            bytes_accessed=2 * NB * S * (2 * HDK + 2 * HDV) + 4 * NB * S),
    )(q, k, v, bias)


# ----------------------------------------------------------------------------
# Kernel 3: output projection + bias + residual + LayerNorm
#   grid = (stream, token_tile); per-stream gamma/beta selected by the stream
#   grid axis so both encoder streams run in one call.
# ----------------------------------------------------------------------------
def _proj_res_ln_kernel(a_ref, res_ref, w_ref, b_ref, g_ref, beta_ref, o_ref,
                        *, eps):
    a = a_ref[...]                                     # bf16 (tm, HDV)
    w = w_ref[...]                                     # bf16 (HDV, D)
    y = jnp.dot(a, w, preferred_element_type=jnp.float32) + b_ref[...]
    z = res_ref[...].astype(jnp.float32) + y
    mu = jnp.mean(z, axis=-1, keepdims=True)
    zc = z - mu
    var = jnp.mean(zc * zc, axis=-1, keepdims=True)
    o_ref[...] = (zc * lax.rsqrt(var + eps) * g_ref[...]
                  + beta_ref[...]).astype(o_ref.dtype)


def proj_residual_layernorm(a, res, w, b, gamma, beta, eps=_LN_EPS):
    NS, M, K = a.shape                                 # streams, tokens, h*d_v
    D = w.shape[1]
    tm, Mp = _choose_tile(M)
    if Mp != M:
        a = jnp.pad(a, ((0, 0), (0, Mp - M), (0, 0)))
        res = jnp.pad(res, ((0, 0), (0, Mp - M), (0, 0)))
    out = pl.pallas_call(
        functools.partial(_proj_res_ln_kernel, eps=eps),
        out_shape=jax.ShapeDtypeStruct((NS, Mp, D), _ACT_DTYPE),
        grid=(NS, Mp // tm),
        in_specs=[
            pl.BlockSpec((None, tm, K), lambda s, i: (s, i, 0)),
            pl.BlockSpec((None, tm, D), lambda s, i: (s, i, 0)),
            pl.BlockSpec((K, D), lambda s, i: (0, 0)),
            pl.BlockSpec((1, D), lambda s, i: (0, 0)),
            pl.BlockSpec((None, 1, D), lambda s, i: (s, 0, 0)),
            pl.BlockSpec((None, 1, D), lambda s, i: (s, 0, 0)),
        ],
        out_specs=pl.BlockSpec((None, tm, D), lambda s, i: (s, i, 0)),
        compiler_params=_cparams(2),
        cost_estimate=pl.CostEstimate(
            flops=2 * NS * Mp * K * D + 8 * NS * Mp * D,
            transcendentals=NS * Mp,
            bytes_accessed=2 * NS * Mp * (K + 2 * D) + 2 * K * D + 12 * NS * D),
    )(a, res, w, b.reshape(1, D), gamma.reshape(NS, 1, D), beta.reshape(NS, 1, D))
    return out[:, :M] if Mp != M else out


# ----------------------------------------------------------------------------
# Kernel 4: position-wise FFN + bias + residual + LayerNorm
#   (the (tm, d_ff) hidden never touches HBM; stream grid axis as above)
# ----------------------------------------------------------------------------
def _ffn_res_ln_kernel(x_ref, w1_ref, b1_ref, w2_ref, b2_ref, g_ref, beta_ref,
                       o_ref, *, eps):
    x = x_ref[...]                                     # bf16 (tm, D)
    h1 = jnp.dot(x, w1_ref[...], preferred_element_type=jnp.float32) + b1_ref[...]
    h1 = jnp.maximum(h1, 0.0)
    ff = jnp.dot(h1.astype(jnp.bfloat16), w2_ref[...],
                 preferred_element_type=jnp.float32) + b2_ref[...]
    z = x.astype(jnp.float32) + ff
    mu = jnp.mean(z, axis=-1, keepdims=True)
    zc = z - mu
    var = jnp.mean(zc * zc, axis=-1, keepdims=True)
    o_ref[...] = (zc * lax.rsqrt(var + eps) * g_ref[...]
                  + beta_ref[...]).astype(o_ref.dtype)


def ffn_residual_layernorm(x, w1, b1, w2, b2, gamma, beta, eps=_LN_EPS):
    NS, M, D = x.shape
    F = w1.shape[1]
    tm, Mp = _choose_tile(M)
    if Mp != M:
        x = jnp.pad(x, ((0, 0), (0, Mp - M), (0, 0)))
    out = pl.pallas_call(
        functools.partial(_ffn_res_ln_kernel, eps=eps),
        out_shape=jax.ShapeDtypeStruct((NS, Mp, D), _ACT_DTYPE),
        grid=(NS, Mp // tm),
        in_specs=[
            pl.BlockSpec((None, tm, D), lambda s, i: (s, i, 0)),
            pl.BlockSpec((D, F), lambda s, i: (0, 0)),
            pl.BlockSpec((1, F), lambda s, i: (0, 0)),
            pl.BlockSpec((F, D), lambda s, i: (0, 0)),
            pl.BlockSpec((1, D), lambda s, i: (0, 0)),
            pl.BlockSpec((None, 1, D), lambda s, i: (s, 0, 0)),
            pl.BlockSpec((None, 1, D), lambda s, i: (s, 0, 0)),
        ],
        out_specs=pl.BlockSpec((None, tm, D), lambda s, i: (s, i, 0)),
        compiler_params=_cparams(2),
        cost_estimate=pl.CostEstimate(
            flops=4 * NS * Mp * D * F + 10 * NS * Mp * D,
            transcendentals=NS * Mp,
            bytes_accessed=2 * (2 * NS * Mp * D + 2 * D * F) + 4 * (D + F)),
    )(x, w1, b1.reshape(1, F), w2, b2.reshape(1, D),
      gamma.reshape(NS, 1, D), beta.reshape(NS, 1, D))
    return out[:, :M] if Mp != M else out


# ----------------------------------------------------------------------------
# Model wiring (reshapes below are free row-major metadata ops, no transposes)
# ----------------------------------------------------------------------------
def encoder_layer(x, bias, p, ln_g, ln_b, ff_g, ff_b, h, d_k, d_v):
    """x: (NB, S, D) bf16; bias: (NB, 1, S) f32 additive; LN params (NS, D)."""
    NB, S, D = x.shape
    n_streams = ln_g.shape[0]
    M = NB * S
    Mps = M // n_streams
    hdk, hdv = h * d_k, h * d_v
    x2 = x.reshape(M, D)
    q2, k2, v2 = qkv_projection(x2, p["Wqkv"], p["bqkv"], hdk, hdv)
    o = attention(q2.reshape(NB, S, hdk), k2.reshape(NB, S, hdk),
                  v2.reshape(NB, S, hdv), bias, h, d_k, d_v)     # (NB,S,hdv)
    att = proj_residual_layernorm(o.reshape(n_streams, Mps, hdv),
                                  x2.reshape(n_streams, Mps, D),
                                  p["Wo"], p["bo"], ln_g, ln_b)
    out = ffn_residual_layernorm(att, p["W1"], p["b1"], p["W2"], p["b2"],
                                 ff_g, ff_b)
    return out.reshape(NB, S, D)


def difnet_encoder_forward(inp, pixel, params, padding_idx, h, d_k, d_v):
    B = inp.shape[0]
    mask_bool = jnp.sum(inp, -1) == padding_idx                  # (B, S)
    pmask_bool = jnp.sum(pixel, -1) == padding_idx
    # Additive softmax bias (0 for valid keys, -1e30 for padded keys).
    bias = jnp.where(mask_bool, _NEG_BIG, 0.0).astype(jnp.float32)[:, None, :]
    pbias = jnp.where(pmask_bool, _NEG_BIG, 0.0).astype(jnp.float32)[:, None, :]

    out = inp.astype(_ACT_DTYPE)
    out1 = pixel.astype(_ACT_DTYPE)
    x = x1 = None
    for i, p in enumerate(params):
        if i == 0:
            # Layer 0 is applied twice to both streams; run the streams stacked
            # along the batch axis so every pallas_call sees 2x the tokens
            # (per-stream ln vs ln1 selected via the stream grid axis).
            both = jnp.concatenate([out, out1], axis=0)
            bias_both = jnp.concatenate([bias, pbias], axis=0)
            for _ in range(2):
                both = encoder_layer(both, bias_both, p,
                                     p["ln01_g"], p["ln01_b"],
                                     p["ffln01_g"], p["ffln01_b"], h, d_k, d_v)
            x, x1 = both[:B], both[B:]
            out = (x.astype(jnp.float32) + x1.astype(jnp.float32)).astype(_ACT_DTYPE)
        else:
            out = encoder_layer(out, bias, p, p["ln_g"], p["ln_b"],
                                p["ffln_g"], p["ffln_b"], h, d_k, d_v)
    out = out.astype(jnp.float32) + x.astype(jnp.float32) + x1.astype(jnp.float32)
    attention_mask = mask_bool[:, None, None, :]                 # (B,1,1,S) bool
    return out, attention_mask


# ----------------------------------------------------------------------------
# Parameters: deterministic f32 init (mirrors the PyTorch module), then a
# one-time inference prep (fuse Wq|Wk|Wv, fold 1/sqrt(d_k) into Wq/bq, cast
# weights to bf16, stack per-stream LayerNorm params).
# ----------------------------------------------------------------------------
def init_params(key, N, d_model, d_k, d_v, h, d_ff):
    params = []
    for _ in range(N):
        def nxt(shape, scale=0.05):
            nonlocal key
            key, sub = jax.random.split(key)
            return (scale * jax.random.normal(sub, shape)).astype(jnp.float32)

        p = {
            "Wq": nxt((d_model, h * d_k)), "bq": nxt((h * d_k,)),
            "Wk": nxt((d_model, h * d_k)), "bk": nxt((h * d_k,)),
            "Wv": nxt((d_model, h * d_v)), "bv": nxt((h * d_v,)),
            "Wo": nxt((h * d_v, d_model)), "bo": nxt((d_model,)),
            "ln_g": jnp.ones((d_model,), jnp.float32),
            "ln_b": jnp.zeros((d_model,), jnp.float32),
            "ln1_g": jnp.ones((d_model,), jnp.float32),
            "ln1_b": jnp.zeros((d_model,), jnp.float32),
            "W1": nxt((d_model, d_ff)), "b1": nxt((d_ff,)),
            "W2": nxt((d_ff, d_model)), "b2": nxt((d_model,)),
            "ff_ln_g": jnp.ones((d_model,), jnp.float32),
            "ff_ln_b": jnp.zeros((d_model,), jnp.float32),
            "ff_ln1_g": jnp.ones((d_model,), jnp.float32),
            "ff_ln1_b": jnp.zeros((d_model,), jnp.float32),
        }
        params.append(p)
    return params


def prepare_params(raw_params, d_k):
    scale = 1.0 / math.sqrt(d_k)
    prepped = []
    for p in raw_params:
        wq = p["Wq"] * scale            # fold attention scale into Wq / bq
        bq = p["bq"] * scale
        prepped.append({
            "Wqkv": jnp.concatenate([wq, p["Wk"], p["Wv"]], axis=1).astype(_MATMUL_DTYPE),
            "bqkv": jnp.concatenate([bq, p["bk"], p["bv"]], axis=0).astype(jnp.float32),
            "Wo": p["Wo"].astype(_MATMUL_DTYPE), "bo": p["bo"].astype(jnp.float32),
            "W1": p["W1"].astype(_MATMUL_DTYPE), "b1": p["b1"].astype(jnp.float32),
            "W2": p["W2"].astype(_MATMUL_DTYPE), "b2": p["b2"].astype(jnp.float32),
            # single-stream (m=0) LayerNorm params ...
            "ln_g": p["ln_g"][None, :], "ln_b": p["ln_b"][None, :],
            "ffln_g": p["ff_ln_g"][None, :], "ffln_b": p["ff_ln_b"][None, :],
            # ... and stacked (m=0 | m=1) ones for the merged layer-0 call
            "ln01_g": jnp.stack([p["ln_g"], p["ln1_g"]]),
            "ln01_b": jnp.stack([p["ln_b"], p["ln1_b"]]),
            "ffln01_g": jnp.stack([p["ff_ln_g"], p["ff_ln1_g"]]),
            "ffln01_b": jnp.stack([p["ff_ln_b"], p["ff_ln1_b"]]),
        })
    return prepped


if __name__ == "__main__":
    # small config consistent with the module (d_model=512, h=8 ... scaled down)
    N = 2
    padding_idx = 0
    B, S = 2, 8
    d_model, d_k, d_v, h, d_ff = 32, 8, 8, 4, 64

    key = jax.random.PRNGKey(0)
    k_in, k_px, k_par = jax.random.split(key, 3)
    inp = jax.random.normal(k_in, (B, S, d_model), dtype=jnp.float32)
    pixel = jax.random.normal(k_px, (B, S, d_model), dtype=jnp.float32)
    params = prepare_params(init_params(k_par, N, d_model, d_k, d_v, h, d_ff), d_k)

    fwd = jax.jit(functools.partial(
        difnet_encoder_forward, padding_idx=padding_idx, h=h, d_k=d_k, d_v=d_v))
    out, attn_mask = fwd(inp, pixel, params)
    out = jax.block_until_ready(out)
    attn_mask = jax.block_until_ready(attn_mask)

    assert out.shape == (B, S, d_model)
    assert attn_mask.shape == (B, 1, 1, S)
    assert bool(jnp.all(jnp.isfinite(out)))
    print("KERNEL_OK")
</pallas_src>

<mosaic_0001>
module attributes {stable_mosaic.version = 11 : i64} {
  func.func @_qkv_kernel(%arg0: i32, %arg1: memref<32x32xbf16, #tpu.memory_space<vmem>>, %arg2: memref<32x96xbf16, #tpu.memory_space<vmem>>, %arg3: memref<1x96xf32, #tpu.memory_space<vmem>>, %arg4: memref<32x32xbf16, #tpu.memory_space<vmem>>, %arg5: memref<32x32xbf16, #tpu.memory_space<vmem>>, %arg6: memref<32x32xbf16, #tpu.memory_space<vmem>>) attributes {dimension_semantics = [#tpu.dimension_semantics<parallel>], iteration_bounds = array<i64: 1>, scalar_prefetch = 0 : i64, scratch_operands = 0 : i64, tpu.core_type = #tpu.core_type<tc>, window_params = [{transform_indices = @transform_0, window_bounds = array<i64: 32, 32>}, {pipeline_mode = #tpu.pipeline_mode<synchronous>, transform_indices = @transform_1, window_bounds = array<i64: 32, 96>}, {pipeline_mode = #tpu.pipeline_mode<synchronous>, transform_indices = @transform_2, window_bounds = array<i64: 1, 96>}, {transform_indices = @transform_3, window_bounds = array<i64: 32, 32>}, {transform_indices = @transform_4, window_bounds = array<i64: 32, 32>}, {transform_indices = @transform_5, window_bounds = array<i64: 32, 32>}]} {
    %c0 = arith.constant 0 : index
    %c0_0 = arith.constant 0 : index
    %0 = vector.load %arg1[%c0, %c0_0] : memref<32x32xbf16, #tpu.memory_space<vmem>>, vector<32x32xbf16>
    %c0_1 = arith.constant 0 : index
    %c0_2 = arith.constant 0 : index
    %1 = vector.load %arg2[%c0_1, %c0_2] : memref<32x96xbf16, #tpu.memory_space<vmem>>, vector<32x96xbf16>
    %cst = arith.constant dense<0.000000e+00> : vector<32x96xf32>
    %2 = tpu.matmul %0, %1, %cst {dimension_numbers = #tpu.dot_dimension_numbers<[1], [0], [0], [1], [0, 0, 1, 1], [], []>} : vector<32x32xbf16>, vector<32x96xbf16>, vector<32x96xf32> -> vector<32x96xf32>
    %c0_3 = arith.constant 0 : index
    %c0_4 = arith.constant 0 : index
    %3 = vector.load %arg3[%c0_3, %c0_4] : memref<1x96xf32, #tpu.memory_space<vmem>>, vector<1x96xf32>
    %4 = vector.broadcast %3 : vector<1x96xf32> to vector<32x96xf32>
    %5 = arith.addf %2, %4 : vector<32x96xf32>
    %6 = vector.extract_strided_slice %5 {offsets = [0, 0], sizes = [32, 32], strides = [1, 1]} : vector<32x96xf32> to vector<32x32xf32>
    %7 = arith.truncf %6 : vector<32x32xf32> to vector<32x32xbf16>
    %c0_5 = arith.constant 0 : index
    %c0_6 = arith.constant 0 : index
    %8 = vector.load %arg4[%c0_5, %c0_6] : memref<32x32xbf16, #tpu.memory_space<vmem>>, vector<32x32xbf16>
    tpu.vector_store %arg4[%c0_5, %c0_6], %7 {strides = array<i32>} : memref<32x32xbf16, #tpu.memory_space<vmem>>, vector<32x32xbf16>,
    %9 = vector.extract_strided_slice %5 {offsets = [0, 32], sizes = [32, 32], strides = [1, 1]} : vector<32x96xf32> to vector<32x32xf32>
    %10 = arith.truncf %9 : vector<32x32xf32> to vector<32x32xbf16>
    %c0_7 = arith.constant 0 : index
    %c0_8 = arith.constant 0 : index
    %11 = vector.load %arg5[%c0_7, %c0_8] : memref<32x32xbf16, #tpu.memory_space<vmem>>, vector<32x32xbf16>
    tpu.vector_store %arg5[%c0_7, %c0_8], %10 {strides = array<i32>} : memref<32x32xbf16, #tpu.memory_space<vmem>>, vector<32x32xbf16>,
    %12 = vector.extract_strided_slice %5 {offsets = [0, 64], sizes = [32, 32], strides = [1, 1]} : vector<32x96xf32> to vector<32x32xf32>
    %13 = arith.truncf %12 : vector<32x32xf32> to vector<32x32xbf16>
    %c0_9 = arith.constant 0 : index
    %c0_10 = arith.constant 0 : index
    %14 = vector.load %arg6[%c0_9, %c0_10] : memref<32x32xbf16, #tpu.memory_space<vmem>>, vector<32x32xbf16>
    tpu.vector_store %arg6[%c0_9, %c0_10], %13 {strides = array<i32>} : memref<32x32xbf16, #tpu.memory_space<vmem>>, vector<32x32xbf16>,
    return
  }
  func.func @transform_0(%arg0: i32) -> (i32, i32) {
    %c0_i32 = arith.constant 0 : i32
    %c0_i32_0 = arith.constant 0 : i32
    return %arg0, %c0_i32 : i32, i32
  }
  func.func @transform_1(%arg0: i32) -> (i32, i32) {
    %c0_i32 = arith.constant 0 : i32
    %c0_i32_0 = arith.constant 0 : i32
    %c0_i32_1 = arith.constant 0 : i32
    return %c0_i32, %c0_i32_0 : i32, i32
  }
  func.func @transform_2(%arg0: i32) -> (i32, i32) {
    %c0_i32 = arith.constant 0 : i32
    %c0_i32_0 = arith.constant 0 : i32
    %c0_i32_1 = arith.constant 0 : i32
    return %c0_i32, %c0_i32_0 : i32, i32
  }
  func.func @transform_3(%arg0: i32) -> (i32, i32) {
    %c0_i32 = arith.constant 0 : i32
    %c0_i32_0 = arith.constant 0 : i32
    return %arg0, %c0_i32 : i32, i32
  }
  func.func @transform_4(%arg0: i32) -> (i32, i32) {
    %c0_i32 = arith.constant 0 : i32
    %c0_i32_0 = arith.constant 0 : i32
    return %arg0, %c0_i32 : i32, i32
  }
  func.func @transform_5(%arg0: i32) -> (i32, i32) {
    %c0_i32 = arith.constant 0 : i32
    %c0_i32_0 = arith.constant 0 : i32
    return %arg0, %c0_i32 : i32, i32
  }
}

module attributes {stable_mosaic.version = 11 : i64} {
  func.func @_attention_kernel(%arg0: i32, %arg1: i32, %arg2: memref<1x8x32xbf16, #tpu.memory_space<vmem>>, %arg3: memref<1x8x32xbf16, #tpu.memory_space<vmem>>, %arg4: memref<1x8x32xbf16, #tpu.memory_space<vmem>>, %arg5: memref<1x1x8xf32, #tpu.memory_space<vmem>>, %arg6: memref<1x8x32xbf16, #tpu.memory_space<vmem>>) attributes {dimension_semantics = [#tpu.dimension_semantics<parallel>, #tpu.dimension_semantics<parallel>], iteration_bounds = array<i64: 4, 1>, scalar_prefetch = 0 : i64, scratch_operands = 0 : i64, tpu.core_type = #tpu.core_type<tc>, window_params = [{transform_indices = @transform_0, window_bounds = array<i64: 1, 8, 32>}, {transform_indices = @transform_1, window_bounds = array<i64: 1, 8, 32>}, {transform_indices = @transform_2, window_bounds = array<i64: 1, 8, 32>}, {transform_indices = @transform_3, window_bounds = array<i64: 1, 1, 8>}, {transform_indices = @transform_4, window_bounds = array<i64: 1, 8, 32>}]} {
    %c0 = arith.constant 0 : index
    %c0_0 = arith.constant 0 : index
    %c0_1 = arith.constant 0 : index
    %0 = vector.load %arg5[%c0, %c0_0, %c0_1] : memref<1x1x8xf32, #tpu.memory_space<vmem>>, vector<1x1x8xf32>
    %1 = vector.shape_cast %0 : vector<1x1x8xf32> to vector<1x8xf32>
    %c0_2 = arith.constant 0 : index
    %c0_3 = arith.constant 0 : index
    %c0_4 = arith.constant 0 : index
    %2 = vector.load %arg2[%c0_2, %c0_3, %c0_4] : memref<1x8x32xbf16, #tpu.memory_space<vmem>>, vector<1x8x8xbf16>
    %3 = vector.shape_cast %2 : vector<1x8x8xbf16> to vector<8x8xbf16>
    %c0_5 = arith.constant 0 : index
    %c0_6 = arith.constant 0 : index
    %c0_7 = arith.constant 0 : index
    %4 = vector.load %arg3[%c0_5, %c0_6, %c0_7] : memref<1x8x32xbf16, #tpu.memory_space<vmem>>, vector<1x8x8xbf16>
    %5 = vector.shape_cast %4 : vector<1x8x8xbf16> to vector<8x8xbf16>
    %c0_8 = arith.constant 0 : index
    %c0_9 = arith.constant 0 : index
    %c0_10 = arith.constant 0 : index
    %6 = vector.load %arg4[%c0_8, %c0_9, %c0_10] : memref<1x8x32xbf16, #tpu.memory_space<vmem>>, vector<1x8x8xbf16>
    %7 = vector.shape_cast %6 : vector<1x8x8xbf16> to vector<8x8xbf16>
    %cst = arith.constant dense<0.000000e+00> : vector<8x8xf32>
    %8 = tpu.matmul %3, %5, %cst {dimension_numbers = #tpu.dot_dimension_numbers<[1], [1], [0], [0], [0, 0, 1, 0], [], []>} : vector<8x8xbf16>, vector<8x8xbf16>, vector<8x8xf32> -> vector<8x8xf32>
    %9 = vector.broadcast %1 : vector<1x8xf32> to vector<8x8xf32>
    %10 = arith.addf %8, %9 : vector<8x8xf32>
    %cst_11 = arith.constant dense<0xFF800000> : vector<8xf32>
    %11 = vector.multi_reduction <maximumf>, %10, %cst_11 [1] : vector<8x8xf32> to vector<8xf32>
    %12 = vector.shape_cast %11 : vector<8xf32> to vector<8x1xf32>
    %13 = vector.broadcast %12 : vector<8x1xf32> to vector<8x8xf32>
    %14 = arith.subf %10, %13 : vector<8x8xf32>
    %15 = math.exp %14 : vector<8x8xf32>
    %cst_12 = arith.constant dense<0.000000e+00> : vector<8xf32>
    %16 = vector.multi_reduction <add>, %15, %cst_12 [1] : vector<8x8xf32> to vector<8xf32>
    %17 = vector.shape_cast %16 : vector<8xf32> to vector<8x1xf32>
    %18 = tpu.reciprocal %17 {approx = true} : vector<8x1xf32> -> vector<8x1xf32>
    %19 = arith.truncf %15 : vector<8x8xf32> to vector<8x8xbf16>
    %cst_13 = arith.constant dense<0.000000e+00> : vector<8x8xf32>
    %20 = tpu.matmul %19, %7, %cst_13 {dimension_numbers = #tpu.dot_dimension_numbers<[1], [0], [0], [1], [0, 0, 1, 1], [], []>} : vector<8x8xbf16>, vector<8x8xbf16>, vector<8x8xf32> -> vector<8x8xf32>
    %21 = vector.broadcast %18 : vector<8x1xf32> to vector<8x8xf32>
    %22 = arith.mulf %20, %21 : vector<8x8xf32>
    %23 = arith.truncf %22 : vector<8x8xf32> to vector<8x8xbf16>
    %c0_14 = arith.constant 0 : index
    %c0_15 = arith.constant 0 : index
    %c0_16 = arith.constant 0 : index
    %24 = vector.load %arg6[%c0_14, %c0_15, %c0_16] : memref<1x8x32xbf16, #tpu.memory_space<vmem>>, vector<1x8x8xbf16>
    %25 = vector.shape_cast %24 : vector<1x8x8xbf16> to vector<8x8xbf16>
    %26 = vector.shape_cast %23 : vector<8x8xbf16> to vector<1x8x8xbf16>
    tpu.vector_store %arg6[%c0_14, %c0_15, %c0_16], %26 {strides = array<i32>} : memref<1x8x32xbf16, #tpu.memory_space<vmem>>, vector<1x8x8xbf16>,
    %c0_17 = arith.constant 0 : index
    %c0_18 = arith.constant 0 : index
    %c8 = arith.constant 8 : index
    %27 = vector.load %arg2[%c0_17, %c0_18, %c8] : memref<1x8x32xbf16, #tpu.memory_space<vmem>>, vector<1x8x8xbf16>
    %28 = vector.shape_cast %27 : vector<1x8x8xbf16> to vector<8x8xbf16>
    %c0_19 = arith.constant 0 : index
    %c0_20 = arith.constant 0 : index
    %c8_21 = arith.constant 8 : index
    %29 = vector.load %arg3[%c0_19, %c0_20, %c8_21] : memref<1x8x32xbf16, #tpu.memory_space<vmem>>, vector<1x8x8xbf16>
    %30 = vector.shape_cast %29 : vector<1x8x8xbf16> to vector<8x8xbf16>
    %c0_22 = arith.constant 0 : index
    %c0_23 = arith.constant 0 : index
    %c8_24 = arith.constant 8 : index
    %31 = vector.load %arg4[%c0_22, %c0_23, %c8_24] : memref<1x8x32xbf16, #tpu.memory_space<vmem>>, vector<1x8x8xbf16>
    %32 = vector.shape_cast %31 : vector<1x8x8xbf16> to vector<8x8xbf16>
    %cst_25 = arith.constant dense<0.000000e+00> : vector<8x8xf32>
    %33 = tpu.matmul %28, %30, %cst_25 {dimension_numbers = #tpu.dot_dimension_numbers<[1], [1], [0], [0], [0, 0, 1, 0], [], []>} : vector<8x8xbf16>, vector<8x8xbf16>, vector<8x8xf32> -> vector<8x8xf32>
    %34 = vector.broadcast %1 : vector<1x8xf32> to vector<8x8xf32>
    %35 = arith.addf %33, %34 : vector<8x8xf32>
    %cst_26 = arith.constant dense<0xFF800000> : vector<8xf32>
    %36 = vector.multi_reduction <maximumf>, %35, %cst_26 [1] : vector<8x8xf32> to vector<8xf32>
    %37 = vector.shape_cast %36 : vector<8xf32> to vector<8x1xf32>
    %38 = vector.broadcast %37 : vector<8x1xf32> to vector<8x8xf32>
    %39 = arith.subf %35, %38 : vector<8x8xf32>
    %40 = math.exp %39 : vector<8x8xf32>
    %cst_27 = arith.constant dense<0.000000e+00> : vector<8xf32>
    %41 = vector.multi_reduction <add>, %40, %cst_27 [1] : vector<8x8xf32> to vector<8xf32>
    %42 = vector.shape_cast %41 : vector<8xf32> to vector<8x1xf32>
    %43 = tpu.reciprocal %42 {approx = true} : vector<8x1xf32> -> vector<8x1xf32>
    %44 = arith.truncf %40 : vector<8x8xf32> to vector<8x8xbf16>
    %cst_28 = arith.constant dense<0.000000e+00> : vector<8x8xf32>
    %45 = tpu.matmul %44, %32, %cst_28 {dimension_numbers = #tpu.dot_dimension_numbers<[1], [0], [0], [1], [0, 0, 1, 1], [], []>} : vector<8x8xbf16>, vector<8x8xbf16>, vector<8x8xf32> -> vector<8x8xf32>
    %46 = vector.broadcast %43 : vector<8x1xf32> to vector<8x8xf32>
    %47 = arith.mulf %45, %46 : vector<8x8xf32>
    %48 = arith.truncf %47 : vector<8x8xf32> to vector<8x8xbf16>
    %c0_29 = arith.constant 0 : index
    %c0_30 = arith.constant 0 : index
    %c8_31 = arith.constant 8 : index
    %49 = vector.load %arg6[%c0_29, %c0_30, %c8_31] : memref<1x8x32xbf16, #tpu.memory_space<vmem>>, vector<1x8x8xbf16>
    %50 = vector.shape_cast %49 : vector<1x8x8xbf16> to vector<8x8xbf16>
    %51 = vector.shape_cast %48 : vector<8x8xbf16> to vector<1x8x8xbf16>
    tpu.vector_store %arg6[%c0_29, %c0_30, %c8_31], %51 {strides = array<i32>} : memref<1x8x32xbf16, #tpu.memory_space<vmem>>, vector<1x8x8xbf16>,
    %c0_32 = arith.constant 0 : index
    %c0_33 = arith.constant 0 : index
    %c16 = arith.constant 16 : index
    %52 = vector.load %arg2[%c0_32, %c0_33, %c16] : memref<1x8x32xbf16, #tpu.memory_space<vmem>>, vector<1x8x8xbf16>
    %53 = vector.shape_cast %52 : vector<1x8x8xbf16> to vector<8x8xbf16>
    %c0_34 = arith.constant 0 : index
    %c0_35 = arith.constant 0 : index
    %c16_36 = arith.constant 16 : index
    %54 = vector.load %arg3[%c0_34, %c0_35, %c16_36] : memref<1x8x32xbf16, #tpu.memory_space<vmem>>, vector<1x8x8xbf16>
    %55 = vector.shape_cast %54 : vector<1x8x8xbf16> to vector<8x8xbf16>
    %c0_37 = arith.constant 0 : index
    %c0_38 = arith.constant 0 : index
    %c16_39 = arith.constant 16 : index
    %56 = vector.load %arg4[%c0_37, %c0_38, %c16_39] : memref<1x8x32xbf16, #tpu.memory_space<vmem>>, vector<1x8x8xbf16>
    %57 = vector.shape_cast %56 : vector<1x8x8xbf16> to vector<8x8xbf16>
    %cst_40 = arith.constant dense<0.000000e+00> : vector<8x8xf32>
    %58 = tpu.matmul %53, %55, %cst_40 {dimension_numbers = #tpu.dot_dimension_numbers<[1], [1], [0], [0], [0, 0, 1, 0], [], []>} : vector<8x8xbf16>, vector<8x8xbf16>, vector<8x8xf32> -> vector<8x8xf32>
    %59 = vector.broadcast %1 : vector<1x8xf32> to vector<8x8xf32>
    %60 = arith.addf %58, %59 : vector<8x8xf32>
    %cst_41 = arith.constant dense<0xFF800000> : vector<8xf32>
    %61 = vector.multi_reduction <maximumf>, %60, %cst_41 [1] : vector<8x8xf32> to vector<8xf32>
    %62 = vector.shape_cast %61 : vector<8xf32> to vector<8x1xf32>
    %63 = vector.broadcast %62 : vector<8x1xf32> to vector<8x8xf32>
    %64 = arith.subf %60, %63 : vector<8x8xf32>
    %65 = math.exp %64 : vector<8x8xf32>
    %cst_42 = arith.constant dense<0.000000e+00> : vector<8xf32>
    %66 = vector.multi_reduction <add>, %65, %cst_42 [1] : vector<8x8xf32> to vector<8xf32>
    %67 = vector.shape_cast %66 : vector<8xf32> to vector<8x1xf32>
    %68 = tpu.reciprocal %67 {approx = true} : vector<8x1xf32> -> vector<8x1xf32>
    %69 = arith.truncf %65 : vector<8x8xf32> to vector<8x8xbf16>
    %cst_43 = arith.constant dense<0.000000e+00> : vector<8x8xf32>
    %70 = tpu.matmul %69, %57, %cst_43 {dimension_numbers = #tpu.dot_dimension_numbers<[1], [0], [0], [1], [0, 0, 1, 1], [], []>} : vector<8x8xbf16>, vector<8x8xbf16>, vector<8x8xf32> -> vector<8x8xf32>
    %71 = vector.broadcast %68 : vector<8x1xf32> to vector<8x8xf32>
    %72 = arith.mulf %70, %71 : vector<8x8xf32>
    %73 = arith.truncf %72 : vector<8x8xf32> to vector<8x8xbf16>
    %c0_44 = arith.constant 0 : index
    %c0_45 = arith.constant 0 : index
    %c16_46 = arith.constant 16 : index
    %74 = vector.load %arg6[%c0_44, %c0_45, %c16_46] : memref<1x8x32xbf16, #tpu.memory_space<vmem>>, vector<1x8x8xbf16>
    %75 = vector.shape_cast %74 : vector<1x8x8xbf16> to vector<8x8xbf16>
    %76 = vector.shape_cast %73 : vector<8x8xbf16> to vector<1x8x8xbf16>
    tpu.vector_store %arg6[%c0_44, %c0_45, %c16_46], %76 {strides = array<i32>} : memref<1x8x32xbf16, #tpu.memory_space<vmem>>, vector<1x8x8xbf16>,
    %c0_47 = arith.constant 0 : index
    %c0_48 = arith.constant 0 : index
    %c24 = arith.constant 24 : index
    %77 = vector.load %arg2[%c0_47, %c0_48, %c24] : memref<1x8x32xbf16, #tpu.memory_space<vmem>>, vector<1x8x8xbf16>
    %78 = vector.shape_cast %77 : vector<1x8x8xbf16> to vector<8x8xbf16>
    %c0_49 = arith.constant 0 : index
    %c0_50 = arith.constant 0 : index
    %c24_51 = arith.constant 24 : index
    %79 = vector.load %arg3[%c0_49, %c0_50, %c24_51] : memref<1x8x32xbf16, #tpu.memory_space<vmem>>, vector<1x8x8xbf16>
    %80 = vector.shape_cast %79 : vector<1x8x8xbf16> to vector<8x8xbf16>
    %c0_52 = arith.constant 0 : index
    %c0_53 = arith.constant 0 : index
    %c24_54 = arith.constant 24 : index
    %81 = vector.load %arg4[%c0_52, %c0_53, %c24_54] : memref<1x8x32xbf16, #tpu.memory_space<vmem>>, vector<1x8x8xbf16>
    %82 = vector.shape_cast %81 : vector<1x8x8xbf16> to vector<8x8xbf16>
    %cst_55 = arith.constant dense<0.000000e+00> : vector<8x8xf32>
    %83 = tpu.matmul %78, %80, %cst_55 {dimension_numbers = #tpu.dot_dimension_numbers<[1], [1], [0], [0], [0, 0, 1, 0], [], []>} : vector<8x8xbf16>, vector<8x8xbf16>, vector<8x8xf32> -> vector<8x8xf32>
    %84 = vector.broadcast %1 : vector<1x8xf32> to vector<8x8xf32>
    %85 = arith.addf %83, %84 : vector<8x8xf32>
    %cst_56 = arith.constant dense<0xFF800000> : vector<8xf32>
    %86 = vector.multi_reduction <maximumf>, %85, %cst_56 [1] : vector<8x8xf32> to vector<8xf32>
    %87 = vector.shape_cast %86 : vector<8xf32> to vector<8x1xf32>
    %88 = vector.broadcast %87 : vector<8x1xf32> to vector<8x8xf32>
    %89 = arith.subf %85, %88 : vector<8x8xf32>
    %90 = math.exp %89 : vector<8x8xf32>
    %cst_57 = arith.constant dense<0.000000e+00> : vector<8xf32>
    %91 = vector.multi_reduction <add>, %90, %cst_57 [1] : vector<8x8xf32> to vector<8xf32>
    %92 = vector.shape_cast %91 : vector<8xf32> to vector<8x1xf32>
    %93 = tpu.reciprocal %92 {approx = true} : vector<8x1xf32> -> vector<8x1xf32>
    %94 = arith.truncf %90 : vector<8x8xf32> to vector<8x8xbf16>
    %cst_58 = arith.constant dense<0.000000e+00> : vector<8x8xf32>
    %95 = tpu.matmul %94, %82, %cst_58 {dimension_numbers = #tpu.dot_dimension_numbers<[1], [0], [0], [1], [0, 0, 1, 1], [], []>} : vector<8x8xbf16>, vector<8x8xbf16>, vector<8x8xf32> -> vector<8x8xf32>
    %96 = vector.broadcast %93 : vector<8x1xf32> to vector<8x8xf32>
    %97 = arith.mulf %95, %96 : vector<8x8xf32>
    %98 = arith.truncf %97 : vector<8x8xf32> to vector<8x8xbf16>
    %c0_59 = arith.constant 0 : index
    %c0_60 = arith.constant 0 : index
    %c24_61 = arith.constant 24 : index
    %99 = vector.load %arg6[%c0_59, %c0_60, %c24_61] : memref<1x8x32xbf16, #tpu.memory_space<vmem>>, vector<1x8x8xbf16>
    %100 = vector.shape_cast %99 : vector<1x8x8xbf16> to vector<8x8xbf16>
    %101 = vector.shape_cast %98 : vector<8x8xbf16> to vector<1x8x8xbf16>
    tpu.vector_store %arg6[%c0_59, %c0_60, %c24_61], %101 {strides = array<i32>} : memref<1x8x32xbf16, #tpu.memory_space<vmem>>, vector<1x8x8xbf16>,
    return
  }
  func.func @transform_0(%arg0: i32, %arg1: i32) -> (i32, i32, i32) {
    %c0_i32 = arith.constant 0 : i32
    %c0_i32_0 = arith.constant 0 : i32
    return %arg0, %arg1, %c0_i32 : i32, i32, i32
  }
  func.func @transform_1(%arg0: i32, %arg1: i32) -> (i32, i32, i32) {
    %c0_i32 = arith.constant 0 : i32
    %c0_i32_0 = arith.constant 0 : i32
    %c0_i32_1 = arith.constant 0 : i32
    return %arg0, %c0_i32, %c0_i32_0 : i32, i32, i32
  }
  func.func @transform_2(%arg0: i32, %arg1: i32) -> (i32, i32, i32) {
    %c0_i32 = arith.constant 0 : i32
    %c0_i32_0 = arith.constant 0 : i32
    %c0_i32_1 = arith.constant 0 : i32
    return %arg0, %c0_i32, %c0_i32_0 : i32, i32, i32
  }
  func.func @transform_3(%arg0: i32, %arg1: i32) -> (i32, i32, i32) {
    %c0_i32 = arith.constant 0 : i32
    %c0_i32_0 = arith.constant 0 : i32
    %c0_i32_1 = arith.constant 0 : i32
    return %arg0, %c0_i32, %c0_i32_0 : i32, i32, i32
  }
  func.func @transform_4(%arg0: i32, %arg1: i32) -> (i32, i32, i32) {
    %c0_i32 = arith.constant 0 : i32
    %c0_i32_0 = arith.constant 0 : i32
    return %arg0, %arg1, %c0_i32 : i32, i32, i32
  }
}

module attributes {stable_mosaic.version = 11 : i64} {
  func.func @_proj_res_ln_kernel(%arg0: i32, %arg1: i32, %arg2: memref<1x16x32xbf16, #tpu.memory_space<vmem>>, %arg3: memref<1x16x32xbf16, #tpu.memory_space<vmem>>, %arg4: memref<32x32xbf16, #tpu.memory_space<vmem>>, %arg5: memref<1x32xf32, #tpu.memory_space<vmem>>, %arg6: memref<1x1x32xf32, #tpu.memory_space<vmem>>, %arg7: memref<1x1x32xf32, #tpu.memory_space<vmem>>, %arg8: memref<1x16x32xbf16, #tpu.memory_space<vmem>>) attributes {dimension_semantics = [#tpu.dimension_semantics<parallel>, #tpu.dimension_semantics<parallel>], iteration_bounds = array<i64: 2, 1>, scalar_prefetch = 0 : i64, scratch_operands = 0 : i64, tpu.core_type = #tpu.core_type<tc>, window_params = [{transform_indices = @transform_0, window_bounds = array<i64: 1, 16, 32>}, {transform_indices = @transform_1, window_bounds = array<i64: 1, 16, 32>}, {pipeline_mode = #tpu.pipeline_mode<synchronous>, transform_indices = @transform_2, window_bounds = array<i64: 32, 32>}, {pipeline_mode = #tpu.pipeline_mode<synchronous>, transform_indices = @transform_3, window_bounds = array<i64: 1, 32>}, {transform_indices = @transform_4, window_bounds = array<i64: 1, 1, 32>}, {transform_indices = @transform_5, window_bounds = array<i64: 1, 1, 32>}, {transform_indices = @transform_6, window_bounds = array<i64: 1, 16, 32>}]} {
    %c0 = arith.constant 0 : index
    %c0_0 = arith.constant 0 : index
    %c0_1 = arith.constant 0 : index
    %0 = vector.load %arg2[%c0, %c0_0, %c0_1] : memref<1x16x32xbf16, #tpu.memory_space<vmem>>, vector<1x16x32xbf16>
    %1 = vector.shape_cast %0 : vector<1x16x32xbf16> to vector<16x32xbf16>
    %c0_2 = arith.constant 0 : index
    %c0_3 = arith.constant 0 : index
    %2 = vector.load %arg4[%c0_2, %c0_3] : memref<32x32xbf16, #tpu.memory_space<vmem>>, vector<32x32xbf16>
    %cst = arith.constant dense<0.000000e+00> : vector<16x32xf32>
    %3 = tpu.matmul %1, %2, %cst {dimension_numbers = #tpu.dot_dimension_numbers<[1], [0], [0], [1], [0, 0, 1, 1], [], []>} : vector<16x32xbf16>, vector<32x32xbf16>, vector<16x32xf32> -> vector<16x32xf32>
    %c0_4 = arith.constant 0 : index
    %c0_5 = arith.constant 0 : index
    %4 = vector.load %arg5[%c0_4, %c0_5] : memref<1x32xf32, #tpu.memory_space<vmem>>, vector<1x32xf32>
    %5 = vector.broadcast %4 : vector<1x32xf32> to vector<16x32xf32>
    %6 = arith.addf %3, %5 : vector<16x32xf32>
    %c0_6 = arith.constant 0 : index
    %c0_7 = arith.constant 0 : index
    %c0_8 = arith.constant 0 : index
    %7 = vector.load %arg3[%c0_6, %c0_7, %c0_8] : memref<1x16x32xbf16, #tpu.memory_space<vmem>>, vector<1x16x32xbf16>
    %8 = vector.shape_cast %7 : vector<1x16x32xbf16> to vector<16x32xbf16>
    %9 = arith.extf %8 : vector<16x32xbf16> to vector<16x32xf32>
    %10 = arith.addf %9, %6 : vector<16x32xf32>
    %cst_9 = arith.constant dense<0.000000e+00> : vector<16xf32>
    %11 = vector.multi_reduction <add>, %10, %cst_9 [1] : vector<16x32xf32> to vector<16xf32>
    %12 = vector.shape_cast %11 : vector<16xf32> to vector<16x1xf32>
    %cst_10 = arith.constant 3.200000e+01 : f32
    %13 = vector.broadcast %cst_10 : f32 to vector<16x1xf32>
    %14 = arith.divf %12, %13 : vector<16x1xf32>
    %15 = vector.broadcast %14 : vector<16x1xf32> to vector<16x32xf32>
    %16 = arith.subf %10, %15 : vector<16x32xf32>
    %17 = arith.mulf %16, %16 : vector<16x32xf32>
    %cst_11 = arith.constant dense<0.000000e+00> : vector<16xf32>
    %18 = vector.multi_reduction <add>, %17, %cst_11 [1] : vector<16x32xf32> to vector<16xf32>
    %19 = vector.shape_cast %18 : vector<16xf32> to vector<16x1xf32>
    %cst_12 = arith.constant 3.200000e+01 : f32
    %20 = vector.broadcast %cst_12 : f32 to vector<16x1xf32>
    %21 = arith.divf %19, %20 : vector<16x1xf32>
    %cst_13 = arith.constant 9.99999974E-6 : f32
    %22 = vector.broadcast %cst_13 : f32 to vector<16x1xf32>
    %23 = arith.addf %21, %22 : vector<16x1xf32>
    %24 = math.rsqrt %23 : vector<16x1xf32>
    %25 = vector.broadcast %24 : vector<16x1xf32> to vector<16x32xf32>
    %26 = arith.mulf %16, %25 : vector<16x32xf32>
    %c0_14 = arith.constant 0 : index
    %c0_15 = arith.constant 0 : index
    %c0_16 = arith.constant 0 : index
    %27 = vector.load %arg6[%c0_14, %c0_15, %c0_16] : memref<1x1x32xf32, #tpu.memory_space<vmem>>, vector<1x1x32xf32>
    %28 = vector.shape_cast %27 : vector<1x1x32xf32> to vector<1x32xf32>
    %29 = vector.broadcast %28 : vector<1x32xf32> to vector<16x32xf32>
    %30 = arith.mulf %26, %29 : vector<16x32xf32>
    %c0_17 = arith.constant 0 : index
    %c0_18 = arith.constant 0 : index
    %c0_19 = arith.constant 0 : index
    %31 = vector.load %arg7[%c0_17, %c0_18, %c0_19] : memref<1x1x32xf32, #tpu.memory_space<vmem>>, vector<1x1x32xf32>
    %32 = vector.shape_cast %31 : vector<1x1x32xf32> to vector<1x32xf32>
    %33 = vector.broadcast %32 : vector<1x32xf32> to vector<16x32xf32>
    %34 = arith.addf %30, %33 : vector<16x32xf32>
    %35 = arith.truncf %34 : vector<16x32xf32> to vector<16x32xbf16>
    %c0_20 = arith.constant 0 : index
    %c0_21 = arith.constant 0 : index
    %c0_22 = arith.constant 0 : index
    %36 = vector.load %arg8[%c0_20, %c0_21, %c0_22] : memref<1x16x32xbf16, #tpu.memory_space<vmem>>, vector<1x16x32xbf16>
    %37 = vector.shape_cast %36 : vector<1x16x32xbf16> to vector<16x32xbf16>
    %38 = vector.shape_cast %35 : vector<16x32xbf16> to vector<1x16x32xbf16>
    tpu.vector_store %arg8[%c0_20, %c0_21, %c0_22], %38 {strides = array<i32>} : memref<1x16x32xbf16, #tpu.memory_space<vmem>>, vector<1x16x32xbf16>,
    return
  }
  func.func @transform_0(%arg0: i32, %arg1: i32) -> (i32, i32, i32) {
    %c0_i32 = arith.constant 0 : i32
    %c0_i32_0 = arith.constant 0 : i32
    return %arg0, %arg1, %c0_i32 : i32, i32, i32
  }
  func.func @transform_1(%arg0: i32, %arg1: i32) -> (i32, i32, i32) {
    %c0_i32 = arith.constant 0 : i32
    %c0_i32_0 = arith.constant 0 : i32
    return %arg0, %arg1, %c0_i32 : i32, i32, i32
  }
  func.func @transform_2(%arg0: i32, %arg1: i32) -> (i32, i32) {
    %c0_i32 = arith.constant 0 : i32
    %c0_i32_0 = arith.constant 0 : i32
    %c0_i32_1 = arith.constant 0 : i32
    return %c0_i32, %c0_i32_0 : i32, i32
  }
  func.func @transform_3(%arg0: i32, %arg1: i32) -> (i32, i32) {
    %c0_i32 = arith.constant 0 : i32
    %c0_i32_0 = arith.constant 0 : i32
    %c0_i32_1 = arith.constant 0 : i32
    return %c0_i32, %c0_i32_0 : i32, i32
  }
  func.func @transform_4(%arg0: i32, %arg1: i32) -> (i32, i32, i32) {
    %c0_i32 = arith.constant 0 : i32
    %c0_i32_0 = arith.constant 0 : i32
    %c0_i32_1 = arith.constant 0 : i32
    return %arg0, %c0_i32, %c0_i32_0 : i32, i32, i32
  }
  func.func @transform_5(%arg0: i32, %arg1: i32) -> (i32, i32, i32) {
    %c0_i32 = arith.constant 0 : i32
    %c0_i32_0 = arith.constant 0 : i32
    %c0_i32_1 = arith.constant 0 : i32
    return %arg0, %c0_i32, %c0_i32_0 : i32, i32, i32
  }
  func.func @transform_6(%arg0: i32, %arg1: i32) -> (i32, i32, i32) {
    %c0_i32 = arith.constant 0 : i32
    %c0_i32_0 = arith.constant 0 : i32
    return %arg0, %arg1, %c0_i32 : i32, i32, i32
  }
}

module attributes {stable_mosaic.version = 11 : i64} {
  func.func @_ffn_res_ln_kernel(%arg0: i32, %arg1: i32, %arg2: memref<1x16x32xbf16, #tpu.memory_space<vmem>>, %arg3: memref<32x64xbf16, #tpu.memory_space<vmem>>, %arg4: memref<1x64xf32, #tpu.memory_space<vmem>>, %arg5: memref<64x32xbf16, #tpu.memory_space<vmem>>, %arg6: memref<1x32xf32, #tpu.memory_space<vmem>>, %arg7: memref<1x1x32xf32, #tpu.memory_space<vmem>>, %arg8: memref<1x1x32xf32, #tpu.memory_space<vmem>>, %arg9: memref<1x16x32xbf16, #tpu.memory_space<vmem>>) attributes {dimension_semantics = [#tpu.dimension_semantics<parallel>, #tpu.dimension_semantics<parallel>], iteration_bounds = array<i64: 2, 1>, scalar_prefetch = 0 : i64, scratch_operands = 0 : i64, tpu.core_type = #tpu.core_type<tc>, window_params = [{transform_indices = @transform_0, window_bounds = array<i64: 1, 16, 32>}, {pipeline_mode = #tpu.pipeline_mode<synchronous>, transform_indices = @transform_1, window_bounds = array<i64: 32, 64>}, {pipeline_mode = #tpu.pipeline_mode<synchronous>, transform_indices = @transform_2, window_bounds = array<i64: 1, 64>}, {pipeline_mode = #tpu.pipeline_mode<synchronous>, transform_indices = @transform_3, window_bounds = array<i64: 64, 32>}, {pipeline_mode = #tpu.pipeline_mode<synchronous>, transform_indices = @transform_4, window_bounds = array<i64: 1, 32>}, {transform_indices = @transform_5, window_bounds = array<i64: 1, 1, 32>}, {transform_indices = @transform_6, window_bounds = array<i64: 1, 1, 32>}, {transform_indices = @transform_7, window_bounds = array<i64: 1, 16, 32>}]} {
    %c0 = arith.constant 0 : index
    %c0_0 = arith.constant 0 : index
    %c0_1 = arith.constant 0 : index
    %0 = vector.load %arg2[%c0, %c0_0, %c0_1] : memref<1x16x32xbf16, #tpu.memory_space<vmem>>, vector<1x16x32xbf16>
    %1 = vector.shape_cast %0 : vector<1x16x32xbf16> to vector<16x32xbf16>
    %c0_2 = arith.constant 0 : index
    %c0_3 = arith.constant 0 : index
    %2 = vector.load %arg3[%c0_2, %c0_3] : memref<32x64xbf16, #tpu.memory_space<vmem>>, vector<32x64xbf16>
    %cst = arith.constant dense<0.000000e+00> : vector<16x64xf32>
    %3 = tpu.matmul %1, %2, %cst {dimension_numbers = #tpu.dot_dimension_numbers<[1], [0], [0], [1], [0, 0, 1, 1], [], []>} : vector<16x32xbf16>, vector<32x64xbf16>, vector<16x64xf32> -> vector<16x64xf32>
    %c0_4 = arith.constant 0 : index
    %c0_5 = arith.constant 0 : index
    %4 = vector.load %arg4[%c0_4, %c0_5] : memref<1x64xf32, #tpu.memory_space<vmem>>, vector<1x64xf32>
    %5 = vector.broadcast %4 : vector<1x64xf32> to vector<16x64xf32>
    %6 = arith.addf %3, %5 : vector<16x64xf32>
    %cst_6 = arith.constant 0.000000e+00 : f32
    %7 = vector.broadcast %cst_6 : f32 to vector<16x64xf32>
    %8 = arith.maximumf %6, %7 : vector<16x64xf32>
    %9 = arith.truncf %8 : vector<16x64xf32> to vector<16x64xbf16>
    %c0_7 = arith.constant 0 : index
    %c0_8 = arith.constant 0 : index
    %10 = vector.load %arg5[%c0_7, %c0_8] : memref<64x32xbf16, #tpu.memory_space<vmem>>, vector<64x32xbf16>
    %cst_9 = arith.constant dense<0.000000e+00> : vector<16x32xf32>
    %11 = tpu.matmul %9, %10, %cst_9 {dimension_numbers = #tpu.dot_dimension_numbers<[1], [0], [0], [1], [0, 0, 1, 1], [], []>} : vector<16x64xbf16>, vector<64x32xbf16>, vector<16x32xf32> -> vector<16x32xf32>
    %c0_10 = arith.constant 0 : index
    %c0_11 = arith.constant 0 : index
    %12 = vector.load %arg6[%c0_10, %c0_11] : memref<1x32xf32, #tpu.memory_space<vmem>>, vector<1x32xf32>
    %13 = vector.broadcast %12 : vector<1x32xf32> to vector<16x32xf32>
    %14 = arith.addf %11, %13 : vector<16x32xf32>
    %15 = arith.extf %1 : vector<16x32xbf16> to vector<16x32xf32>
    %16 = arith.addf %15, %14 : vector<16x32xf32>
    %cst_12 = arith.constant dense<0.000000e+00> : vector<16xf32>
    %17 = vector.multi_reduction <add>, %16, %cst_12 [1] : vector<16x32xf32> to vector<16xf32>
    %18 = vector.shape_cast %17 : vector<16xf32> to vector<16x1xf32>
    %cst_13 = arith.constant 3.200000e+01 : f32
    %19 = vector.broadcast %cst_13 : f32 to vector<16x1xf32>
    %20 = arith.divf %18, %19 : vector<16x1xf32>
    %21 = vector.broadcast %20 : vector<16x1xf32> to vector<16x32xf32>
    %22 = arith.subf %16, %21 : vector<16x32xf32>
    %23 = arith.mulf %22, %22 : vector<16x32xf32>
    %cst_14 = arith.constant dense<0.000000e+00> : vector<16xf32>
    %24 = vector.multi_reduction <add>, %23, %cst_14 [1] : vector<16x32xf32> to vector<16xf32>
    %25 = vector.shape_cast %24 : vector<16xf32> to vector<16x1xf32>
    %cst_15 = arith.constant 3.200000e+01 : f32
    %26 = vector.broadcast %cst_15 : f32 to vector<16x1xf32>
    %27 = arith.divf %25, %26 : vector<16x1xf32>
    %cst_16 = arith.constant 9.99999974E-6 : f32
    %28 = vector.broadcast %cst_16 : f32 to vector<16x1xf32>
    %29 = arith.addf %27, %28 : vector<16x1xf32>
    %30 = math.rsqrt %29 : vector<16x1xf32>
    %31 = vector.broadcast %30 : vector<16x1xf32> to vector<16x32xf32>
    %32 = arith.mulf %22, %31 : vector<16x32xf32>
    %c0_17 = arith.constant 0 : index
    %c0_18 = arith.constant 0 : index
    %c0_19 = arith.constant 0 : index
    %33 = vector.load %arg7[%c0_17, %c0_18, %c0_19] : memref<1x1x32xf32, #tpu.memory_space<vmem>>, vector<1x1x32xf32>
    %34 = vector.shape_cast %33 : vector<1x1x32xf32> to vector<1x32xf32>
    %35 = vector.broadcast %34 : vector<1x32xf32> to vector<16x32xf32>
    %36 = arith.mulf %32, %35 : vector<16x32xf32>
    %c0_20 = arith.constant 0 : index
    %c0_21 = arith.constant 0 : index
    %c0_22 = arith.constant 0 : index
    %37 = vector.load %arg8[%c0_20, %c0_21, %c0_22] : memref<1x1x32xf32, #tpu.memory_space<vmem>>, vector<1x1x32xf32>
    %38 = vector.shape_cast %37 : vector<1x1x32xf32> to vector<1x32xf32>
    %39 = vector.broadcast %38 : vector<1x32xf32> to vector<16x32xf32>
    %40 = arith.addf %36, %39 : vector<16x32xf32>
    %41 = arith.truncf %40 : vector<16x32xf32> to vector<16x32xbf16>
    %c0_23 = arith.constant 0 : index
    %c0_24 = arith.constant 0 : index
    %c0_25 = arith.constant 0 : index
    %42 = vector.load %arg9[%c0_23, %c0_24, %c0_25] : memref<1x16x32xbf16, #tpu.memory_space<vmem>>, vector<1x16x32xbf16>
    %43 = vector.shape_cast %42 : vector<1x16x32xbf16> to vector<16x32xbf16>
    %44 = vector.shape_cast %41 : vector<16x32xbf16> to vector<1x16x32xbf16>
    tpu.vector_store %arg9[%c0_23, %c0_24, %c0_25], %44 {strides = array<i32>} : memref<1x16x32xbf16, #tpu.memory_space<vmem>>, vector<1x16x32xbf16>,
    return
  }
  func.func @transform_0(%arg0: i32, %arg1: i32) -> (i32, i32, i32) {
    %c0_i32 = arith.constant 0 : i32
    %c0_i32_0 = arith.constant 0 : i32
    return %arg0, %arg1, %c0_i32 : i32, i32, i32
  }
  func.func @transform_1(%arg0: i32, %arg1: i32) -> (i32, i32) {
    %c0_i32 = arith.constant 0 : i32
    %c0_i32_0 = arith.constant 0 : i32
    %c0_i32_1 = arith.constant 0 : i32
    return %c0_i32, %c0_i32_0 : i32, i32
  }
  func.func @transform_2(%arg0: i32, %arg1: i32) -> (i32, i32) {
    %c0_i32 = arith.constant 0 : i32
    %c0_i32_0 = arith.constant 0 : i32
    %c0_i32_1 = arith.constant 0 : i32
    return %c0_i32, %c0_i32_0 : i32, i32
  }
  func.func @transform_3(%arg0: i32, %arg1: i32) -> (i32, i32) {
    %c0_i32 = arith.constant 0 : i32
    %c0_i32_0 = arith.constant 0 : i32
    %c0_i32_1 = arith.constant 0 : i32
    return %c0_i32, %c0_i32_0 : i32, i32
  }
  func.func @transform_4(%arg0: i32, %arg1: i32) -> (i32, i32) {
    %c0_i32 = arith.constant 0 : i32
    %c0_i32_0 = arith.constant 0 : i32
    %c0_i32_1 = arith.constant 0 : i32
    return %c0_i32, %c0_i32_0 : i32, i32
  }
  func.func @transform_5(%arg0: i32, %arg1: i32) -> (i32, i32, i32) {
    %c0_i32 = arith.constant 0 : i32
    %c0_i32_0 = arith.constant 0 : i32
    %c0_i32_1 = arith.constant 0 : i32
    return %arg0, %c0_i32, %c0_i32_0 : i32, i32, i32
  }
  func.func @transform_6(%arg0: i32, %arg1: i32) -> (i32, i32, i32) {
    %c0_i32 = arith.constant 0 : i32
    %c0_i32_0 = arith.constant 0 : i32
    %c0_i32_1 = arith.constant 0 : i32
    return %arg0, %c0_i32, %c0_i32_0 : i32, i32, i32
  }
  func.func @transform_7(%arg0: i32, %arg1: i32) -> (i32, i32, i32) {
    %c0_i32 = arith.constant 0 : i32
    %c0_i32_0 = arith.constant 0 : i32
    return %arg0, %arg1, %c0_i32 : i32, i32, i32
  }
}

module attributes {stable_mosaic.version = 11 : i64} {
  func.func @_attention_kernel(%arg0: i32, %arg1: i32, %arg2: memref<1x8x32xbf16, #tpu.memory_space<vmem>>, %arg3: memref<1x8x32xbf16, #tpu.memory_space<vmem>>, %arg4: memref<1x8x32xbf16, #tpu.memory_space<vmem>>, %arg5: memref<1x1x8xf32, #tpu.memory_space<vmem>>, %arg6: memref<1x8x32xbf16, #tpu.memory_space<vmem>>) attributes {dimension_semantics = [#tpu.dimension_semantics<parallel>, #tpu.dimension_semantics<parallel>], iteration_bounds = array<i64: 2, 1>, scalar_prefetch = 0 : i64, scratch_operands = 0 : i64, tpu.core_type = #tpu.core_type<tc>, window_params = [{transform_indices = @transform_0, window_bounds = array<i64: 1, 8, 32>}, {transform_indices = @transform_1, window_bounds = array<i64: 1, 8, 32>}, {transform_indices = @transform_2, window_bounds = array<i64: 1, 8, 32>}, {transform_indices = @transform_3, window_bounds = array<i64: 1, 1, 8>}, {transform_indices = @transform_4, window_bounds = array<i64: 1, 8, 32>}]} {
    %c0 = arith.constant 0 : index
    %c0_0 = arith.constant 0 : index
    %c0_1 = arith.constant 0 : index
    %0 = vector.load %arg5[%c0, %c0_0, %c0_1] : memref<1x1x8xf32, #tpu.memory_space<vmem>>, vector<1x1x8xf32>
    %1 = vector.shape_cast %0 : vector<1x1x8xf32> to vector<1x8xf32>
    %c0_2 = arith.constant 0 : index
    %c0_3 = arith.constant 0 : index
    %c0_4 = arith.constant 0 : index
    %2 = vector.load %arg2[%c0_2, %c0_3, %c0_4] : memref<1x8x32xbf16, #tpu.memory_space<vmem>>, vector<1x8x8xbf16>
    %3 = vector.shape_cast %2 : vector<1x8x8xbf16> to vector<8x8xbf16>
    %c0_5 = arith.constant 0 : index
    %c0_6 = arith.constant 0 : index
    %c0_7 = arith.constant 0 : index
    %4 = vector.load %arg3[%c0_5, %c0_6, %c0_7] : memref<1x8x32xbf16, #tpu.memory_space<vmem>>, vector<1x8x8xbf16>
    %5 = vector.shape_cast %4 : vector<1x8x8xbf16> to vector<8x8xbf16>
    %c0_8 = arith.constant 0 : index
    %c0_9 = arith.constant 0 : index
    %c0_10 = arith.constant 0 : index
    %6 = vector.load %arg4[%c0_8, %c0_9, %c0_10] : memref<1x8x32xbf16, #tpu.memory_space<vmem>>, vector<1x8x8xbf16>
    %7 = vector.shape_cast %6 : vector<1x8x8xbf16> to vector<8x8xbf16>
    %cst = arith.constant dense<0.000000e+00> : vector<8x8xf32>
    %8 = tpu.matmul %3, %5, %cst {dimension_numbers = #tpu.dot_dimension_numbers<[1], [1], [0], [0], [0, 0, 1, 0], [], []>} : vector<8x8xbf16>, vector<8x8xbf16>, vector<8x8xf32> -> vector<8x8xf32>
    %9 = vector.broadcast %1 : vector<1x8xf32> to vector<8x8xf32>
    %10 = arith.addf %8, %9 : vector<8x8xf32>
    %cst_11 = arith.constant dense<0xFF800000> : vector<8xf32>
    %11 = vector.multi_reduction <maximumf>, %10, %cst_11 [1] : vector<8x8xf32> to vector<8xf32>
    %12 = vector.shape_cast %11 : vector<8xf32> to vector<8x1xf32>
    %13 = vector.broadcast %12 : vector<8x1xf32> to vector<8x8xf32>
    %14 = arith.subf %10, %13 : vector<8x8xf32>
    %15 = math.exp %14 : vector<8x8xf32>
    %cst_12 = arith.constant dense<0.000000e+00> : vector<8xf32>
    %16 = vector.multi_reduction <add>, %15, %cst_12 [1] : vector<8x8xf32> to vector<8xf32>
    %17 = vector.shape_cast %16 : vector<8xf32> to vector<8x1xf32>
    %18 = tpu.reciprocal %17 {approx = true} : vector<8x1xf32> -> vector<8x1xf32>
    %19 = arith.truncf %15 : vector<8x8xf32> to vector<8x8xbf16>
    %cst_13 = arith.constant dense<0.000000e+00> : vector<8x8xf32>
    %20 = tpu.matmul %19, %7, %cst_13 {dimension_numbers = #tpu.dot_dimension_numbers<[1], [0], [0], [1], [0, 0, 1, 1], [], []>} : vector<8x8xbf16>, vector<8x8xbf16>, vector<8x8xf32> -> vector<8x8xf32>
    %21 = vector.broadcast %18 : vector<8x1xf32> to vector<8x8xf32>
    %22 = arith.mulf %20, %21 : vector<8x8xf32>
    %23 = arith.truncf %22 : vector<8x8xf32> to vector<8x8xbf16>
    %c0_14 = arith.constant 0 : index
    %c0_15 = arith.constant 0 : index
    %c0_16 = arith.constant 0 : index
    %24 = vector.load %arg6[%c0_14, %c0_15, %c0_16] : memref<1x8x32xbf16, #tpu.memory_space<vmem>>, vector<1x8x8xbf16>
    %25 = vector.shape_cast %24 : vector<1x8x8xbf16> to vector<8x8xbf16>
    %26 = vector.shape_cast %23 : vector<8x8xbf16> to vector<1x8x8xbf16>
    tpu.vector_store %arg6[%c0_14, %c0_15, %c0_16], %26 {strides = array<i32>} : memref<1x8x32xbf16, #tpu.memory_space<vmem>>, vector<1x8x8xbf16>,
    %c0_17 = arith.constant 0 : index
    %c0_18 = arith.constant 0 : index
    %c8 = arith.constant 8 : index
    %27 = vector.load %arg2[%c0_17, %c0_18, %c8] : memref<1x8x32xbf16, #tpu.memory_space<vmem>>, vector<1x8x8xbf16>
    %28 = vector.shape_cast %27 : vector<1x8x8xbf16> to vector<8x8xbf16>
    %c0_19 = arith.constant 0 : index
    %c0_20 = arith.constant 0 : index
    %c8_21 = arith.constant 8 : index
    %29 = vector.load %arg3[%c0_19, %c0_20, %c8_21] : memref<1x8x32xbf16, #tpu.memory_space<vmem>>, vector<1x8x8xbf16>
    %30 = vector.shape_cast %29 : vector<1x8x8xbf16> to vector<8x8xbf16>
    %c0_22 = arith.constant 0 : index
    %c0_23 = arith.constant 0 : index
    %c8_24 = arith.constant 8 : index
    %31 = vector.load %arg4[%c0_22, %c0_23, %c8_24] : memref<1x8x32xbf16, #tpu.memory_space<vmem>>, vector<1x8x8xbf16>
    %32 = vector.shape_cast %31 : vector<1x8x8xbf16> to vector<8x8xbf16>
    %cst_25 = arith.constant dense<0.000000e+00> : vector<8x8xf32>
    %33 = tpu.matmul %28, %30, %cst_25 {dimension_numbers = #tpu.dot_dimension_numbers<[1], [1], [0], [0], [0, 0, 1, 0], [], []>} : vector<8x8xbf16>, vector<8x8xbf16>, vector<8x8xf32> -> vector<8x8xf32>
    %34 = vector.broadcast %1 : vector<1x8xf32> to vector<8x8xf32>
    %35 = arith.addf %33, %34 : vector<8x8xf32>
    %cst_26 = arith.constant dense<0xFF800000> : vector<8xf32>
    %36 = vector.multi_reduction <maximumf>, %35, %cst_26 [1] : vector<8x8xf32> to vector<8xf32>
    %37 = vector.shape_cast %36 : vector<8xf32> to vector<8x1xf32>
    %38 = vector.broadcast %37 : vector<8x1xf32> to vector<8x8xf32>
    %39 = arith.subf %35, %38 : vector<8x8xf32>
    %40 = math.exp %39 : vector<8x8xf32>
    %cst_27 = arith.constant dense<0.000000e+00> : vector<8xf32>
    %41 = vector.multi_reduction <add>, %40, %cst_27 [1] : vector<8x8xf32> to vector<8xf32>
    %42 = vector.shape_cast %41 : vector<8xf32> to vector<8x1xf32>
    %43 = tpu.reciprocal %42 {approx = true} : vector<8x1xf32> -> vector<8x1xf32>
    %44 = arith.truncf %40 : vector<8x8xf32> to vector<8x8xbf16>
    %cst_28 = arith.constant dense<0.000000e+00> : vector<8x8xf32>
    %45 = tpu.matmul %44, %32, %cst_28 {dimension_numbers = #tpu.dot_dimension_numbers<[1], [0], [0], [1], [0, 0, 1, 1], [], []>} : vector<8x8xbf16>, vector<8x8xbf16>, vector<8x8xf32> -> vector<8x8xf32>
    %46 = vector.broadcast %43 : vector<8x1xf32> to vector<8x8xf32>
    %47 = arith.mulf %45, %46 : vector<8x8xf32>
    %48 = arith.truncf %47 : vector<8x8xf32> to vector<8x8xbf16>
    %c0_29 = arith.constant 0 : index
    %c0_30 = arith.constant 0 : index
    %c8_31 = arith.constant 8 : index
    %49 = vector.load %arg6[%c0_29, %c0_30, %c8_31] : memref<1x8x32xbf16, #tpu.memory_space<vmem>>, vector<1x8x8xbf16>
    %50 = vector.shape_cast %49 : vector<1x8x8xbf16> to vector<8x8xbf16>
    %51 = vector.shape_cast %48 : vector<8x8xbf16> to vector<1x8x8xbf16>
    tpu.vector_store %arg6[%c0_29, %c0_30, %c8_31], %51 {strides = array<i32>} : memref<1x8x32xbf16, #tpu.memory_space<vmem>>, vector<1x8x8xbf16>,
    %c0_32 = arith.constant 0 : index
    %c0_33 = arith.constant 0 : index
    %c16 = arith.constant 16 : index
    %52 = vector.load %arg2[%c0_32, %c0_33, %c16] : memref<1x8x32xbf16, #tpu.memory_space<vmem>>, vector<1x8x8xbf16>
    %53 = vector.shape_cast %52 : vector<1x8x8xbf16> to vector<8x8xbf16>
    %c0_34 = arith.constant 0 : index
    %c0_35 = arith.constant 0 : index
    %c16_36 = arith.constant 16 : index
    %54 = vector.load %arg3[%c0_34, %c0_35, %c16_36] : memref<1x8x32xbf16, #tpu.memory_space<vmem>>, vector<1x8x8xbf16>
    %55 = vector.shape_cast %54 : vector<1x8x8xbf16> to vector<8x8xbf16>
    %c0_37 = arith.constant 0 : index
    %c0_38 = arith.constant 0 : index
    %c16_39 = arith.constant 16 : index
    %56 = vector.load %arg4[%c0_37, %c0_38, %c16_39] : memref<1x8x32xbf16, #tpu.memory_space<vmem>>, vector<1x8x8xbf16>
    %57 = vector.shape_cast %56 : vector<1x8x8xbf16> to vector<8x8xbf16>
    %cst_40 = arith.constant dense<0.000000e+00> : vector<8x8xf32>
    %58 = tpu.matmul %53, %55, %cst_40 {dimension_numbers = #tpu.dot_dimension_numbers<[1], [1], [0], [0], [0, 0, 1, 0], [], []>} : vector<8x8xbf16>, vector<8x8xbf16>, vector<8x8xf32> -> vector<8x8xf32>
    %59 = vector.broadcast %1 : vector<1x8xf32> to vector<8x8xf32>
    %60 = arith.addf %58, %59 : vector<8x8xf32>
    %cst_41 = arith.constant dense<0xFF800000> : vector<8xf32>
    %61 = vector.multi_reduction <maximumf>, %60, %cst_41 [1] : vector<8x8xf32> to vector<8xf32>
    %62 = vector.shape_cast %61 : vector<8xf32> to vector<8x1xf32>
    %63 = vector.broadcast %62 : vector<8x1xf32> to vector<8x8xf32>
    %64 = arith.subf %60, %63 : vector<8x8xf32>
    %65 = math.exp %64 : vector<8x8xf32>
    %cst_42 = arith.constant dense<0.000000e+00> : vector<8xf32>
    %66 = vector.multi_reduction <add>, %65, %cst_42 [1] : vector<8x8xf32> to vector<8xf32>
    %67 = vector.shape_cast %66 : vector<8xf32> to vector<8x1xf32>
    %68 = tpu.reciprocal %67 {approx = true} : vector<8x1xf32> -> vector<8x1xf32>
    %69 = arith.truncf %65 : vector<8x8xf32> to vector<8x8xbf16>
    %cst_43 = arith.constant dense<0.000000e+00> : vector<8x8xf32>
    %70 = tpu.matmul %69, %57, %cst_43 {dimension_numbers = #tpu.dot_dimension_numbers<[1], [0], [0], [1], [0, 0, 1, 1], [], []>} : vector<8x8xbf16>, vector<8x8xbf16>, vector<8x8xf32> -> vector<8x8xf32>
    %71 = vector.broadcast %68 : vector<8x1xf32> to vector<8x8xf32>
    %72 = arith.mulf %70, %71 : vector<8x8xf32>
    %73 = arith.truncf %72 : vector<8x8xf32> to vector<8x8xbf16>
    %c0_44 = arith.constant 0 : index
    %c0_45 = arith.constant 0 : index
    %c16_46 = arith.constant 16 : index
    %74 = vector.load %arg6[%c0_44, %c0_45, %c16_46] : memref<1x8x32xbf16, #tpu.memory_space<vmem>>, vector<1x8x8xbf16>
    %75 = vector.shape_cast %74 : vector<1x8x8xbf16> to vector<8x8xbf16>
    %76 = vector.shape_cast %73 : vector<8x8xbf16> to vector<1x8x8xbf16>
    tpu.vector_store %arg6[%c0_44, %c0_45, %c16_46], %76 {strides = array<i32>} : memref<1x8x32xbf16, #tpu.memory_space<vmem>>, vector<1x8x8xbf16>,
    %c0_47 = arith.constant 0 : index
    %c0_48 = arith.constant 0 : index
    %c24 = arith.constant 24 : index
    %77 = vector.load %arg2[%c0_47, %c0_48, %c24] : memref<1x8x32xbf16, #tpu.memory_space<vmem>>, vector<1x8x8xbf16>
    %78 = vector.shape_cast %77 : vector<1x8x8xbf16> to vector<8x8xbf16>
    %c0_49 = arith.constant 0 : index
    %c0_50 = arith.constant 0 : index
    %c24_51 = arith.constant 24 : index
    %79 = vector.load %arg3[%c0_49, %c0_50, %c24_51] : memref<1x8x32xbf16, #tpu.memory_space<vmem>>, vector<1x8x8xbf16>
    %80 = vector.shape_cast %79 : vector<1x8x8xbf16> to vector<8x8xbf16>
    %c0_52 = arith.constant 0 : index
    %c0_53 = arith.constant 0 : index
    %c24_54 = arith.constant 24 : index
    %81 = vector.load %arg4[%c0_52, %c0_53, %c24_54] : memref<1x8x32xbf16, #tpu.memory_space<vmem>>, vector<1x8x8xbf16>
    %82 = vector.shape_cast %81 : vector<1x8x8xbf16> to vector<8x8xbf16>
    %cst_55 = arith.constant dense<0.000000e+00> : vector<8x8xf32>
    %83 = tpu.matmul %78, %80, %cst_55 {dimension_numbers = #tpu.dot_dimension_numbers<[1], [1], [0], [0], [0, 0, 1, 0], [], []>} : vector<8x8xbf16>, vector<8x8xbf16>, vector<8x8xf32> -> vector<8x8xf32>
    %84 = vector.broadcast %1 : vector<1x8xf32> to vector<8x8xf32>
    %85 = arith.addf %83, %84 : vector<8x8xf32>
    %cst_56 = arith.constant dense<0xFF800000> : vector<8xf32>
    %86 = vector.multi_reduction <maximumf>, %85, %cst_56 [1] : vector<8x8xf32> to vector<8xf32>
    %87 = vector.shape_cast %86 : vector<8xf32> to vector<8x1xf32>
    %88 = vector.broadcast %87 : vector<8x1xf32> to vector<8x8xf32>
    %89 = arith.subf %85, %88 : vector<8x8xf32>
    %90 = math.exp %89 : vector<8x8xf32>
    %cst_57 = arith.constant dense<0.000000e+00> : vector<8xf32>
    %91 = vector.multi_reduction <add>, %90, %cst_57 [1] : vector<8x8xf32> to vector<8xf32>
    %92 = vector.shape_cast %91 : vector<8xf32> to vector<8x1xf32>
    %93 = tpu.reciprocal %92 {approx = true} : vector<8x1xf32> -> vector<8x1xf32>
    %94 = arith.truncf %90 : vector<8x8xf32> to vector<8x8xbf16>
    %cst_58 = arith.constant dense<0.000000e+00> : vector<8x8xf32>
    %95 = tpu.matmul %94, %82, %cst_58 {dimension_numbers = #tpu.dot_dimension_numbers<[1], [0], [0], [1], [0, 0, 1, 1], [], []>} : vector<8x8xbf16>, vector<8x8xbf16>, vector<8x8xf32> -> vector<8x8xf32>
    %96 = vector.broadcast %93 : vector<8x1xf32> to vector<8x8xf32>
    %97 = arith.mulf %95, %96 : vector<8x8xf32>
    %98 = arith.truncf %97 : vector<8x8xf32> to vector<8x8xbf16>
    %c0_59 = arith.constant 0 : index
    %c0_60 = arith.constant 0 : index
    %c24_61 = arith.constant 24 : index
    %99 = vector.load %arg6[%c0_59, %c0_60, %c24_61] : memref<1x8x32xbf16, #tpu.memory_space<vmem>>, vector<1x8x8xbf16>
    %100 = vector.shape_cast %99 : vector<1x8x8xbf16> to vector<8x8xbf16>
    %101 = vector.shape_cast %98 : vector<8x8xbf16> to vector<1x8x8xbf16>
    tpu.vector_store %arg6[%c0_59, %c0_60, %c24_61], %101 {strides = array<i32>} : memref<1x8x32xbf16, #tpu.memory_space<vmem>>, vector<1x8x8xbf16>,
    return
  }
  func.func @transform_0(%arg0: i32, %arg1: i32) -> (i32, i32, i32) {
    %c0_i32 = arith.constant 0 : i32
    %c0_i32_0 = arith.constant 0 : i32
    return %arg0, %arg1, %c0_i32 : i32, i32, i32
  }
  func.func @transform_1(%arg0: i32, %arg1: i32) -> (i32, i32, i32) {
    %c0_i32 = arith.constant 0 : i32
    %c0_i32_0 = arith.constant 0 : i32
    %c0_i32_1 = arith.constant 0 : i32
    return %arg0, %c0_i32, %c0_i32_0 : i32, i32, i32
  }
  func.func @transform_2(%arg0: i32, %arg1: i32) -> (i32, i32, i32) {
    %c0_i32 = arith.constant 0 : i32
    %c0_i32_0 = arith.constant 0 : i32
    %c0_i32_1 = arith.constant 0 : i32
    return %arg0, %c0_i32, %c0_i32_0 : i32, i32, i32
  }
  func.func @transform_3(%arg0: i32, %arg1: i32) -> (i32, i32, i32) {
    %c0_i32 = arith.constant 0 : i32
    %c0_i32_0 = arith.constant 0 : i32
    %c0_i32_1 = arith.constant 0 : i32
    return %arg0, %c0_i32, %c0_i32_0 : i32, i32, i32
  }
  func.func @transform_4(%arg0: i32, %arg1: i32) -> (i32, i32, i32) {
    %c0_i32 = arith.constant 0 : i32
    %c0_i32_0 = arith.constant 0 : i32
    return %arg0, %arg1, %c0_i32 : i32, i32, i32
  }
}

module attributes {stable_mosaic.version = 11 : i64} {
  func.func @_qkv_kernel(%arg0: i32, %arg1: memref<16x32xbf16, #tpu.memory_space<vmem>>, %arg2: memref<32x96xbf16, #tpu.memory_space<vmem>>, %arg3: memref<1x96xf32, #tpu.memory_space<vmem>>, %arg4: memref<16x32xbf16, #tpu.memory_space<vmem>>, %arg5: memref<16x32xbf16, #tpu.memory_space<vmem>>, %arg6: memref<16x32xbf16, #tpu.memory_space<vmem>>) attributes {dimension_semantics = [#tpu.dimension_semantics<parallel>], iteration_bounds = array<i64: 1>, scalar_prefetch = 0 : i64, scratch_operands = 0 : i64, tpu.core_type = #tpu.core_type<tc>, window_params = [{transform_indices = @transform_0, window_bounds = array<i64: 16, 32>}, {pipeline_mode = #tpu.pipeline_mode<synchronous>, transform_indices = @transform_1, window_bounds = array<i64: 32, 96>}, {pipeline_mode = #tpu.pipeline_mode<synchronous>, transform_indices = @transform_2, window_bounds = array<i64: 1, 96>}, {transform_indices = @transform_3, window_bounds = array<i64: 16, 32>}, {transform_indices = @transform_4, window_bounds = array<i64: 16, 32>}, {transform_indices = @transform_5, window_bounds = array<i64: 16, 32>}]} {
    %c0 = arith.constant 0 : index
    %c0_0 = arith.constant 0 : index
    %0 = vector.load %arg1[%c0, %c0_0] : memref<16x32xbf16, #tpu.memory_space<vmem>>, vector<16x32xbf16>
    %c0_1 = arith.constant 0 : index
    %c0_2 = arith.constant 0 : index
    %1 = vector.load %arg2[%c0_1, %c0_2] : memref<32x96xbf16, #tpu.memory_space<vmem>>, vector<32x96xbf16>
    %cst = arith.constant dense<0.000000e+00> : vector<16x96xf32>
    %2 = tpu.matmul %0, %1, %cst {dimension_numbers = #tpu.dot_dimension_numbers<[1], [0], [0], [1], [0, 0, 1, 1], [], []>} : vector<16x32xbf16>, vector<32x96xbf16>, vector<16x96xf32> -> vector<16x96xf32>
    %c0_3 = arith.constant 0 : index
    %c0_4 = arith.constant 0 : index
    %3 = vector.load %arg3[%c0_3, %c0_4] : memref<1x96xf32, #tpu.memory_space<vmem>>, vector<1x96xf32>
    %4 = vector.broadcast %3 : vector<1x96xf32> to vector<16x96xf32>
    %5 = arith.addf %2, %4 : vector<16x96xf32>
    %6 = vector.extract_strided_slice %5 {offsets = [0, 0], sizes = [16, 32], strides = [1, 1]} : vector<16x96xf32> to vector<16x32xf32>
    %7 = arith.truncf %6 : vector<16x32xf32> to vector<16x32xbf16>
    %c0_5 = arith.constant 0 : index
    %c0_6 = arith.constant 0 : index
    %8 = vector.load %arg4[%c0_5, %c0_6] : memref<16x32xbf16, #tpu.memory_space<vmem>>, vector<16x32xbf16>
    tpu.vector_store %arg4[%c0_5, %c0_6], %7 {strides = array<i32>} : memref<16x32xbf16, #tpu.memory_space<vmem>>, vector<16x32xbf16>,
    %9 = vector.extract_strided_slice %5 {offsets = [0, 32], sizes = [16, 32], strides = [1, 1]} : vector<16x96xf32> to vector<16x32xf32>
    %10 = arith.truncf %9 : vector<16x32xf32> to vector<16x32xbf16>
    %c0_7 = arith.constant 0 : index
    %c0_8 = arith.constant 0 : index
    %11 = vector.load %arg5[%c0_7, %c0_8] : memref<16x32xbf16, #tpu.memory_space<vmem>>, vector<16x32xbf16>
    tpu.vector_store %arg5[%c0_7, %c0_8], %10 {strides = array<i32>} : memref<16x32xbf16, #tpu.memory_space<vmem>>, vector<16x32xbf16>,
    %12 = vector.extract_strided_slice %5 {offsets = [0, 64], sizes = [16, 32], strides = [1, 1]} : vector<16x96xf32> to vector<16x32xf32>
    %13 = arith.truncf %12 : vector<16x32xf32> to vector<16x32xbf16>
    %c0_9 = arith.constant 0 : index
    %c0_10 = arith.constant 0 : index
    %14 = vector.load %arg6[%c0_9, %c0_10] : memref<16x32xbf16, #tpu.memory_space<vmem>>, vector<16x32xbf16>
    tpu.vector_store %arg6[%c0_9, %c0_10], %13 {strides = array<i32>} : memref<16x32xbf16, #tpu.memory_space<vmem>>, vector<16x32xbf16>,
    return
  }
  func.func @transform_0(%arg0: i32) -> (i32, i32) {
    %c0_i32 = arith.constant 0 : i32
    %c0_i32_0 = arith.constant 0 : i32
    return %arg0, %c0_i32 : i32, i32
  }
  func.func @transform_1(%arg0: i32) -> (i32, i32) {
    %c0_i32 = arith.constant 0 : i32
    %c0_i32_0 = arith.constant 0 : i32
    %c0_i32_1 = arith.constant 0 : i32
    return %c0_i32, %c0_i32_0 : i32, i32
  }
  func.func @transform_2(%arg0: i32) -> (i32, i32) {
    %c0_i32 = arith.constant 0 : i32
    %c0_i32_0 = arith.constant 0 : i32
    %c0_i32_1 = arith.constant 0 : i32
    return %c0_i32, %c0_i32_0 : i32, i32
  }
  func.func @transform_3(%arg0: i32) -> (i32, i32) {
    %c0_i32 = arith.constant 0 : i32
    %c0_i32_0 = arith.constant 0 : i32
    return %arg0, %c0_i32 : i32, i32
  }
  func.func @transform_4(%arg0: i32) -> (i32, i32) {
    %c0_i32 = arith.constant 0 : i32
    %c0_i32_0 = arith.constant 0 : i32
    return %arg0, %c0_i32 : i32, i32
  }
  func.func @transform_5(%arg0: i32) -> (i32, i32) {
    %c0_i32 = arith.constant 0 : i32
    %c0_i32_0 = arith.constant 0 : i32
    return %arg0, %c0_i32 : i32, i32
  }
}

module attributes {stable_mosaic.version = 11 : i64} {
  func.func @_proj_res_ln_kernel(%arg0: i32, %arg1: i32, %arg2: memref<1x16x32xbf16, #tpu.memory_space<vmem>>, %arg3: memref<1x16x32xbf16, #tpu.memory_space<vmem>>, %arg4: memref<32x32xbf16, #tpu.memory_space<vmem>>, %arg5: memref<1x32xf32, #tpu.memory_space<vmem>>, %arg6: memref<1x1x32xf32, #tpu.memory_space<vmem>>, %arg7: memref<1x1x32xf32, #tpu.memory_space<vmem>>, %arg8: memref<1x16x32xbf16, #tpu.memory_space<vmem>>) attributes {dimension_semantics = [#tpu.dimension_semantics<parallel>, #tpu.dimension_semantics<parallel>], iteration_bounds = array<i64: 1, 1>, scalar_prefetch = 0 : i64, scratch_operands = 0 : i64, tpu.core_type = #tpu.core_type<tc>, window_params = [{transform_indices = @transform_0, window_bounds = array<i64: 1, 16, 32>}, {transform_indices = @transform_1, window_bounds = array<i64: 1, 16, 32>}, {pipeline_mode = #tpu.pipeline_mode<synchronous>, transform_indices = @transform_2, window_bounds = array<i64: 32, 32>}, {pipeline_mode = #tpu.pipeline_mode<synchronous>, transform_indices = @transform_3, window_bounds = array<i64: 1, 32>}, {transform_indices = @transform_4, window_bounds = array<i64: 1, 1, 32>}, {transform_indices = @transform_5, window_bounds = array<i64: 1, 1, 32>}, {transform_indices = @transform_6, window_bounds = array<i64: 1, 16, 32>}]} {
    %c0 = arith.constant 0 : index
    %c0_0 = arith.constant 0 : index
    %c0_1 = arith.constant 0 : index
    %0 = vector.load %arg2[%c0, %c0_0, %c0_1] : memref<1x16x32xbf16, #tpu.memory_space<vmem>>, vector<1x16x32xbf16>
    %1 = vector.shape_cast %0 : vector<1x16x32xbf16> to vector<16x32xbf16>
    %c0_2 = arith.constant 0 : index
    %c0_3 = arith.constant 0 : index
    %2 = vector.load %arg4[%c0_2, %c0_3] : memref<32x32xbf16, #tpu.memory_space<vmem>>, vector<32x32xbf16>
    %cst = arith.constant dense<0.000000e+00> : vector<16x32xf32>
    %3 = tpu.matmul %1, %2, %cst {dimension_numbers = #tpu.dot_dimension_numbers<[1], [0], [0], [1], [0, 0, 1, 1], [], []>} : vector<16x32xbf16>, vector<32x32xbf16>, vector<16x32xf32> -> vector<16x32xf32>
    %c0_4 = arith.constant 0 : index
    %c0_5 = arith.constant 0 : index
    %4 = vector.load %arg5[%c0_4, %c0_5] : memref<1x32xf32, #tpu.memory_space<vmem>>, vector<1x32xf32>
    %5 = vector.broadcast %4 : vector<1x32xf32> to vector<16x32xf32>
    %6 = arith.addf %3, %5 : vector<16x32xf32>
    %c0_6 = arith.constant 0 : index
    %c0_7 = arith.constant 0 : index
    %c0_8 = arith.constant 0 : index
    %7 = vector.load %arg3[%c0_6, %c0_7, %c0_8] : memref<1x16x32xbf16, #tpu.memory_space<vmem>>, vector<1x16x32xbf16>
    %8 = vector.shape_cast %7 : vector<1x16x32xbf16> to vector<16x32xbf16>
    %9 = arith.extf %8 : vector<16x32xbf16> to vector<16x32xf32>
    %10 = arith.addf %9, %6 : vector<16x32xf32>
    %cst_9 = arith.constant dense<0.000000e+00> : vector<16xf32>
    %11 = vector.multi_reduction <add>, %10, %cst_9 [1] : vector<16x32xf32> to vector<16xf32>
    %12 = vector.shape_cast %11 : vector<16xf32> to vector<16x1xf32>
    %cst_10 = arith.constant 3.200000e+01 : f32
    %13 = vector.broadcast %cst_10 : f32 to vector<16x1xf32>
    %14 = arith.divf %12, %13 : vector<16x1xf32>
    %15 = vector.broadcast %14 : vector<16x1xf32> to vector<16x32xf32>
    %16 = arith.subf %10, %15 : vector<16x32xf32>
    %17 = arith.mulf %16, %16 : vector<16x32xf32>
    %cst_11 = arith.constant dense<0.000000e+00> : vector<16xf32>
    %18 = vector.multi_reduction <add>, %17, %cst_11 [1] : vector<16x32xf32> to vector<16xf32>
    %19 = vector.shape_cast %18 : vector<16xf32> to vector<16x1xf32>
    %cst_12 = arith.constant 3.200000e+01 : f32
    %20 = vector.broadcast %cst_12 : f32 to vector<16x1xf32>
    %21 = arith.divf %19, %20 : vector<16x1xf32>
    %cst_13 = arith.constant 9.99999974E-6 : f32
    %22 = vector.broadcast %cst_13 : f32 to vector<16x1xf32>
    %23 = arith.addf %21, %22 : vector<16x1xf32>
    %24 = math.rsqrt %23 : vector<16x1xf32>
    %25 = vector.broadcast %24 : vector<16x1xf32> to vector<16x32xf32>
    %26 = arith.mulf %16, %25 : vector<16x32xf32>
    %c0_14 = arith.constant 0 : index
    %c0_15 = arith.constant 0 : index
    %c0_16 = arith.constant 0 : index
    %27 = vector.load %arg6[%c0_14, %c0_15, %c0_16] : memref<1x1x32xf32, #tpu.memory_space<vmem>>, vector<1x1x32xf32>
    %28 = vector.shape_cast %27 : vector<1x1x32xf32> to vector<1x32xf32>
    %29 = vector.broadcast %28 : vector<1x32xf32> to vector<16x32xf32>
    %30 = arith.mulf %26, %29 : vector<16x32xf32>
    %c0_17 = arith.constant 0 : index
    %c0_18 = arith.constant 0 : index
    %c0_19 = arith.constant 0 : index
    %31 = vector.load %arg7[%c0_17, %c0_18, %c0_19] : memref<1x1x32xf32, #tpu.memory_space<vmem>>, vector<1x1x32xf32>
    %32 = vector.shape_cast %31 : vector<1x1x32xf32> to vector<1x32xf32>
    %33 = vector.broadcast %32 : vector<1x32xf32> to vector<16x32xf32>
    %34 = arith.addf %30, %33 : vector<16x32xf32>
    %35 = arith.truncf %34 : vector<16x32xf32> to vector<16x32xbf16>
    %c0_20 = arith.constant 0 : index
    %c0_21 = arith.constant 0 : index
    %c0_22 = arith.constant 0 : index
    %36 = vector.load %arg8[%c0_20, %c0_21, %c0_22] : memref<1x16x32xbf16, #tpu.memory_space<vmem>>, vector<1x16x32xbf16>
    %37 = vector.shape_cast %36 : vector<1x16x32xbf16> to vector<16x32xbf16>
    %38 = vector.shape_cast %35 : vector<16x32xbf16> to vector<1x16x32xbf16>
    tpu.vector_store %arg8[%c0_20, %c0_21, %c0_22], %38 {strides = array<i32>} : memref<1x16x32xbf16, #tpu.memory_space<vmem>>, vector<1x16x32xbf16>,
    return
  }
  func.func @transform_0(%arg0: i32, %arg1: i32) -> (i32, i32, i32) {
    %c0_i32 = arith.constant 0 : i32
    %c0_i32_0 = arith.constant 0 : i32
    return %arg0, %arg1, %c0_i32 : i32, i32, i32
  }
  func.func @transform_1(%arg0: i32, %arg1: i32) -> (i32, i32, i32) {
    %c0_i32 = arith.constant 0 : i32
    %c0_i32_0 = arith.constant 0 : i32
    return %arg0, %arg1, %c0_i32 : i32, i32, i32
  }
  func.func @transform_2(%arg0: i32, %arg1: i32) -> (i32, i32) {
    %c0_i32 = arith.constant 0 : i32
    %c0_i32_0 = arith.constant 0 : i32
    %c0_i32_1 = arith.constant 0 : i32
    return %c0_i32, %c0_i32_0 : i32, i32
  }
  func.func @transform_3(%arg0: i32, %arg1: i32) -> (i32, i32) {
    %c0_i32 = arith.constant 0 : i32
    %c0_i32_0 = arith.constant 0 : i32
    %c0_i32_1 = arith.constant 0 : i32
    return %c0_i32, %c0_i32_0 : i32, i32
  }
  func.func @transform_4(%arg0: i32, %arg1: i32) -> (i32, i32, i32) {
    %c0_i32 = arith.constant 0 : i32
    %c0_i32_0 = arith.constant 0 : i32
    %c0_i32_1 = arith.constant 0 : i32
    return %arg0, %c0_i32, %c0_i32_0 : i32, i32, i32
  }
  func.func @transform_5(%arg0: i32, %arg1: i32) -> (i32, i32, i32) {
    %c0_i32 = arith.constant 0 : i32
    %c0_i32_0 = arith.constant 0 : i32
    %c0_i32_1 = arith.constant 0 : i32
    return %arg0, %c0_i32, %c0_i32_0 : i32, i32, i32
  }
  func.func @transform_6(%arg0: i32, %arg1: i32) -> (i32, i32, i32) {
    %c0_i32 = arith.constant 0 : i32
    %c0_i32_0 = arith.constant 0 : i32
    return %arg0, %arg1, %c0_i32 : i32, i32, i32
  }
}

module attributes {stable_mosaic.version = 11 : i64} {
  func.func @_ffn_res_ln_kernel(%arg0: i32, %arg1: i32, %arg2: memref<1x16x32xbf16, #tpu.memory_space<vmem>>, %arg3: memref<32x64xbf16, #tpu.memory_space<vmem>>, %arg4: memref<1x64xf32, #tpu.memory_space<vmem>>, %arg5: memref<64x32xbf16, #tpu.memory_space<vmem>>, %arg6: memref<1x32xf32, #tpu.memory_space<vmem>>, %arg7: memref<1x1x32xf32, #tpu.memory_space<vmem>>, %arg8: memref<1x1x32xf32, #tpu.memory_space<vmem>>, %arg9: memref<1x16x32xbf16, #tpu.memory_space<vmem>>) attributes {dimension_semantics = [#tpu.dimension_semantics<parallel>, #tpu.dimension_semantics<parallel>], iteration_bounds = array<i64: 1, 1>, scalar_prefetch = 0 : i64, scratch_operands = 0 : i64, tpu.core_type = #tpu.core_type<tc>, window_params = [{transform_indices = @transform_0, window_bounds = array<i64: 1, 16, 32>}, {pipeline_mode = #tpu.pipeline_mode<synchronous>, transform_indices = @transform_1, window_bounds = array<i64: 32, 64>}, {pipeline_mode = #tpu.pipeline_mode<synchronous>, transform_indices = @transform_2, window_bounds = array<i64: 1, 64>}, {pipeline_mode = #tpu.pipeline_mode<synchronous>, transform_indices = @transform_3, window_bounds = array<i64: 64, 32>}, {pipeline_mode = #tpu.pipeline_mode<synchronous>, transform_indices = @transform_4, window_bounds = array<i64: 1, 32>}, {transform_indices = @transform_5, window_bounds = array<i64: 1, 1, 32>}, {transform_indices = @transform_6, window_bounds = array<i64: 1, 1, 32>}, {transform_indices = @transform_7, window_bounds = array<i64: 1, 16, 32>}]} {
    %c0 = arith.constant 0 : index
    %c0_0 = arith.constant 0 : index
    %c0_1 = arith.constant 0 : index
    %0 = vector.load %arg2[%c0, %c0_0, %c0_1] : memref<1x16x32xbf16, #tpu.memory_space<vmem>>, vector<1x16x32xbf16>
    %1 = vector.shape_cast %0 : vector<1x16x32xbf16> to vector<16x32xbf16>
    %c0_2 = arith.constant 0 : index
    %c0_3 = arith.constant 0 : index
    %2 = vector.load %arg3[%c0_2, %c0_3] : memref<32x64xbf16, #tpu.memory_space<vmem>>, vector<32x64xbf16>
    %cst = arith.constant dense<0.000000e+00> : vector<16x64xf32>
    %3 = tpu.matmul %1, %2, %cst {dimension_numbers = #tpu.dot_dimension_numbers<[1], [0], [0], [1], [0, 0, 1, 1], [], []>} : vector<16x32xbf16>, vector<32x64xbf16>, vector<16x64xf32> -> vector<16x64xf32>
    %c0_4 = arith.constant 0 : index
    %c0_5 = arith.constant 0 : index
    %4 = vector.load %arg4[%c0_4, %c0_5] : memref<1x64xf32, #tpu.memory_space<vmem>>, vector<1x64xf32>
    %5 = vector.broadcast %4 : vector<1x64xf32> to vector<16x64xf32>
    %6 = arith.addf %3, %5 : vector<16x64xf32>
    %cst_6 = arith.constant 0.000000e+00 : f32
    %7 = vector.broadcast %cst_6 : f32 to vector<16x64xf32>
    %8 = arith.maximumf %6, %7 : vector<16x64xf32>
    %9 = arith.truncf %8 : vector<16x64xf32> to vector<16x64xbf16>
    %c0_7 = arith.constant 0 : index
    %c0_8 = arith.constant 0 : index
    %10 = vector.load %arg5[%c0_7, %c0_8] : memref<64x32xbf16, #tpu.memory_space<vmem>>, vector<64x32xbf16>
    %cst_9 = arith.constant dense<0.000000e+00> : vector<16x32xf32>
    %11 = tpu.matmul %9, %10, %cst_9 {dimension_numbers = #tpu.dot_dimension_numbers<[1], [0], [0], [1], [0, 0, 1, 1], [], []>} : vector<16x64xbf16>, vector<64x32xbf16>, vector<16x32xf32> -> vector<16x32xf32>
    %c0_10 = arith.constant 0 : index
    %c0_11 = arith.constant 0 : index
    %12 = vector.load %arg6[%c0_10, %c0_11] : memref<1x32xf32, #tpu.memory_space<vmem>>, vector<1x32xf32>
    %13 = vector.broadcast %12 : vector<1x32xf32> to vector<16x32xf32>
    %14 = arith.addf %11, %13 : vector<16x32xf32>
    %15 = arith.extf %1 : vector<16x32xbf16> to vector<16x32xf32>
    %16 = arith.addf %15, %14 : vector<16x32xf32>
    %cst_12 = arith.constant dense<0.000000e+00> : vector<16xf32>
    %17 = vector.multi_reduction <add>, %16, %cst_12 [1] : vector<16x32xf32> to vector<16xf32>
    %18 = vector.shape_cast %17 : vector<16xf32> to vector<16x1xf32>
    %cst_13 = arith.constant 3.200000e+01 : f32
    %19 = vector.broadcast %cst_13 : f32 to vector<16x1xf32>
    %20 = arith.divf %18, %19 : vector<16x1xf32>
    %21 = vector.broadcast %20 : vector<16x1xf32> to vector<16x32xf32>
    %22 = arith.subf %16, %21 : vector<16x32xf32>
    %23 = arith.mulf %22, %22 : vector<16x32xf32>
    %cst_14 = arith.constant dense<0.000000e+00> : vector<16xf32>
    %24 = vector.multi_reduction <add>, %23, %cst_14 [1] : vector<16x32xf32> to vector<16xf32>
    %25 = vector.shape_cast %24 : vector<16xf32> to vector<16x1xf32>
    %cst_15 = arith.constant 3.200000e+01 : f32
    %26 = vector.broadcast %cst_15 : f32 to vector<16x1xf32>
    %27 = arith.divf %25, %26 : vector<16x1xf32>
    %cst_16 = arith.constant 9.99999974E-6 : f32
    %28 = vector.broadcast %cst_16 : f32 to vector<16x1xf32>
    %29 = arith.addf %27, %28 : vector<16x1xf32>
    %30 = math.rsqrt %29 : vector<16x1xf32>
    %31 = vector.broadcast %30 : vector<16x1xf32> to vector<16x32xf32>
    %32 = arith.mulf %22, %31 : vector<16x32xf32>
    %c0_17 = arith.constant 0 : index
    %c0_18 = arith.constant 0 : index
    %c0_19 = arith.constant 0 : index
    %33 = vector.load %arg7[%c0_17, %c0_18, %c0_19] : memref<1x1x32xf32, #tpu.memory_space<vmem>>, vector<1x1x32xf32>
    %34 = vector.shape_cast %33 : vector<1x1x32xf32> to vector<1x32xf32>
    %35 = vector.broadcast %34 : vector<1x32xf32> to vector<16x32xf32>
    %36 = arith.mulf %32, %35 : vector<16x32xf32>
    %c0_20 = arith.constant 0 : index
    %c0_21 = arith.constant 0 : index
    %c0_22 = arith.constant 0 : index
    %37 = vector.load %arg8[%c0_20, %c0_21, %c0_22] : memref<1x1x32xf32, #tpu.memory_space<vmem>>, vector<1x1x32xf32>
    %38 = vector.shape_cast %37 : vector<1x1x32xf32> to vector<1x32xf32>
    %39 = vector.broadcast %38 : vector<1x32xf32> to vector<16x32xf32>
    %40 = arith.addf %36, %39 : vector<16x32xf32>
    %41 = arith.truncf %40 : vector<16x32xf32> to vector<16x32xbf16>
    %c0_23 = arith.constant 0 : index
    %c0_24 = arith.constant 0 : index
    %c0_25 = arith.constant 0 : index
    %42 = vector.load %arg9[%c0_23, %c0_24, %c0_25] : memref<1x16x32xbf16, #tpu.memory_space<vmem>>, vector<1x16x32xbf16>
    %43 = vector.shape_cast %42 : vector<1x16x32xbf16> to vector<16x32xbf16>
    %44 = vector.shape_cast %41 : vector<16x32xbf16> to vector<1x16x32xbf16>
    tpu.vector_store %arg9[%c0_23, %c0_24, %c0_25], %44 {strides = array<i32>} : memref<1x16x32xbf16, #tpu.memory_space<vmem>>, vector<1x16x32xbf16>,
    return
  }
  func.func @transform_0(%arg0: i32, %arg1: i32) -> (i32, i32, i32) {
    %c0_i32 = arith.constant 0 : i32
    %c0_i32_0 = arith.constant 0 : i32
    return %arg0, %arg1, %c0_i32 : i32, i32, i32
  }
  func.func @transform_1(%arg0: i32, %arg1: i32) -> (i32, i32) {
    %c0_i32 = arith.constant 0 : i32
    %c0_i32_0 = arith.constant 0 : i32
    %c0_i32_1 = arith.constant 0 : i32
    return %c0_i32, %c0_i32_0 : i32, i32
  }
  func.func @transform_2(%arg0: i32, %arg1: i32) -> (i32, i32) {
    %c0_i32 = arith.constant 0 : i32
    %c0_i32_0 = arith.constant 0 : i32
    %c0_i32_1 = arith.constant 0 : i32
    return %c0_i32, %c0_i32_0 : i32, i32
  }
  func.func @transform_3(%arg0: i32, %arg1: i32) -> (i32, i32) {
    %c0_i32 = arith.constant 0 : i32
    %c0_i32_0 = arith.constant 0 : i32
    %c0_i32_1 = arith.constant 0 : i32
    return %c0_i32, %c0_i32_0 : i32, i32
  }
  func.func @transform_4(%arg0: i32, %arg1: i32) -> (i32, i32) {
    %c0_i32 = arith.constant 0 : i32
    %c0_i32_0 = arith.constant 0 : i32
    %c0_i32_1 = arith.constant 0 : i32
    return %c0_i32, %c0_i32_0 : i32, i32
  }
  func.func @transform_5(%arg0: i32, %arg1: i32) -> (i32, i32, i32) {
    %c0_i32 = arith.constant 0 : i32
    %c0_i32_0 = arith.constant 0 : i32
    %c0_i32_1 = arith.constant 0 : i32
    return %arg0, %c0_i32, %c0_i32_0 : i32, i32, i32
  }
  func.func @transform_6(%arg0: i32, %arg1: i32) -> (i32, i32, i32) {
    %c0_i32 = arith.constant 0 : i32
    %c0_i32_0 = arith.constant 0 : i32
    %c0_i32_1 = arith.constant 0 : i32
    return %arg0, %c0_i32, %c0_i32_0 : i32, i32, i32
  }
  func.func @transform_7(%arg0: i32, %arg1: i32) -> (i32, i32, i32) {
    %c0_i32 = arith.constant 0 : i32
    %c0_i32_0 = arith.constant 0 : i32
    return %arg0, %arg1, %c0_i32 : i32, i32, i32
  }
}

</mosaic_0001>

<llo_original>
// kernel: difnet_encoder_forward.12
$region0: #{difnet_encoder_forward.12}
  #allocation0 [shape = 'u32[]', space=smem, size = 0x4, offset = 0x4, fixed_abs, tag = 'smem constant byte address 0x4 - core index']
  #allocation1 [shape = 'u32[72,128]{1,0:T(1,128)}', space=vmem, size = 0x9000, scoped, tag = 'internal scratch']
  %s0 = inlined_call_operand.vmem [shape: bf16[32,32], index: 0, kind: input, shape index: {}]
  %s1 = inlined_call_operand.vmem [shape: bf16[32,96], index: 1, kind: input, shape index: {}]
  %s2 = inlined_call_operand.vmem [shape: f32[1,96], index: 2, kind: input, shape index: {}]
  %s3 = inlined_call_operand.vmem [shape: bf16[32,32], index: 3, kind: output, shape index: {0}]
  %s4 = inlined_call_operand.vmem [shape: bf16[32,32], index: 4, kind: output, shape index: {1}]
  %s5 = inlined_call_operand.vmem [shape: bf16[32,32], index: 5, kind: output, shape index: {2}]
  %6 = xla_tuple %s3, %s4, %s5
  %s7 = sld [smem:[#allocation0]]
  $region38: #{difnet_encoder_forward.12} parent=0
    _
  %s9 = ssub.s32 1, %s7
  %s10 = scalar_select 0, %s9, %s7
  // Predicated region
  $region2: #{difnet_encoder_forward.12} parent=0 // pred_check
    _
  $region3: #{difnet_encoder_forward.12} parent=0 // pred_check_branch
    %12 = sbr.rel (0) target = $region5
  $region4: #{difnet_encoder_forward.12} parent=0 // pred_region
    _
  $region5: #{difnet_encoder_forward.12} parent=0 // pred_fallthru
    _
  // Predicated region
  $region6: #{difnet_encoder_forward.12} parent=0 // pred_check
    _
  $region7: #{difnet_encoder_forward.12} parent=0 // pred_check_branch
    %14 = sbr.rel (0) target = $region9
  $region8: #{difnet_encoder_forward.12} parent=0 // pred_region
    _
  $region9: #{difnet_encoder_forward.12} parent=0 // pred_fallthru
    _
  // Predicated region
  $region10: #{difnet_encoder_forward.12} parent=0 // pred_check
    _
  $region11: #{difnet_encoder_forward.12} parent=0 // pred_check_branch
    %16 = sbr.rel (0) target = $region13
  $region12: #{difnet_encoder_forward.12} parent=0 // pred_region
    _
  $region13: #{difnet_encoder_forward.12} parent=0 // pred_fallthru
    _
  %v18 = vld [vmem:[%s0] sm:$0xf]
  %v19 = vld [vmem:[%s0 + $0x4] sm:$0xf]
  %v20 = vld [vmem:[%s0 + $0x8] sm:$0xf]
  %v21 = vld [vmem:[%s0 + $0xc] sm:$0xf]
  %v22 = vld [vmem:[%s1] sm:$0xf]
  %v23 = vld [vmem:[%s1 + $0x4] sm:$0xf]
  %v24 = vld [vmem:[%s1 + $0x8] sm:$0xf]
  %v25 = vld [vmem:[%s1 + $0xc] sm:$0xf]
  %v26 = vld [vmem:[%s2] sm:$0x1]
  %v28 = vperm.slane %v26, 0
  %v34 = vunpack.c.l.b16 %v18
  %v35 = vunpack.c.l.b16 %v19
  %v36 = vunpack.c.l.b16 %v20
  %v37 = vunpack.c.l.b16 %v21
  %v38 = vpack.c.b16 %v35, %v34
  %v39 = vpack.c.b16 %v37, %v36
  %v44 = vunpack.c.l.b16 %v22
  %v45 = vunpack.c.l.b16 %v23
  %v46 = vunpack.c.l.b16 %v24
  %v47 = vunpack.c.l.b16 %v25
  %v48 = vpack.c.b16 %v45, %v44
  %v49 = vpack.c.b16 %v47, %v46
  %vm52 = vcmask 261120
  %v54 = vsel %vm52, %v38, 0
  %v57 = vsel %vm52, %v39, 0
  %59 = vmatpush.bf16.msra.mxu0 0
  %60 = vmatpush.bf16.msra.mxu0 0
  %61 = vmatpush.bf16.msra.mxu0 0
  %62 = vmatpush.bf16.msra.mxu0 0
  %63 = vmatpush.bf16.msra.mxu0 0
  %64 = vmatpush.bf16.msra.mxu0 0
  %65 = vmatpush.bf16.msra.mxu0 %v49
  %66 = vmatpush.bf16.msra.mxu0 %v48
  %67 = vmatmul.bf16.gmra.mxu0 %v54
  %v68 = vpop.f32.mrf.mxu0
  %v69 = vadd.f32 %v28, %v68
  %v70 = vpop.f32.mrf.mxu0
  %v71 = vadd.f32 %v28, %v70
  %72 = vmatmul.bf16.gmra.mxu0 %v57
  %v73 = vpop.f32.mrf.mxu0
  %v74 = vadd.f32 %v28, %v73
  %v75 = vpop.f32.mrf.mxu0
  %v76 = vadd.f32 %v28, %v75
  %77 = vdwg.mxu0
  %v78 = vpack.c.bf16 %v69, %v69
  %v79 = vpack.c.bf16 %v71, %v71
  %v80 = vpack.c.bf16 %v74, %v74
  %v81 = vpack.c.bf16 %v76, %v76
  %vm82 = vcmask 257024
  %83 = vst.msk [vmem:[%s3] sm:$0xf] %vm82, %v78
  %84 = vst.msk [vmem:[%s3 + $0x4] sm:$0xf] %vm82, %v79
  %85 = vst.msk [vmem:[%s3 + $0x8] sm:$0xf] %vm82, %v80
  %86 = vst.msk [vmem:[%s3 + $0xc] sm:$0xf] %vm82, %v81
  %91 = vrot.lane.b32.xlu0 %v78, 96
  %v92 = vpop.permute.xlu0 %91
  %93 = vrot.lane.b32.xlu0 %v79, 96
  %v94 = vpop.permute.xlu0 %93
  %95 = vrot.lane.b32.xlu0 %v80, 96
  %v96 = vpop.permute.xlu0 %95
  %97 = vrot.lane.b32.xlu0 %v81, 96
  %v98 = vpop.permute.xlu0 %97
  %103 = vst.msk [vmem:[%s4] sm:$0xf] %vm82, %v92
  %104 = vst.msk [vmem:[%s4 + $0x4] sm:$0xf] %vm82, %v94
  %105 = vst.msk [vmem:[%s4 + $0x8] sm:$0xf] %vm82, %v96
  %106 = vst.msk [vmem:[%s4 + $0xc] sm:$0xf] %vm82, %v98
  %107 = vrot.lane.b32.xlu0 %v78, 64
  %v108 = vpop.permute.xlu0 %107
  %109 = vrot.lane.b32.xlu0 %v79, 64
  %v110 = vpop.permute.xlu0 %109
  %111 = vrot.lane.b32.xlu0 %v80, 64
  %v112 = vpop.permute.xlu0 %111
  %113 = vrot.lane.b32.xlu0 %v81, 64
  %v114 = vpop.permute.xlu0 %113
  %119 = vst.msk [vmem:[%s5] sm:$0xf] %vm82, %v108
  %120 = vst.msk [vmem:[%s5 + $0x4] sm:$0xf] %vm82, %v110
  %121 = vst.msk [vmem:[%s5 + $0x8] sm:$0xf] %vm82, %v112
  %122 = vst.msk [vmem:[%s5 + $0xc] sm:$0xf] %vm82, %v114
  // Predicated region
  $region14: #{difnet_encoder_forward.12} parent=0 // pred_check
    _
  $region15: #{difnet_encoder_forward.12} parent=0 // pred_check_branch
    %124 = sbr.rel (0) target = $region17
  $region16: #{difnet_encoder_forward.12} parent=0 // pred_region
    _
  $region17: #{difnet_encoder_forward.12} parent=0 // pred_fallthru
    _
  // Predicated region
  $region18: #{difnet_encoder_forward.12} parent=0 // pred_check
    _
  $region19: #{difnet_encoder_forward.12} parent=0 // pred_check_branch
    %126 = sbr.rel (0) target = $region21
  $region20: #{difnet_encoder_forward.12} parent=0 // pred_region
    _
  $region21: #{difnet_encoder_forward.12} parent=0 // pred_fallthru
    _
  // Predicated region
  $region22: #{difnet_encoder_forward.12} parent=0 // pred_check
    _
  $region23: #{difnet_encoder_forward.12} parent=0 // pred_check_branch
    %128 = sbr.rel (0) target = $region25
  $region24: #{difnet_encoder_forward.12} parent=0 // pred_region
    _
  $region25: #{difnet_encoder_forward.12} parent=0 // pred_fallthru
    _
  // Predicated region
  $region26: #{difnet_encoder_forward.12} parent=0 // pred_check
    _
  $region27: #{difnet_encoder_forward.12} parent=0 // pred_check_branch
    %130 = sbr.rel (0) target = $region29
  $region28: #{difnet_encoder_forward.12} parent=0 // pred_region
    _
  $region29: #{difnet_encoder_forward.12} parent=0 // pred_fallthru
    _
  // Predicated region
  $region30: #{difnet_encoder_forward.12} parent=0 // pred_check
    _
  $region31: #{difnet_encoder_forward.12} parent=0 // pred_check_branch
    %132 = sbr.rel (0) target = $region33
  $region32: #{difnet_encoder_forward.12} parent=0 // pred_region
    _
  $region33: #{difnet_encoder_forward.12} parent=0 // pred_fallthru
    _
  // Predicated region
  $region34: #{difnet_encoder_forward.12} parent=0 // pred_check
    _
  $region35: #{difnet_encoder_forward.12} parent=0 // pred_check_branch
    %134 = sbr.rel (0) target = $region37
  $region36: #{difnet_encoder_forward.12} parent=0 // pred_region
    _
  $region37: #{difnet_encoder_forward.12} parent=0 // pred_fallthru
    _

// kernel: difnet_encoder_forward.14
$region0: #{difnet_encoder_forward.14}
  #allocation0 [shape = 'u32[]', space=smem, size = 0x4, offset = 0x4, fixed_abs, tag = 'smem constant byte address 0x4 - core index']
  #allocation1 [shape = 'u32[72,128]{1,0:T(1,128)}', space=vmem, size = 0x9000, scoped, tag = 'internal scratch']
  %s0 = inlined_call_operand.vmem [shape: bf16[2,16,32], index: 0, kind: input, shape index: {}]
  %s1 = inlined_call_operand.vmem [shape: bf16[2,16,32], index: 1, kind: input, shape index: {}]
  %s2 = inlined_call_operand.vmem [shape: bf16[32,32], index: 2, kind: input, shape index: {}]
  %s3 = inlined_call_operand.vmem [shape: f32[1,32], index: 3, kind: input, shape index: {}]
  %s4 = inlined_call_operand.vmem [shape: f32[2,1,32], index: 4, kind: input, shape index: {}]
  %s5 = inlined_call_operand.vmem [shape: f32[2,1,32], index: 5, kind: input, shape index: {}]
  %s6 = inlined_call_operand.vmem [shape: bf16[2,16,32], index: 6, kind: output, shape index: {}]
  %s7 = sld [smem:[#allocation0]]
  $region57: #{difnet_encoder_forward.14} parent=0
    _
  %s9 = ssub.s32 1, %s7
  %s10 = scalar_select 0, %s9, %s7
  loop: start=0, step=1, limit=4
  $region2: #{difnet_encoder_forward.14} parent=0 // loop_pre_header
    _
  $region3: #{difnet_encoder_forward.14} parent=0 // loop_header
    %s12 = sphi 0, %s16
    %p13 = scmp.ge.s32.totalorder %s12, 4
    %s19 = sphi 0, %s31
    %s20 = sphi 0, %s27
    %s21 = sphi 0, %s19
    %s22 = sphi 0, %s20
    %s23 = sphi 0, %s21
    %s24 = sphi 0, %s22
    %s36 = sphi 0, %s38
    %s39 = sphi 0, %s36
    %s40 = sphi 0, %s39
    %s56 = sphi 0, %s40
    %s64 = sphi 0, %s66
    %s67 = sphi 0, %s64
    %s68 = sphi 0, %s67
    %s84 = sphi 0, %s68
    %s88 = sphi 0, %s88
    %s90 = sphi 0, %s88
    %s91 = sphi 0, %s90
    %s105 = sphi 0, %s91
    %s109 = sphi 0, %s109
    %s111 = sphi 0, %s109
    %s112 = sphi 0, %s111
    %s126 = sphi 0, %s112
    %s132 = sphi 0, %s134
    %s135 = sphi 0, %s132
    %s136 = sphi 0, %s135
    %s152 = sphi 0, %s136
    %s158 = sphi 0, %s160
    %s161 = sphi 0, %s158
    %s162 = sphi 0, %s161
    %s178 = sphi 0, %s162
    %s186 = sphi 0, %s188
    %s189 = sphi 0, %s186
    %s190 = sphi 0, %s189
    %s206 = sphi 0, %s190
  $region4: #{difnet_encoder_forward.14} parent=0 // loop_header_branch
    %15 = sbr.rel (%p13) target = $region8
  $region5: #{difnet_encoder_forward.14} parent=0 // loop_body
    %s17 = ssub.s32 %s12, 1
    %s18 = ssub.s32 %s12, 2
    %s25 = sadd.s32 1, %s20
    %p26 = scmp.ge.s32.totalorder %s25, 1
    %s27 = scalar_select %p26, 0, %s25
    %s28 = sadd.s32 1, %s19
    %s29 = scalar_select %p26, %s28, %s19
    %p30 = scmp.ge.s32.totalorder %s29, 2
    %s31 = scalar_select %p30, 0, %s29
    %s32 = ssub.s32 %s19, %s31
    %s33 = ssub.s32 %s20, %s27
    %s34 = sor.u32 %s32, %s33
    %p35 = scmp.eq.s32.totalorder %s34, 0
    %s37 = sadd.s32 %s36, 1
    %s38 = scalar_select %p35, %s36, %s37
    %p41 = pneg %p35
    %p42 = scmp.eq.s32.totalorder %s12, 1
    %p43 = por %p41, %p42
    %p44 = scmp.ne.s32.totalorder %s36, %s39
    %p45 = scmp.eq.s32.totalorder %s12, 0
    %p46 = por %p44, %p45
    %p47 = scmp.ne.s32.totalorder %s36, %s39
    %p48 = scmp.eq.s32.totalorder %s17, 1
    %p49 = por %p47, %p48
    %p50 = scmp.ne.s32.totalorder %s39, %s40
    %p51 = scmp.eq.s32.totalorder %s17, 0
    %p52 = por %p50, %p51
    %p53 = scmp.ne.s32.totalorder %s39, %s40
    %p54 = scmp.eq.s32.totalorder %s18, 1
    %p55 = por %p53, %p54
    %p57 = scmp.ne.s32.totalorder %s40, %s56
    %p58 = scmp.eq.s32.totalorder %s18, 0
    %p59 = por %p57, %p58
    %s60 = ssub.s32 %s19, %s31
    %s61 = ssub.s32 %s20, %s27
    %s62 = sor.u32 %s60, %s61
    %p63 = scmp.eq.s32.totalorder %s62, 0
    %s65 = sadd.s32 %s64, 1
    %s66 = scalar_select %p63, %s64, %s65
    %p69 = pneg %p63
    %p70 = scmp.eq.s32.totalorder %s12, 1
    %p71 = por %p69, %p70
    %p72 = scmp.ne.s32.totalorder %s64, %s67
    %p73 = scmp.eq.s32.totalorder %s12, 0
    %p74 = por %p72, %p73
    %p75 = scmp.ne.s32.totalorder %s64, %s67
    %p76 = scmp.eq.s32.totalorder %s17, 1
    %p77 = por %p75, %p76
    %p78 = scmp.ne.s32.totalorder %s67, %s68
    %p79 = scmp.eq.s32.totalorder %s17, 0
    %p80 = por %p78, %p79
    %p81 = scmp.ne.s32.totalorder %s67, %s68
    %p82 = scmp.eq.s32.totalorder %s18, 1
    %p83 = por %p81, %p82
    %p85 = scmp.ne.s32.totalorder %s68, %s84
    %p86 = scmp.eq.s32.totalorder %s18, 0
    %p87 = por %p85, %p86
    %s89 = sadd.s32 %s88, 1
    %p92 = scmp.eq.s32.totalorder %s12, 1
    %p93 = scmp.ne.s32.totalorder %s88, %s90
    %p94 = scmp.eq.s32.totalorder %s12, 0
    %p95 = por %p93, %p94
    %p96 = scmp.ne.s32.totalorder %s88, %s90
    %p97 = scmp.eq.s32.totalorder %s17, 1
    %p98 = por %p96, %p97
    %p99 = scmp.ne.s32.totalorder %s90, %s91
    %p100 = scmp.eq.s32.totalorder %s17, 0
    %p101 = por %p99, %p100
    %p102 = scmp.ne.s32.totalorder %s90, %s91
    %p103 = scmp.eq.s32.totalorder %s18, 1
    %p104 = por %p102, %p103
    %p106 = scmp.ne.s32.totalorder %s91, %s105
    %p107 = scmp.eq.s32.totalorder %s18, 0
    %p108 = por %p106, %p107
    %s110 = sadd.s32 %s109, 1
    %p113 = scmp.eq.s32.totalorder %s12, 1
    %p114 = scmp.ne.s32.totalorder %s109, %s111
    %p115 = scmp.eq.s32.totalorder %s12, 0
    %p116 = por %p114, %p115
    %p117 = scmp.ne.s32.totalorder %s109, %s111
    %p118 = scmp.eq.s32.totalorder %s17, 1
    %p119 = por %p117, %p118
    %p120 = scmp.ne.s32.totalorder %s111, %s112
    %p121 = scmp.eq.s32.totalorder %s17, 0
    %p122 = por %p120, %p121
    %p123 = scmp.ne.s32.totalorder %s111, %s112
    %p124 = scmp.eq.s32.totalorder %s18, 1
    %p125 = por %p123, %p124
    %p127 = scmp.ne.s32.totalorder %s112, %s126
    %p128 = scmp.eq.s32.totalorder %s18, 0
    %p129 = por %p127, %p128
    %s130 = ssub.s32 %s19, %s31
    %p131 = scmp.eq.s32.totalorder %s130, 0
    %s133 = sadd.s32 %s132, 1
    %s134 = scalar_select %p131, %s132, %s133
    %p137 = pneg %p131
    %p138 = scmp.eq.s32.totalorder %s12, 1
    %p139 = por %p137, %p138
    %p140 = scmp.ne.s32.totalorder %s132, %s135
    %p141 = scmp.eq.s32.totalorder %s12, 0
    %p142 = por %p140, %p141
    %p143 = scmp.ne.s32.totalorder %s132, %s135
    %p144 = scmp.eq.s32.totalorder %s17, 1
    %p145 = por %p143, %p144
    %p146 = scmp.ne.s32.totalorder %s135, %s136
    %p147 = scmp.eq.s32.totalorder %s17, 0
    %p148 = por %p146, %p147
    %p149 = scmp.ne.s32.totalorder %s135, %s136
    %p150 = scmp.eq.s32.totalorder %s18, 1
    %p151 = por %p149, %p150
    %p153 = scmp.ne.s32.totalorder %s136, %s152
    %p154 = scmp.eq.s32.totalorder %s18, 0
    %p155 = por %p153, %p154
    %s156 = ssub.s32 %s19, %s31
    %p157 = scmp.eq.s32.totalorder %s156, 0
    %s159 = sadd.s32 %s158, 1
    %s160 = scalar_select %p157, %s158, %s159
    %p163 = pneg %p157
    %p164 = scmp.eq.s32.totalorder %s12, 1
    %p165 = por %p163, %p164
    %p166 = scmp.ne.s32.totalorder %s158, %s161
    %p167 = scmp.eq.s32.totalorder %s12, 0
    %p168 = por %p166, %p167
    %p169 = scmp.ne.s32.totalorder %s158, %s161
    %p170 = scmp.eq.s32.totalorder %s17, 1
    %p171 = por %p169, %p170
    %p172 = scmp.ne.s32.totalorder %s161, %s162
    %p173 = scmp.eq.s32.totalorder %s17, 0
    %p174 = por %p172, %p173
    %p175 = scmp.ne.s32.totalorder %s161, %s162
    %p176 = scmp.eq.s32.totalorder %s18, 1
    %p177 = por %p175, %p176
    %p179 = scmp.ne.s32.totalorder %s162, %s178
    %p180 = scmp.eq.s32.totalorder %s18, 0
    %p181 = por %p179, %p180
    %s182 = ssub.s32 %s19, %s31
    %s183 = ssub.s32 %s20, %s27
    %s184 = sor.u32 %s182, %s183
    %p185 = scmp.eq.s32.totalorder %s184, 0
    %s187 = sadd.s32 %s186, 1
    %s188 = scalar_select %p185, %s186, %s187
    %p191 = pneg %p185
    %p192 = scmp.eq.s32.totalorder %s12, 1
    %p193 = por %p191, %p192
    %p194 = scmp.ne.s32.totalorder %s186, %s189
    %p195 = scmp.eq.s32.totalorder %s12, 0
    %p196 = por %p194, %p195
    %p197 = scmp.ne.s32.totalorder %s186, %s189
    %p198 = scmp.eq.s32.totalorder %s17, 1
    %p199 = por %p197, %p198
    %p200 = scmp.ne.s32.totalorder %s189, %s190
    %p201 = scmp.eq.s32.totalorder %s17, 0
    %p202 = por %p200, %p201
    %p203 = scmp.ne.s32.totalorder %s189, %s190
    %p204 = scmp.eq.s32.totalorder %s18, 1
    %p205 = por %p203, %p204
    %p207 = scmp.ne.s32.totalorder %s190, %s206
    %p208 = scmp.eq.s32.totalorder %s18, 0
    %p209 = por %p207, %p208
    %p210 = scmp.le.s32.totalorder 1, %s12
    %p211 = scmp.lt.s32.totalorder %s12, 3
    %p212 = pnand %p210, %p211
    %p213 = pneg %p212
    // Predicated region
    $region9: #{difnet_encoder_forward.14} parent=5 // pred_check
      _
    $region10: #{difnet_encoder_forward.14} parent=5 // pred_check_branch
      %215 = sbr.rel (%p212) target = $region12
    $region11: #{difnet_encoder_forward.14} parent=5 // pred_region
      %s216 = ssub.s32 %s12, 1
      // Predicated region
      $region13: #{difnet_encoder_forward.14} parent=11 // pred_check
        %p217 = pneg %p101
      $region14: #{difnet_encoder_forward.14} parent=11 // pred_check_branch
        %219 = sbr.rel (%p217) target = $region16
      $region15: #{difnet_encoder_forward.14} parent=11 // pred_region
        _
      $region16: #{difnet_encoder_forward.14} parent=11 // pred_fallthru
        _
      // Predicated region
      $region17: #{difnet_encoder_forward.14} parent=11 // pred_check
        %p220 = pneg %p122
      $region18: #{difnet_encoder_forward.14} parent=11 // pred_check_branch
        %222 = sbr.rel (%p220) target = $region20
      $region19: #{difnet_encoder_forward.14} parent=11 // pred_region
        _
      $region20: #{difnet_encoder_forward.14} parent=11 // pred_fallthru
        _
    $region12: #{difnet_encoder_forward.14} parent=5 // pred_fallthru
      _
    %p223 = scmp.lt.s32.totalorder %s12, 2
    // Predicated region
    $region21: #{difnet_encoder_forward.14} parent=5 // pred_check
      %p224 = pneg %p223
    $region22: #{difnet_encoder_forward.14} parent=5 // pred_check_branch
      %226 = sbr.rel (%p224) target = $region24
    $region23: #{difnet_encoder_forward.14} parent=5 // pred_region
      // Predicated region
      $region25: #{difnet_encoder_forward.14} parent=23 // pred_check
        %p227 = pneg %p46
      $region26: #{difnet_encoder_forward.14} parent=23 // pred_check_branch
        %229 = sbr.rel (%p227) target = $region28
      $region27: #{difnet_encoder_forward.14} parent=23 // pred_region
        %s230 = smul.u32 2, %s20
        %p231 = scmp.lt.s32.totalorder %s19, 1
        %s232 = scalar_select %p231, %s19, 1
        %p233 = scmp.lt.s32.totalorder %s230, 1
        %s234 = scalar_select %p233, %s230, 1
        %s235 = smul.addr %s232, 2
        %s236 = sadd.s32 %s234, %s235
        %s237 = smul.addr %s236, 4
        %s238 = scalar_lea.vmem %s0, %s237
        %s239 = smul.u32 2, %s20
      $region28: #{difnet_encoder_forward.14} parent=23 // pred_fallthru
        _
      // Predicated region
      $region29: #{difnet_encoder_forward.14} parent=23 // pred_check
        %p240 = pneg %p74
      $region30: #{difnet_encoder_forward.14} parent=23 // pred_check_branch
        %242 = sbr.rel (%p240) target = $region32
      $region31: #{difnet_encoder_forward.14} parent=23 // pred_region
        %s243 = smul.u32 2, %s20
        %p244 = scmp.lt.s32.totalorder %s19, 1
        %s245 = scalar_select %p244, %s19, 1
        %p246 = scmp.lt.s32.totalorder %s243, 1
        %s247 = scalar_select %p246, %s243, 1
        %s248 = smul.addr %s245, 2
        %s249 = sadd.s32 %s247, %s248
        %s250 = smul.addr %s249, 4
        %s251 = scalar_lea.vmem %s1, %s250
        %s252 = smul.u32 2, %s20
      $region32: #{difnet_encoder_forward.14} parent=23 // pred_fallthru
        _
      // Predicated region
      $region33: #{difnet_encoder_forward.14} parent=23 // pred_check
        %p253 = pneg %p142
      $region34: #{difnet_encoder_forward.14} parent=23 // pred_check_branch
        %255 = sbr.rel (%p253) target = $region36
      $region35: #{difnet_encoder_forward.14} parent=23 // pred_region
        %p256 = scmp.lt.s32.totalorder %s19, 1
        %s257 = scalar_select %p256, %s19, 1
        %s258 = scalar_lea.vmem %s4, %s257
      $region36: #{difnet_encoder_forward.14} parent=23 // pred_fallthru
        _
      // Predicated region
      $region37: #{difnet_encoder_forward.14} parent=23 // pred_check
        %p259 = pneg %p168
      $region38: #{difnet_encoder_forward.14} parent=23 // pred_check_branch
        %261 = sbr.rel (%p259) target = $region40
      $region39: #{difnet_encoder_forward.14} parent=23 // pred_region
        %p262 = scmp.lt.s32.totalorder %s19, 1
        %s263 = scalar_select %p262, %s19, 1
        %s264 = scalar_lea.vmem %s5, %s263
      $region40: #{difnet_encoder_forward.14} parent=23 // pred_fallthru
        _
    $region24: #{difnet_encoder_forward.14} parent=5 // pred_fallthru
      _
    %p265 = scmp.le.s32.totalorder 1, %s12
    %p266 = scmp.lt.s32.totalorder %s12, 3
    %p267 = pnand %p265, %p266
    %p268 = pneg %p267
    // Predicated region
    $region41: #{difnet_encoder_forward.14} parent=5 // pred_check
      _
    $region42: #{difnet_encoder_forward.14} parent=5 // pred_check_branch
      %270 = sbr.rel (%p267) target = $region44
    $region43: #{difnet_encoder_forward.14} parent=5 // pred_region
      %s271 = ssub.s32 %s12, 1
      %s272 = smul.u32 2, %s22
      %p273 = scmp.lt.s32.totalorder %s21, 1
      %s274 = scalar_select %p273, %s21, 1
      %p275 = scmp.lt.s32.totalorder %s272, 1
      %s276 = scalar_select %p275, %s272, 1
      %s277 = smul.addr %s274, 2
      %s278 = sadd.s32 %s276, %s277
      %s279 = smul.addr %s278, 4
      %s280 = scalar_lea.vmem %s0, %s279
      %p281 = pneg %p52
      %p282 = pneg %p49
      %s283 = smul.u32 2, %s22
      %p284 = scmp.lt.s32.totalorder %s21, 1
      %s285 = scalar_select %p284, %s21, 1
      %p286 = scmp.lt.s32.totalorder %s283, 1
      %s287 = scalar_select %p286, %s283, 1
      %s288 = smul.addr %s285, 2
      %s289 = sadd.s32 %s287, %s288
      %s290 = smul.addr %s289, 4
      %s291 = scalar_lea.vmem %s1, %s290
      %p292 = pneg %p80
      %p293 = pneg %p77
      %p294 = pneg %p101
      %p295 = pneg %p98
      %p296 = pneg %p122
      %p297 = pneg %p119
      %p298 = scmp.lt.s32.totalorder %s21, 1
      %s299 = scalar_select %p298, %s21, 1
      %s300 = scalar_lea.vmem %s4, %s299
      %p301 = pneg %p148
      %p302 = pneg %p145
      %p303 = scmp.lt.s32.totalorder %s21, 1
      %s304 = scalar_select %p303, %s21, 1
      %s305 = scalar_lea.vmem %s5, %s304
      %p306 = pneg %p174
      %p307 = pneg %p171
      %p308 = pneg %p202
      %p309 = pneg %p199
      %s310 = smul.u32 2, %s22
      %p311 = scmp.lt.s32.totalorder %s21, 1
      %s312 = scalar_select %p311, %s21, 1
      %p313 = scmp.lt.s32.totalorder %s310, 1
      %s314 = scalar_select %p313, %s310, 1
      %s315 = smul.addr %s312, 2
      %s316 = sadd.s32 %s314, %s315
      %s317 = smul.addr %s316, 4
      %s318 = scalar_lea.vmem %s6, %s317
      %s319 = smul.u32 2, %s22
      %p320 = scmp.lt.s32.totalorder %s21, 1
      %s321 = scalar_select %p320, %s21, 1
      %p322 = scmp.lt.s32.totalorder %s319, 1
      %s323 = scalar_select %p322, %s319, 1
      %s324 = smul.addr %s321, 2
      %s325 = sadd.s32 %s323, %s324
      %s326 = smul.addr %s325, 4
      %s327 = scalar_lea.vmem %s0, %s326
      %s328 = smul.u32 2, %s22
      %s329 = smul.u32 2, %s22
      %p330 = scmp.lt.s32.totalorder %s21, 1
      %s331 = scalar_select %p330, %s21, 1
      %p332 = scmp.lt.s32.totalorder %s329, 1
      %s333 = scalar_select %p332, %s329, 1
      %s334 = smul.addr %s331, 2
      %s335 = sadd.s32 %s333, %s334
      %s336 = smul.addr %s335, 4
      %s337 = scalar_lea.vmem %s1, %s336
      %s338 = smul.u32 2, %s22
      %p339 = scmp.lt.s32.totalorder %s21, 1
      %s340 = scalar_select %p339, %s21, 1
      %s341 = scalar_lea.vmem %s4, %s340
      %p342 = scmp.lt.s32.totalorder %s21, 1
      %s343 = scalar_select %p342, %s21, 1
      %s344 = scalar_lea.vmem %s5, %s343
      %s345 = smul.u32 2, %s22
      %p346 = scmp.lt.s32.totalorder %s21, 1
      %s347 = scalar_select %p346, %s21, 1
      %p348 = scmp.lt.s32.totalorder %s345, 1
      %s349 = scalar_select %p348, %s345, 1
      %s350 = smul.addr %s347, 2
      %s351 = sadd.s32 %s349, %s350
      %s352 = smul.addr %s351, 4
      %s353 = scalar_lea.vmem %s6, %s352
      %s354 = smul.u32 2, %s22
      %v356 = vld [vmem:[%s327] sm:$0xf]
      %v357 = vld [vmem:[%s327 + $0x4] sm:$0xf]
      %v358 = vld [vmem:[%s2] sm:$0xf]
      %v359 = vld [vmem:[%s2 + $0x4] sm:$0xf]
      %v360 = vld [vmem:[%s2 + $0x8] sm:$0xf]
      %v361 = vld [vmem:[%s2 + $0xc] sm:$0xf]
      %v362 = vld [vmem:[%s3] sm:$0x1]
      %v364 = vperm.slane %v362, 0
      %v368 = vunpack.c.l.b16 %v356
      %v369 = vunpack.c.l.b16 %v357
      %v370 = vpack.c.b16 %v369, %v368
      %v375 = vunpack.c.l.b16 %v358
      %v376 = vunpack.c.l.b16 %v359
      %v377 = vunpack.c.l.b16 %v360
      %v378 = vunpack.c.l.b16 %v361
      %v379 = vpack.c.b16 %v376, %v375
      %v380 = vpack.c.b16 %v378, %v377
      %vm383 = vcmask 261120
      %v385 = vsel %vm383, %v370, 0
      %387 = vmatpush.bf16.msra.mxu0 0
      %388 = vmatpush.bf16.msra.mxu0 0
      %389 = vmatpush.bf16.msra.mxu0 0
      %390 = vmatpush.bf16.msra.mxu0 0
      %391 = vmatpush.bf16.msra.mxu0 0
      %392 = vmatpush.bf16.msra.mxu0 0
      %393 = vmatpush.bf16.msra.mxu0 %v380
      %394 = vmatpush.bf16.msra.mxu0 %v379
      %395 = vmatmul.bf16.gmra.mxu0 %v385
      %v396 = vpop.f32.mrf.mxu0
      %v397 = vadd.f32 %v364, %v396
      %v398 = vpop.f32.mrf.mxu0
      %v399 = vadd.f32 %v364, %v398
      %400 = vdwg.mxu0
      %v401 = vld [vmem:[%s337] sm:$0xf]
      %v402 = vld [vmem:[%s337 + $0x4] sm:$0xf]
      %v403 = vunpack.c.l.bf16 %v401
      %v404 = vunpack.c.l.bf16 %v402
      %v405 = vadd.f32 %v403, %v397
      %v406 = vadd.f32 %v404, %v399
      %v407 = vsel %vm383, %v405, 0.0
      %408 = vadd.xlane.f32.xlu0 %v407
      %v409 = vpop.xlane.xlu0 %408
      %v410 = vsel %vm383, %v406, 0.0
      %411 = vadd.xlane.f32.xlu0 %v410
      %v412 = vpop.xlane.xlu0 %411
      %v413 = vrcp.pop 32.0
      %v414 = vmul.f32 32.0, %v413
      %v415 = vsub.f32 1.0, %v414
      %v416 = vmul.f32 %v413, %v415
      %v417 = vadd.f32 %v413, %v416
      %vm418 = vweird.f32 %v413
      %v419 = vsel %vm418, %v413, %v417
      %v420 = vmul.f32 %v409, %v419
      %v421 = vmul.f32 %v412, %v419
      %v422 = vsub.f32 %v405, %v420
      %v423 = vsub.f32 %v406, %v421
      %v424 = vmul.f32 %v422, %v422
      %v425 = vmul.f32 %v423, %v423
      %v426 = vsel %vm383, %v424, 0.0
      %427 = vadd.xlane.f32.xlu0 %v426
      %v428 = vpop.xlane.xlu0 %427
      %v429 = vsel %vm383, %v425, 0.0
      %430 = vadd.xlane.f32.xlu0 %v429
      %v431 = vpop.xlane.xlu0 %430
      %v432 = vmul.f32 %v428, %v419
      %v433 = vmul.f32 %v431, %v419
      %v434 = vadd.f32 %v432, 1e-05
      %v435 = vadd.f32 %v433, 1e-05
      %v436 = vrsqrt.pop %v434
      %v437 = vmul.f32 %v436, %v434
      %v438 = vmul.f32 %v437, %v436
      %v439 = vmul.f32 0.5, %v438
      %v440 = vsub.f32 1.5, %v439
      %v441 = vmul.f32 %v436, %v440
      %vm442 = vweird.f32 %v434
      %vm443 = vweird.f32 %v436
      %vm444 = vmor %vm442, %vm443
      %v445 = vsel %vm444, %v436, %v441
      %v446 = vrsqrt.pop %v435
      %v447 = vmul.f32 %v446, %v435
      %v448 = vmul.f32 %v447, %v446
      %v449 = vmul.f32 0.5, %v448
      %v450 = vsub.f32 1.5, %v449
      %v451 = vmul.f32 %v446, %v450
      %vm452 = vweird.f32 %v435
      %vm453 = vweird.f32 %v446
      %vm454 = vmor %vm452, %vm453
      %v455 = vsel %vm454, %v446, %v451
      %v456 = vmul.f32 %v422, %v445
      %v457 = vmul.f32 %v423, %v455
      %v458 = vld [vmem:[%s341] sm:$0x1]
      %v460 = vperm.slane %v458, 0
      %v462 = vmul.f32 %v456, %v460
      %v463 = vmul.f32 %v457, %v460
      %v464 = vld [vmem:[%s344] sm:$0x1]
      %v466 = vperm.slane %v464, 0
      %v468 = vadd.f32 %v462, %v466
      %v469 = vadd.f32 %v463, %v466
      %v470 = vpack.c.bf16 %v468, %v468
      %v471 = vpack.c.bf16 %v469, %v469
      %vm472 = vcmask 257024
      %473 = vst.msk [vmem:[%s353] sm:$0xf] %vm472, %v470
      %474 = vst.msk [vmem:[%s353 + $0x4] sm:$0xf] %vm472, %v471
      %s475 = smul.u32 2, %s22
      %p476 = scmp.lt.s32.totalorder %s21, 1
      %s477 = scalar_select %p476, %s21, 1
      %p478 = scmp.lt.s32.totalorder %s475, 1
      %s479 = scalar_select %p478, %s475, 1
      %s480 = smul.addr %s477, 2
      %s481 = sadd.s32 %s479, %s480
      %s482 = smul.addr %s481, 4
      %s483 = scalar_lea.vmem %s6, %s482
      // Predicated region
      $region45: #{difnet_encoder_forward.14} parent=43 // pred_check
        %p484 = pneg %p199
      $region46: #{difnet_encoder_forward.14} parent=43 // pred_check_branch
        %486 = sbr.rel (%p484) target = $region48
      $region47: #{difnet_encoder_forward.14} parent=43 // pred_region
        %s487 = smul.u32 2, %s22
      $region48: #{difnet_encoder_forward.14} parent=43 // pred_fallthru
        _
    $region44: #{difnet_encoder_forward.14} parent=5 // pred_fallthru
      _
    %p488 = scmp.le.s32.totalorder 2, %s12
    // Predicated region
    $region49: #{difnet_encoder_forward.14} parent=5 // pred_check
      %p489 = pneg %p488
    $region50: #{difnet_encoder_forward.14} parent=5 // pred_check_branch
      %491 = sbr.rel (%p489) target = $region52
    $region51: #{difnet_encoder_forward.14} parent=5 // pred_region
      %s492 = ssub.s32 %s12, 2
      // Predicated region
      $region53: #{difnet_encoder_forward.14} parent=51 // pred_check
        %p493 = pneg %p205
      $region54: #{difnet_encoder_forward.14} parent=51 // pred_check_branch
        %495 = sbr.rel (%p493) target = $region56
      $region55: #{difnet_encoder_forward.14} parent=51 // pred_region
        %s496 = smul.u32 2, %s24
        %p497 = scmp.lt.s32.totalorder %s23, 1
        %s498 = scalar_select %p497, %s23, 1
        %p499 = scmp.lt.s32.totalorder %s496, 1
        %s500 = scalar_select %p499, %s496, 1
        %s501 = smul.addr %s498, 2
        %s502 = sadd.s32 %s500, %s501
        %s503 = smul.addr %s502, 4
        %s504 = scalar_lea.vmem %s6, %s503
      $region56: #{difnet_encoder_forward.14} parent=51 // pred_fallthru
        _
    $region52: #{difnet_encoder_forward.14} parent=5 // pred_fallthru
      _
  $region6: #{difnet_encoder_forward.14} parent=0 // loop_footer
    %s16 = sadd.s32 1, %s12
  $region7: #{difnet_encoder_forward.14} parent=0 // loop_footer_branch
    %11 = sbr.rel target = $region3
  $region8: #{difnet_encoder_forward.14} parent=0 // loop_exit
    _

// kernel: difnet_encoder_forward.13
$region0: #{difnet_encoder_forward.13}
  #allocation0 [shape = 'u32[]', space=smem, size = 0x4, offset = 0x4, fixed_abs, tag = 'smem constant byte address 0x4 - core index']
  #allocation1 [shape = 'u32[72,128]{1,0:T(1,128)}', space=vmem, size = 0x9000, scoped, tag = 'internal scratch']
  %s0 = inlined_call_operand.vmem [shape: bf16[4,8,32], index: 0, kind: input, shape index: {}]
  %s1 = inlined_call_operand.vmem [shape: bf16[4,8,32], index: 1, kind: input, shape index: {}]
  %s2 = inlined_call_operand.vmem [shape: bf16[4,8,32], index: 2, kind: input, shape index: {}]
  %s3 = inlined_call_operand.vmem [shape: f32[4,1,8], index: 3, kind: input, shape index: {}]
  %s4 = inlined_call_operand.vmem [shape: bf16[4,8,32], index: 4, kind: output, shape index: {}]
  %s5 = sld [smem:[#allocation0]]
  $region49: #{difnet_encoder_forward.13} parent=0
    _
  %s7 = ssub.s32 1, %s5
  %s8 = scalar_select 0, %s7, %s5
  loop: start=0, step=1, limit=6
  $region2: #{difnet_encoder_forward.13} parent=0 // loop_pre_header
    _
  $region3: #{difnet_encoder_forward.13} parent=0 // loop_header
    %s10 = sphi 0, %s14
    %p11 = scmp.ge.s32.totalorder %s10, 6
    %s17 = sphi 0, %s29
    %s18 = sphi 0, %s25
    %s19 = sphi 0, %s17
    %s20 = sphi 0, %s18
    %s21 = sphi 0, %s19
    %s22 = sphi 0, %s20
    %s34 = sphi 0, %s36
    %s37 = sphi 0, %s34
    %s38 = sphi 0, %s37
    %s54 = sphi 0, %s38
    %s60 = sphi 0, %s62
    %s63 = sphi 0, %s60
    %s64 = sphi 0, %s63
    %s80 = sphi 0, %s64
    %s86 = sphi 0, %s88
    %s89 = sphi 0, %s86
    %s90 = sphi 0, %s89
    %s106 = sphi 0, %s90
    %s112 = sphi 0, %s114
    %s115 = sphi 0, %s112
    %s116 = sphi 0, %s115
    %s132 = sphi 0, %s116
    %s140 = sphi 0, %s142
    %s143 = sphi 0, %s140
    %s144 = sphi 0, %s143
    %s160 = sphi 0, %s144
  $region4: #{difnet_encoder_forward.13} parent=0 // loop_header_branch
    %13 = sbr.rel (%p11) target = $region8
  $region5: #{difnet_encoder_forward.13} parent=0 // loop_body
    %s15 = ssub.s32 %s10, 1
    %s16 = ssub.s32 %s10, 2
    %s23 = sadd.s32 1, %s18
    %p24 = scmp.ge.s32.totalorder %s23, 1
    %s25 = scalar_select %p24, 0, %s23
    %s26 = sadd.s32 1, %s17
    %s27 = scalar_select %p24, %s26, %s17
    %p28 = scmp.ge.s32.totalorder %s27, 4
    %s29 = scalar_select %p28, 0, %s27
    %s30 = ssub.s32 %s17, %s29
    %s31 = ssub.s32 %s18, %s25
    %s32 = sor.u32 %s30, %s31
    %p33 = scmp.eq.s32.totalorder %s32, 0
    %s35 = sadd.s32 %s34, 1
    %s36 = scalar_select %p33, %s34, %s35
    %p39 = pneg %p33
    %p40 = scmp.eq.s32.totalorder %s10, 3
    %p41 = por %p39, %p40
    %p42 = scmp.ne.s32.totalorder %s34, %s37
    %p43 = scmp.eq.s32.totalorder %s10, 0
    %p44 = por %p42, %p43
    %p45 = scmp.ne.s32.totalorder %s34, %s37
    %p46 = scmp.eq.s32.totalorder %s15, 3
    %p47 = por %p45, %p46
    %p48 = scmp.ne.s32.totalorder %s37, %s38
    %p49 = scmp.eq.s32.totalorder %s15, 0
    %p50 = por %p48, %p49
    %p51 = scmp.ne.s32.totalorder %s37, %s38
    %p52 = scmp.eq.s32.totalorder %s16, 3
    %p53 = por %p51, %p52
    %p55 = scmp.ne.s32.totalorder %s38, %s54
    %p56 = scmp.eq.s32.totalorder %s16, 0
    %p57 = por %p55, %p56
    %s58 = ssub.s32 %s17, %s29
    %p59 = scmp.eq.s32.totalorder %s58, 0
    %s61 = sadd.s32 %s60, 1
    %s62 = scalar_select %p59, %s60, %s61
    %p65 = pneg %p59
    %p66 = scmp.eq.s32.totalorder %s10, 3
    %p67 = por %p65, %p66
    %p68 = scmp.ne.s32.totalorder %s60, %s63
    %p69 = scmp.eq.s32.totalorder %s10, 0
    %p70 = por %p68, %p69
    %p71 = scmp.ne.s32.totalorder %s60, %s63
    %p72 = scmp.eq.s32.totalorder %s15, 3
    %p73 = por %p71, %p72
    %p74 = scmp.ne.s32.totalorder %s63, %s64
    %p75 = scmp.eq.s32.totalorder %s15, 0
    %p76 = por %p74, %p75
    %p77 = scmp.ne.s32.totalorder %s63, %s64
    %p78 = scmp.eq.s32.totalorder %s16, 3
    %p79 = por %p77, %p78
    %p81 = scmp.ne.s32.totalorder %s64, %s80
    %p82 = scmp.eq.s32.totalorder %s16, 0
    %p83 = por %p81, %p82
    %s84 = ssub.s32 %s17, %s29
    %p85 = scmp.eq.s32.totalorder %s84, 0
    %s87 = sadd.s32 %s86, 1
    %s88 = scalar_select %p85, %s86, %s87
    %p91 = pneg %p85
    %p92 = scmp.eq.s32.totalorder %s10, 3
    %p93 = por %p91, %p92
    %p94 = scmp.ne.s32.totalorder %s86, %s89
    %p95 = scmp.eq.s32.totalorder %s10, 0
    %p96 = por %p94, %p95
    %p97 = scmp.ne.s32.totalorder %s86, %s89
    %p98 = scmp.eq.s32.totalorder %s15, 3
    %p99 = por %p97, %p98
    %p100 = scmp.ne.s32.totalorder %s89, %s90
    %p101 = scmp.eq.s32.totalorder %s15, 0
    %p102 = por %p100, %p101
    %p103 = scmp.ne.s32.totalorder %s89, %s90
    %p104 = scmp.eq.s32.totalorder %s16, 3
    %p105 = por %p103, %p104
    %p107 = scmp.ne.s32.totalorder %s90, %s106
    %p108 = scmp.eq.s32.totalorder %s16, 0
    %p109 = por %p107, %p108
    %s110 = ssub.s32 %s17, %s29
    %p111 = scmp.eq.s32.totalorder %s110, 0
    %s113 = sadd.s32 %s112, 1
    %s114 = scalar_select %p111, %s112, %s113
    %p117 = pneg %p111
    %p118 = scmp.eq.s32.totalorder %s10, 3
    %p119 = por %p117, %p118
    %p120 = scmp.ne.s32.totalorder %s112, %s115
    %p121 = scmp.eq.s32.totalorder %s10, 0
    %p122 = por %p120, %p121
    %p123 = scmp.ne.s32.totalorder %s112, %s115
    %p124 = scmp.eq.s32.totalorder %s15, 3
    %p125 = por %p123, %p124
    %p126 = scmp.ne.s32.totalorder %s115, %s116
    %p127 = scmp.eq.s32.totalorder %s15, 0
    %p128 = por %p126, %p127
    %p129 = scmp.ne.s32.totalorder %s115, %s116
    %p130 = scmp.eq.s32.totalorder %s16, 3
    %p131 = por %p129, %p130
    %p133 = scmp.ne.s32.totalorder %s116, %s132
    %p134 = scmp.eq.s32.totalorder %s16, 0
    %p135 = por %p133, %p134
    %s136 = ssub.s32 %s17, %s29
    %s137 = ssub.s32 %s18, %s25
    %s138 = sor.u32 %s136, %s137
    %p139 = scmp.eq.s32.totalorder %s138, 0
    %s141 = sadd.s32 %s140, 1
    %s142 = scalar_select %p139, %s140, %s141
    %p145 = pneg %p139
    %p146 = scmp.eq.s32.totalorder %s10, 3
    %p147 = por %p145, %p146
    %p148 = scmp.ne.s32.totalorder %s140, %s143
    %p149 = scmp.eq.s32.totalorder %s10, 0
    %p150 = por %p148, %p149
    %p151 = scmp.ne.s32.totalorder %s140, %s143
    %p152 = scmp.eq.s32.totalorder %s15, 3
    %p153 = por %p151, %p152
    %p154 = scmp.ne.s32.totalorder %s143, %s144
    %p155 = scmp.eq.s32.totalorder %s15, 0
    %p156 = por %p154, %p155
    %p157 = scmp.ne.s32.totalorder %s143, %s144
    %p158 = scmp.eq.s32.totalorder %s16, 3
    %p159 = por %p157, %p158
    %p161 = scmp.ne.s32.totalorder %s144, %s160
    %p162 = scmp.eq.s32.totalorder %s16, 0
    %p163 = por %p161, %p162
    %p164 = scmp.le.s32.totalorder 1, %s10
    %p165 = scmp.lt.s32.totalorder %s10, 5
    %p166 = pnand %p164, %p165
    %p167 = pneg %p166
    // Predicated region
    $region9: #{difnet_encoder_forward.13} parent=5 // pred_check
      _
    $region10: #{difnet_encoder_forward.13} parent=5 // pred_check_branch
      %169 = sbr.rel (%p166) target = $region12
    $region11: #{difnet_encoder_forward.13} parent=5 // pred_region
      %s170 = ssub.s32 %s10, 1
    $region12: #{difnet_encoder_forward.13} parent=5 // pred_fallthru
      _
    %p171 = scmp.lt.s32.totalorder %s10, 4
    // Predicated region
    $region13: #{difnet_encoder_forward.13} parent=5 // pred_check
      %p172 = pneg %p171
    $region14: #{difnet_encoder_forward.13} parent=5 // pred_check_branch
      %174 = sbr.rel (%p172) target = $region16
    $region15: #{difnet_encoder_forward.13} parent=5 // pred_region
      // Predicated region
      $region17: #{difnet_encoder_forward.13} parent=15 // pred_check
        %p175 = pneg %p44
      $region18: #{difnet_encoder_forward.13} parent=15 // pred_check_branch
        %177 = sbr.rel (%p175) target = $region20
      $region19: #{difnet_encoder_forward.13} parent=15 // pred_region
        %p178 = scmp.lt.s32.totalorder %s17, 3
        %s179 = scalar_select %p178, %s17, 3
        %p180 = scmp.lt.s32.totalorder %s18, 0
        %s181 = scalar_select %p180, %s18, 0
        %s182 = sadd.s32 %s181, %s179
        %s183 = smul.addr %s182, 4
        %s184 = scalar_lea.vmem %s0, %s183
      $region20: #{difnet_encoder_forward.13} parent=15 // pred_fallthru
        _
      // Predicated region
      $region21: #{difnet_encoder_forward.13} parent=15 // pred_check
        %p185 = pneg %p70
      $region22: #{difnet_encoder_forward.13} parent=15 // pred_check_branch
        %187 = sbr.rel (%p185) target = $region24
      $region23: #{difnet_encoder_forward.13} parent=15 // pred_region
        %p188 = scmp.lt.s32.totalorder %s17, 3
        %s189 = scalar_select %p188, %s17, 3
        %s190 = smul.addr %s189, 4
        %s191 = scalar_lea.vmem %s1, %s190
      $region24: #{difnet_encoder_forward.13} parent=15 // pred_fallthru
        _
      // Predicated region
      $region25: #{difnet_encoder_forward.13} parent=15 // pred_check
        %p192 = pneg %p96
      $region26: #{difnet_encoder_forward.13} parent=15 // pred_check_branch
        %194 = sbr.rel (%p192) target = $region28
      $region27: #{difnet_encoder_forward.13} parent=15 // pred_region
        %p195 = scmp.lt.s32.totalorder %s17, 3
        %s196 = scalar_select %p195, %s17, 3
        %s197 = smul.addr %s196, 4
        %s198 = scalar_lea.vmem %s2, %s197
      $region28: #{difnet_encoder_forward.13} parent=15 // pred_fallthru
        _
      // Predicated region
      $region29: #{difnet_encoder_forward.13} parent=15 // pred_check
        %p199 = pneg %p122
      $region30: #{difnet_encoder_forward.13} parent=15 // pred_check_branch
        %201 = sbr.rel (%p199) target = $region32
      $region31: #{difnet_encoder_forward.13} parent=15 // pred_region
        %p202 = scmp.lt.s32.totalorder %s17, 3
        %s203 = scalar_select %p202, %s17, 3
        %s204 = scalar_lea.vmem %s3, %s203
      $region32: #{difnet_encoder_forward.13} parent=15 // pred_fallthru
        _
    $region16: #{difnet_encoder_forward.13} parent=5 // pred_fallthru
      _
    %p205 = scmp.le.s32.totalorder 1, %s10
    %p206 = scmp.lt.s32.totalorder %s10, 5
    %p207 = pnand %p205, %p206
    %p208 = pneg %p207
    // Predicated region
    $region33: #{difnet_encoder_forward.13} parent=5 // pred_check
      _
    $region34: #{difnet_encoder_forward.13} parent=5 // pred_check_branch
      %210 = sbr.rel (%p207) target = $region36
    $region35: #{difnet_encoder_forward.13} parent=5 // pred_region
      %s211 = ssub.s32 %s10, 1
      %p212 = scmp.lt.s32.totalorder %s19, 3
      %s213 = scalar_select %p212, %s19, 3
      %p214 = scmp.lt.s32.totalorder %s20, 0
      %s215 = scalar_select %p214, %s20, 0
      %s216 = sadd.s32 %s215, %s213
      %s217 = smul.addr %s216, 4
      %s218 = scalar_lea.vmem %s0, %s217
      %p219 = pneg %p50
      %p220 = pneg %p47
      %p221 = scmp.lt.s32.totalorder %s19, 3
      %s222 = scalar_select %p221, %s19, 3
      %s223 = smul.addr %s222, 4
      %s224 = scalar_lea.vmem %s1, %s223
      %p225 = pneg %p76
      %p226 = pneg %p73
      %p227 = scmp.lt.s32.totalorder %s19, 3
      %s228 = scalar_select %p227, %s19, 3
      %s229 = smul.addr %s228, 4
      %s230 = scalar_lea.vmem %s2, %s229
      %p231 = pneg %p102
      %p232 = pneg %p99
      %p233 = scmp.lt.s32.totalorder %s19, 3
      %s234 = scalar_select %p233, %s19, 3
      %s235 = scalar_lea.vmem %s3, %s234
      %p236 = pneg %p128
      %p237 = pneg %p125
      %p238 = pneg %p156
      %p239 = pneg %p153
      %p240 = scmp.lt.s32.totalorder %s19, 3
      %s241 = scalar_select %p240, %s19, 3
      %p242 = scmp.lt.s32.totalorder %s20, 0
      %s243 = scalar_select %p242, %s20, 0
      %s244 = sadd.s32 %s243, %s241
      %s245 = smul.addr %s244, 4
      %s246 = scalar_lea.vmem %s4, %s245
      %p247 = scmp.lt.s32.totalorder %s19, 3
      %s248 = scalar_select %p247, %s19, 3
      %p249 = scmp.lt.s32.totalorder %s20, 0
      %s250 = scalar_select %p249, %s20, 0
      %s251 = sadd.s32 %s250, %s248
      %s252 = smul.addr %s251, 4
      %s253 = scalar_lea.vmem %s0, %s252
      %p254 = scmp.lt.s32.totalorder %s19, 3
      %s255 = scalar_select %p254, %s19, 3
      %s256 = smul.addr %s255, 4
      %s257 = scalar_lea.vmem %s1, %s256
      %p258 = scmp.lt.s32.totalorder %s19, 3
      %s259 = scalar_select %p258, %s19, 3
      %s260 = smul.addr %s259, 4
      %s261 = scalar_lea.vmem %s2, %s260
      %p262 = scmp.lt.s32.totalorder %s19, 3
      %s263 = scalar_select %p262, %s19, 3
      %s264 = scalar_lea.vmem %s3, %s263
      %p265 = scmp.lt.s32.totalorder %s19, 3
      %s266 = scalar_select %p265, %s19, 3
      %p267 = scmp.lt.s32.totalorder %s20, 0
      %s268 = scalar_select %p267, %s20, 0
      %s269 = sadd.s32 %s268, %s266
      %s270 = smul.addr %s269, 4
      %s271 = scalar_lea.vmem %s4, %s270
      %v273 = vld [vmem:[%s264] sm:$0x1]
      %v274 = vld [vmem:[%s253] sm:$0xf]
      %v275 = vld [vmem:[%s257] sm:$0xf]
      %v276 = vld [vmem:[%s261] sm:$0xf]
      %v278 = vperm.slane %v273, 0
      %vm280 = vcmask 64512
      %v282 = vsel %vm280, %v274, 0
      %v285 = vsel %vm280, %v275, 0
      %287 = vmatpush.bf16.xpose.msra.mxu0 0
      %288 = vmatpush.bf16.xpose.msra.mxu0 0
      %289 = vmatpush.bf16.xpose.msra.mxu0 0
      %290 = vmatpush.bf16.xpose.msra.mxu0 0
      %291 = vmatpush.bf16.xpose.msra.mxu0 0
      %292 = vmatpush.bf16.xpose.msra.mxu0 0
      %293 = vmatpush.bf16.xpose.msra.mxu0 0
      %294 = vmatpush.bf16.xpose.msra.mxu0 %v285
      %295 = vmatmul.bf16.gmra.mxu0 %v282
      %v296 = vpop.f32.mrf.mxu0
      %v297 = vadd.f32 %v278, %v296
      %v298 = vpop.f32.mrf.mxu0
      %299 = vdwg.mxu0
      %v300 = vsel %vm280, %v297, -inf
      %301 = vmax.xlane.f32.xlu0 %v300
      %v302 = vpop.xlane.xlu0 %301
      %v303 = vsub.f32 %v297, %v302
      %v304 = vmul.f32 %v303, 1.442695
      %v305 = vpow.pop %v304
      %v306 = vsel %vm280, %v305, 0.0
      %307 = vadd.xlane.f32.xlu0 %v306
      %v308 = vpop.xlane.xlu0 %307
      %v309 = vrcp.pop %v308
      %v310 = vpack.c.bf16 %v305, %v305
      %v312 = vsel %vm280, %v310, 0
      %vm314 = vcmask 1043456
      %v316 = vsel %vm314, %v276, 0
      %318 = vmatpush.bf16.msra.mxu0 0
      %319 = vmatpush.bf16.msra.mxu0 0
      %320 = vmatpush.bf16.msra.mxu0 0
      %321 = vmatpush.bf16.msra.mxu0 0
      %322 = vmatpush.bf16.msra.mxu0 0
      %323 = vmatpush.bf16.msra.mxu0 0
      %324 = vmatpush.bf16.msra.mxu0 0
      %325 = vmatpush.bf16.msra.mxu0 %v316
      %326 = vmatmul.bf16.gmra.mxu0 %v312
      %v327 = vpop.f32.mrf.mxu0
      %v328 = vadd.f32 0.0, %v327
      %v329 = vpop.f32.mrf.mxu0
      %330 = vdwg.mxu0
      %v331 = vmul.f32 %v328, %v309
      %v332 = vpack.c.bf16 %v331, %v331
      %vm333 = vcmask 60416
      %334 = vst.msk [vmem:[%s271] sm:$0xf] %vm333, %v332
      %v335 = vld [vmem:[%s253] sm:$0xf]
      %v336 = vld [vmem:[%s257] sm:$0xf]
      %v337 = vld [vmem:[%s261] sm:$0xf]
      %v339 = vunpack.c.l.b16 %v335
      %v340 = vpack.c.b16 %v339, %v339
      %341 = vrot.lane.b32.xlu0 %v340, 120
      %v342 = vpop.permute.xlu0 %341
      %v344 = vunpack.c.l.b16 %v336
      %v345 = vpack.c.b16 %v344, %v344
      %346 = vrot.lane.b32.xlu0 %v345, 120
      %v347 = vpop.permute.xlu0 %346
      %v349 = vsel %vm280, %v342, 0
      %v352 = vsel %vm280, %v347, 0
      %354 = vmatpush.bf16.xpose.msra.mxu0 0
      %355 = vmatpush.bf16.xpose.msra.mxu0 0
      %356 = vmatpush.bf16.xpose.msra.mxu0 0
      %357 = vmatpush.bf16.xpose.msra.mxu0 0
      %358 = vmatpush.bf16.xpose.msra.mxu0 0
      %359 = vmatpush.bf16.xpose.msra.mxu0 0
      %360 = vmatpush.bf16.xpose.msra.mxu0 0
      %361 = vmatpush.bf16.xpose.msra.mxu0 %v352
      %362 = vmatmul.bf16.gmra.mxu0 %v349
      %v363 = vpop.f32.mrf.mxu0
      %v364 = vadd.f32 %v278, %v363
      %v365 = vpop.f32.mrf.mxu0
      %366 = vdwg.mxu0
      %v367 = vsel %vm280, %v364, -inf
      %368 = vmax.xlane.f32.xlu0 %v367
      %v369 = vpop.xlane.xlu0 %368
      %v370 = vsub.f32 %v364, %v369
      %v371 = vmul.f32 %v370, 1.442695
      %v372 = vpow.pop %v371
      %v373 = vsel %vm280, %v372, 0.0
      %374 = vadd.xlane.f32.xlu0 %v373
      %v375 = vpop.xlane.xlu0 %374
      %v376 = vrcp.pop %v375
      %v377 = vpack.c.bf16 %v372, %v372
      %v379 = vunpack.c.l.b16 %v337
      %v380 = vpack.c.b16 %v379, %v379
      %381 = vrot.lane.b32.xlu0 %v380, 120
      %v382 = vpop.permute.xlu0 %381
      %v384 = vsel %vm280, %v377, 0
      %v387 = vsel %vm314, %v382, 0
      %389 = vmatpush.bf16.msra.mxu0 0
      %390 = vmatpush.bf16.msra.mxu0 0
      %391 = vmatpush.bf16.msra.mxu0 0
      %392 = vmatpush.bf16.msra.mxu0 0
      %393 = vmatpush.bf16.msra.mxu0 0
      %394 = vmatpush.bf16.msra.mxu0 0
      %395 = vmatpush.bf16.msra.mxu0 0
      %396 = vmatpush.bf16.msra.mxu0 %v387
      %397 = vmatmul.bf16.gmra.mxu0 %v384
      %v398 = vpop.f32.mrf.mxu0
      %v399 = vadd.f32 0.0, %v398
      %v400 = vpop.f32.mrf.mxu0
      %401 = vdwg.mxu0
      %v402 = vmul.f32 %v399, %v376
      %v403 = vpack.c.bf16 %v402, %v402
      %405 = vrot.lane.b32.xlu0 %v403, 8
      %v406 = vpop.permute.xlu0 %405
      %vm408 = vcmask 126016
      %409 = vst.msk [vmem:[%s271] sm:$0xf] %vm408, %v406
      %v410 = vld [vmem:[%s253] sm:$0xf]
      %v411 = vld [vmem:[%s257] sm:$0xf]
      %v412 = vld [vmem:[%s261] sm:$0xf]
      %v414 = vunpack.c.l.b16 %v410
      %v415 = vpack.c.b16 %v414, %v414
      %416 = vrot.lane.b32.xlu0 %v415, 112
      %v417 = vpop.permute.xlu0 %416
      %v419 = vunpack.c.l.b16 %v411
      %v420 = vpack.c.b16 %v419, %v419
      %421 = vrot.lane.b32.xlu0 %v420, 112
      %v422 = vpop.permute.xlu0 %421
      %v424 = vsel %vm280, %v417, 0
      %v427 = vsel %vm280, %v422, 0
      %429 = vmatpush.bf16.xpose.msra.mxu0 0
      %430 = vmatpush.bf16.xpose.msra.mxu0 0
      %431 = vmatpush.bf16.xpose.msra.mxu0 0
      %432 = vmatpush.bf16.xpose.msra.mxu0 0
      %433 = vmatpush.bf16.xpose.msra.mxu0 0
      %434 = vmatpush.bf16.xpose.msra.mxu0 0
      %435 = vmatpush.bf16.xpose.msra.mxu0 0
      %436 = vmatpush.bf16.xpose.msra.mxu0 %v427
      %437 = vmatmul.bf16.gmra.mxu0 %v424
      %v438 = vpop.f32.mrf.mxu0
      %v439 = vadd.f32 %v278, %v438
      %v440 = vpop.f32.mrf.mxu0
      %441 = vdwg.mxu0
      %v442 = vsel %vm280, %v439, -inf
      %443 = vmax.xlane.f32.xlu0 %v442
      %v444 = vpop.xlane.xlu0 %443
      %v445 = vsub.f32 %v439, %v444
      %v446 = vmul.f32 %v445, 1.442695
      %v447 = vpow.pop %v446
      %v448 = vsel %vm280, %v447, 0.0
      %449 = vadd.xlane.f32.xlu0 %v448
      %v450 = vpop.xlane.xlu0 %449
      %v451 = vrcp.pop %v450
      %v452 = vpack.c.bf16 %v447, %v447
      %v454 = vunpack.c.l.b16 %v412
      %v455 = vpack.c.b16 %v454, %v454
      %456 = vrot.lane.b32.xlu0 %v455, 112
      %v457 = vpop.permute.xlu0 %456
      %v459 = vsel %vm280, %v452, 0
      %v462 = vsel %vm314, %v457, 0
      %464 = vmatpush.bf16.msra.mxu0 0
      %465 = vmatpush.bf16.msra.mxu0 0
      %466 = vmatpush.bf16.msra.mxu0 0
      %467 = vmatpush.bf16.msra.mxu0 0
      %468 = vmatpush.bf16.msra.mxu0 0
      %469 = vmatpush.bf16.msra.mxu0 0
      %470 = vmatpush.bf16.msra.mxu0 0
      %471 = vmatpush.bf16.msra.mxu0 %v462
      %472 = vmatmul.bf16.gmra.mxu0 %v459
      %v473 = vpop.f32.mrf.mxu0
      %v474 = vadd.f32 0.0, %v473
      %v475 = vpop.f32.mrf.mxu0
      %476 = vdwg.mxu0
      %v477 = vmul.f32 %v474, %v451
      %v478 = vpack.c.bf16 %v477, %v477
      %480 = vrot.lane.b32.xlu0 %v478, 16
      %v481 = vpop.permute.xlu0 %480
      %vm483 = vcmask 191616
      %484 = vst.msk [vmem:[%s271] sm:$0xf] %vm483, %v481
      %v485 = vld [vmem:[%s253] sm:$0xf]
      %v486 = vld [vmem:[%s257] sm:$0xf]
      %v487 = vld [vmem:[%s261] sm:$0xf]
      %v489 = vunpack.c.l.b16 %v485
      %v490 = vpack.c.b16 %v489, %v489
      %491 = vrot.lane.b32.xlu0 %v490, 104
      %v492 = vpop.permute.xlu0 %491
      %v494 = vunpack.c.l.b16 %v486
      %v495 = vpack.c.b16 %v494, %v494
      %496 = vrot.lane.b32.xlu0 %v495, 104
      %v497 = vpop.permute.xlu0 %496
      %v499 = vsel %vm280, %v492, 0
      %v502 = vsel %vm280, %v497, 0
      %504 = vmatpush.bf16.xpose.msra.mxu0 0
      %505 = vmatpush.bf16.xpose.msra.mxu0 0
      %506 = vmatpush.bf16.xpose.msra.mxu0 0
      %507 = vmatpush.bf16.xpose.msra.mxu0 0
      %508 = vmatpush.bf16.xpose.msra.mxu0 0
      %509 = vmatpush.bf16.xpose.msra.mxu0 0
      %510 = vmatpush.bf16.xpose.msra.mxu0 0
      %511 = vmatpush.bf16.xpose.msra.mxu0 %v502
      %512 = vmatmul.bf16.gmra.mxu0 %v499
      %v513 = vpop.f32.mrf.mxu0
      %v514 = vadd.f32 %v278, %v513
      %v515 = vpop.f32.mrf.mxu0
      %516 = vdwg.mxu0
      %v517 = vsel %vm280, %v514, -inf
      %518 = vmax.xlane.f32.xlu0 %v517
      %v519 = vpop.xlane.xlu0 %518
      %v520 = vsub.f32 %v514, %v519
      %v521 = vmul.f32 %v520, 1.442695
      %v522 = vpow.pop %v521
      %v523 = vsel %vm280, %v522, 0.0
      %524 = vadd.xlane.f32.xlu0 %v523
      %v525 = vpop.xlane.xlu0 %524
      %v526 = vrcp.pop %v525
      %v527 = vpack.c.bf16 %v522, %v522
      %v529 = vunpack.c.l.b16 %v487
      %v530 = vpack.c.b16 %v529, %v529
      %531 = vrot.lane.b32.xlu0 %v530, 104
      %v532 = vpop.permute.xlu0 %531
      %v534 = vsel %vm280, %v527, 0
      %v537 = vsel %vm314, %v532, 0
      %539 = vmatpush.bf16.msra.mxu0 0
      %540 = vmatpush.bf16.msra.mxu0 0
      %541 = vmatpush.bf16.msra.mxu0 0
      %542 = vmatpush.bf16.msra.mxu0 0
      %543 = vmatpush.bf16.msra.mxu0 0
      %544 = vmatpush.bf16.msra.mxu0 0
      %545 = vmatpush.bf16.msra.mxu0 0
      %546 = vmatpush.bf16.msra.mxu0 %v537
      %547 = vmatmul.bf16.gmra.mxu0 %v534
      %v548 = vpop.f32.mrf.mxu0
      %v549 = vadd.f32 0.0, %v548
      %v550 = vpop.f32.mrf.mxu0
      %551 = vdwg.mxu0
      %v552 = vmul.f32 %v549, %v526
      %v553 = vpack.c.bf16 %v552, %v552
      %555 = vrot.lane.b32.xlu0 %v553, 24
      %v556 = vpop.permute.xlu0 %555
      %vm558 = vcmask 257216
      %559 = vst.msk [vmem:[%s271] sm:$0xf] %vm558, %v556
      %p560 = scmp.lt.s32.totalorder %s19, 3
      %s561 = scalar_select %p560, %s19, 3
      %p562 = scmp.lt.s32.totalorder %s20, 0
      %s563 = scalar_select %p562, %s20, 0
      %s564 = sadd.s32 %s563, %s561
      %s565 = smul.addr %s564, 4
      %s566 = scalar_lea.vmem %s4, %s565
      // Predicated region
      $region37: #{difnet_encoder_forward.13} parent=35 // pred_check
        %p567 = pneg %p153
      $region38: #{difnet_encoder_forward.13} parent=35 // pred_check_branch
        %569 = sbr.rel (%p567) target = $region40
      $region39: #{difnet_encoder_forward.13} parent=35 // pred_region
        _
      $region40: #{difnet_encoder_forward.13} parent=35 // pred_fallthru
        _
    $region36: #{difnet_encoder_forward.13} parent=5 // pred_fallthru
      _
    %p570 = scmp.le.s32.totalorder 2, %s10
    // Predicated region
    $region41: #{difnet_encoder_forward.13} parent=5 // pred_check
      %p571 = pneg %p570
    $region42: #{difnet_encoder_forward.13} parent=5 // pred_check_branch
      %573 = sbr.rel (%p571) target = $region44
    $region43: #{difnet_encoder_forward.13} parent=5 // pred_region
      %s574 = ssub.s32 %s10, 2
      // Predicated region
      $region45: #{difnet_encoder_forward.13} parent=43 // pred_check
        %p575 = pneg %p159
      $region46: #{difnet_encoder_forward.13} parent=43 // pred_check_branch
        %577 = sbr.rel (%p575) target = $region48
      $region47: #{difnet_encoder_forward.13} parent=43 // pred_region
        %p578 = scmp.lt.s32.totalorder %s21, 3
        %s579 = scalar_select %p578, %s21, 3
        %p580 = scmp.lt.s32.totalorder %s22, 0
        %s581 = scalar_select %p580, %s22, 0
        %s582 = sadd.s32 %s581, %s579
        %s583 = smul.addr %s582, 4
        %s584 = scalar_lea.vmem %s4, %s583
      $region48: #{difnet_encoder_forward.13} parent=43 // pred_fallthru
        _
    $region44: #{difnet_encoder_forward.13} parent=5 // pred_fallthru
      _
  $region6: #{difnet_encoder_forward.13} parent=0 // loop_footer
    %s14 = sadd.s32 1, %s10
  $region7: #{difnet_encoder_forward.13} parent=0 // loop_footer_branch
    %9 = sbr.rel target = $region3
  $region8: #{difnet_encoder_forward.13} parent=0 // loop_exit
    _

// kernel: difnet_encoder_forward.15
$region0: #{difnet_encoder_forward.15}
  #allocation0 [shape = 'u32[]', space=smem, size = 0x4, offset = 0x4, fixed_abs, tag = 'smem constant byte address 0x4 - core index']
  #allocation1 [shape = 'u32[72,128]{1,0:T(1,128)}', space=vmem, size = 0x9000, scoped, tag = 'internal scratch']
  %s0 = inlined_call_operand.vmem [shape: bf16[2,16,32], index: 0, kind: input, shape index: {}]
  %s1 = inlined_call_operand.vmem [shape: bf16[32,64], index: 1, kind: input, shape index: {}]
  %s2 = inlined_call_operand.vmem [shape: f32[1,64], index: 2, kind: input, shape index: {}]
  %s3 = inlined_call_operand.vmem [shape: bf16[64,32], index: 3, kind: input, shape index: {}]
  %s4 = inlined_call_operand.vmem [shape: f32[1,32], index: 4, kind: input, shape index: {}]
  %s5 = inlined_call_operand.vmem [shape: f32[2,1,32], index: 5, kind: input, shape index: {}]
  %s6 = inlined_call_operand.vmem [shape: f32[2,1,32], index: 6, kind: input, shape index: {}]
  %s7 = inlined_call_operand.vmem [shape: bf16[2,16,32], index: 7, kind: output, shape index: {}]
  %s8 = sld [smem:[#allocation0]]
  $region61: #{difnet_encoder_forward.15} parent=0
    _
  %s10 = ssub.s32 1, %s8
  %s11 = scalar_select 0, %s10, %s8
  loop: start=0, step=1, limit=4
  $region2: #{difnet_encoder_forward.15} parent=0 // loop_pre_header
    _
  $region3: #{difnet_encoder_forward.15} parent=0 // loop_header
    %s13 = sphi 0, %s17
    %p14 = scmp.ge.s32.totalorder %s13, 4
    %s20 = sphi 0, %s32
    %s21 = sphi 0, %s28
    %s22 = sphi 0, %s20
    %s23 = sphi 0, %s21
    %s24 = sphi 0, %s22
    %s25 = sphi 0, %s23
    %s37 = sphi 0, %s39
    %s40 = sphi 0, %s37
    %s41 = sphi 0, %s40
    %s57 = sphi 0, %s41
    %s61 = sphi 0, %s61
    %s63 = sphi 0, %s61
    %s64 = sphi 0, %s63
    %s78 = sphi 0, %s64
    %s82 = sphi 0, %s82
    %s84 = sphi 0, %s82
    %s85 = sphi 0, %s84
    %s99 = sphi 0, %s85
    %s103 = sphi 0, %s103
    %s105 = sphi 0, %s103
    %s106 = sphi 0, %s105
    %s120 = sphi 0, %s106
    %s124 = sphi 0, %s124
    %s126 = sphi 0, %s124
    %s127 = sphi 0, %s126
    %s141 = sphi 0, %s127
    %s147 = sphi 0, %s149
    %s150 = sphi 0, %s147
    %s151 = sphi 0, %s150
    %s167 = sphi 0, %s151
    %s173 = sphi 0, %s175
    %s176 = sphi 0, %s173
    %s177 = sphi 0, %s176
    %s193 = sphi 0, %s177
    %s201 = sphi 0, %s203
    %s204 = sphi 0, %s201
    %s205 = sphi 0, %s204
    %s221 = sphi 0, %s205
  $region4: #{difnet_encoder_forward.15} parent=0 // loop_header_branch
    %16 = sbr.rel (%p14) target = $region8
  $region5: #{difnet_encoder_forward.15} parent=0 // loop_body
    %s18 = ssub.s32 %s13, 1
    %s19 = ssub.s32 %s13, 2
    %s26 = sadd.s32 1, %s21
    %p27 = scmp.ge.s32.totalorder %s26, 1
    %s28 = scalar_select %p27, 0, %s26
    %s29 = sadd.s32 1, %s20
    %s30 = scalar_select %p27, %s29, %s20
    %p31 = scmp.ge.s32.totalorder %s30, 2
    %s32 = scalar_select %p31, 0, %s30
    %s33 = ssub.s32 %s20, %s32
    %s34 = ssub.s32 %s21, %s28
    %s35 = sor.u32 %s33, %s34
    %p36 = scmp.eq.s32.totalorder %s35, 0
    %s38 = sadd.s32 %s37, 1
    %s39 = scalar_select %p36, %s37, %s38
    %p42 = pneg %p36
    %p43 = scmp.eq.s32.totalorder %s13, 1
    %p44 = por %p42, %p43
    %p45 = scmp.ne.s32.totalorder %s37, %s40
    %p46 = scmp.eq.s32.totalorder %s13, 0
    %p47 = por %p45, %p46
    %p48 = scmp.ne.s32.totalorder %s37, %s40
    %p49 = scmp.eq.s32.totalorder %s18, 1
    %p50 = por %p48, %p49
    %p51 = scmp.ne.s32.totalorder %s40, %s41
    %p52 = scmp.eq.s32.totalorder %s18, 0
    %p53 = por %p51, %p52
    %p54 = scmp.ne.s32.totalorder %s40, %s41
    %p55 = scmp.eq.s32.totalorder %s19, 1
    %p56 = por %p54, %p55
    %p58 = scmp.ne.s32.totalorder %s41, %s57
    %p59 = scmp.eq.s32.totalorder %s19, 0
    %p60 = por %p58, %p59
    %s62 = sadd.s32 %s61, 1
    %p65 = scmp.eq.s32.totalorder %s13, 1
    %p66 = scmp.ne.s32.totalorder %s61, %s63
    %p67 = scmp.eq.s32.totalorder %s13, 0
    %p68 = por %p66, %p67
    %p69 = scmp.ne.s32.totalorder %s61, %s63
    %p70 = scmp.eq.s32.totalorder %s18, 1
    %p71 = por %p69, %p70
    %p72 = scmp.ne.s32.totalorder %s63, %s64
    %p73 = scmp.eq.s32.totalorder %s18, 0
    %p74 = por %p72, %p73
    %p75 = scmp.ne.s32.totalorder %s63, %s64
    %p76 = scmp.eq.s32.totalorder %s19, 1
    %p77 = por %p75, %p76
    %p79 = scmp.ne.s32.totalorder %s64, %s78
    %p80 = scmp.eq.s32.totalorder %s19, 0
    %p81 = por %p79, %p80
    %s83 = sadd.s32 %s82, 1
    %p86 = scmp.eq.s32.totalorder %s13, 1
    %p87 = scmp.ne.s32.totalorder %s82, %s84
    %p88 = scmp.eq.s32.totalorder %s13, 0
    %p89 = por %p87, %p88
    %p90 = scmp.ne.s32.totalorder %s82, %s84
    %p91 = scmp.eq.s32.totalorder %s18, 1
    %p92 = por %p90, %p91
    %p93 = scmp.ne.s32.totalorder %s84, %s85
    %p94 = scmp.eq.s32.totalorder %s18, 0
    %p95 = por %p93, %p94
    %p96 = scmp.ne.s32.totalorder %s84, %s85
    %p97 = scmp.eq.s32.totalorder %s19, 1
    %p98 = por %p96, %p97
    %p100 = scmp.ne.s32.totalorder %s85, %s99
    %p101 = scmp.eq.s32.totalorder %s19, 0
    %p102 = por %p100, %p101
    %s104 = sadd.s32 %s103, 1
    %p107 = scmp.eq.s32.totalorder %s13, 1
    %p108 = scmp.ne.s32.totalorder %s103, %s105
    %p109 = scmp.eq.s32.totalorder %s13, 0
    %p110 = por %p108, %p109
    %p111 = scmp.ne.s32.totalorder %s103, %s105
    %p112 = scmp.eq.s32.totalorder %s18, 1
    %p113 = por %p111, %p112
    %p114 = scmp.ne.s32.totalorder %s105, %s106
    %p115 = scmp.eq.s32.totalorder %s18, 0
    %p116 = por %p114, %p115
    %p117 = scmp.ne.s32.totalorder %s105, %s106
    %p118 = scmp.eq.s32.totalorder %s19, 1
    %p119 = por %p117, %p118
    %p121 = scmp.ne.s32.totalorder %s106, %s120
    %p122 = scmp.eq.s32.totalorder %s19, 0
    %p123 = por %p121, %p122
    %s125 = sadd.s32 %s124, 1
    %p128 = scmp.eq.s32.totalorder %s13, 1
    %p129 = scmp.ne.s32.totalorder %s124, %s126
    %p130 = scmp.eq.s32.totalorder %s13, 0
    %p131 = por %p129, %p130
    %p132 = scmp.ne.s32.totalorder %s124, %s126
    %p133 = scmp.eq.s32.totalorder %s18, 1
    %p134 = por %p132, %p133
    %p135 = scmp.ne.s32.totalorder %s126, %s127
    %p136 = scmp.eq.s32.totalorder %s18, 0
    %p137 = por %p135, %p136
    %p138 = scmp.ne.s32.totalorder %s126, %s127
    %p139 = scmp.eq.s32.totalorder %s19, 1
    %p140 = por %p138, %p139
    %p142 = scmp.ne.s32.totalorder %s127, %s141
    %p143 = scmp.eq.s32.totalorder %s19, 0
    %p144 = por %p142, %p143
    %s145 = ssub.s32 %s20, %s32
    %p146 = scmp.eq.s32.totalorder %s145, 0
    %s148 = sadd.s32 %s147, 1
    %s149 = scalar_select %p146, %s147, %s148
    %p152 = pneg %p146
    %p153 = scmp.eq.s32.totalorder %s13, 1
    %p154 = por %p152, %p153
    %p155 = scmp.ne.s32.totalorder %s147, %s150
    %p156 = scmp.eq.s32.totalorder %s13, 0
    %p157 = por %p155, %p156
    %p158 = scmp.ne.s32.totalorder %s147, %s150
    %p159 = scmp.eq.s32.totalorder %s18, 1
    %p160 = por %p158, %p159
    %p161 = scmp.ne.s32.totalorder %s150, %s151
    %p162 = scmp.eq.s32.totalorder %s18, 0
    %p163 = por %p161, %p162
    %p164 = scmp.ne.s32.totalorder %s150, %s151
    %p165 = scmp.eq.s32.totalorder %s19, 1
    %p166 = por %p164, %p165
    %p168 = scmp.ne.s32.totalorder %s151, %s167
    %p169 = scmp.eq.s32.totalorder %s19, 0
    %p170 = por %p168, %p169
    %s171 = ssub.s32 %s20, %s32
    %p172 = scmp.eq.s32.totalorder %s171, 0
    %s174 = sadd.s32 %s173, 1
    %s175 = scalar_select %p172, %s173, %s174
    %p178 = pneg %p172
    %p179 = scmp.eq.s32.totalorder %s13, 1
    %p180 = por %p178, %p179
    %p181 = scmp.ne.s32.totalorder %s173, %s176
    %p182 = scmp.eq.s32.totalorder %s13, 0
    %p183 = por %p181, %p182
    %p184 = scmp.ne.s32.totalorder %s173, %s176
    %p185 = scmp.eq.s32.totalorder %s18, 1
    %p186 = por %p184, %p185
    %p187 = scmp.ne.s32.totalorder %s176, %s177
    %p188 = scmp.eq.s32.totalorder %s18, 0
    %p189 = por %p187, %p188
    %p190 = scmp.ne.s32.totalorder %s176, %s177
    %p191 = scmp.eq.s32.totalorder %s19, 1
    %p192 = por %p190, %p191
    %p194 = scmp.ne.s32.totalorder %s177, %s193
    %p195 = scmp.eq.s32.totalorder %s19, 0
    %p196 = por %p194, %p195
    %s197 = ssub.s32 %s20, %s32
    %s198 = ssub.s32 %s21, %s28
    %s199 = sor.u32 %s197, %s198
    %p200 = scmp.eq.s32.totalorder %s199, 0
    %s202 = sadd.s32 %s201, 1
    %s203 = scalar_select %p200, %s201, %s202
    %p206 = pneg %p200
    %p207 = scmp.eq.s32.totalorder %s13, 1
    %p208 = por %p206, %p207
    %p209 = scmp.ne.s32.totalorder %s201, %s204
    %p210 = scmp.eq.s32.totalorder %s13, 0
    %p211 = por %p209, %p210
    %p212 = scmp.ne.s32.totalorder %s201, %s204
    %p213 = scmp.eq.s32.totalorder %s18, 1
    %p214 = por %p212, %p213
    %p215 = scmp.ne.s32.totalorder %s204, %s205
    %p216 = scmp.eq.s32.totalorder %s18, 0
    %p217 = por %p215, %p216
    %p218 = scmp.ne.s32.totalorder %s204, %s205
    %p219 = scmp.eq.s32.totalorder %s19, 1
    %p220 = por %p218, %p219
    %p222 = scmp.ne.s32.totalorder %s205, %s221
    %p223 = scmp.eq.s32.totalorder %s19, 0
    %p224 = por %p222, %p223
    %p225 = scmp.le.s32.totalorder 1, %s13
    %p226 = scmp.lt.s32.totalorder %s13, 3
    %p227 = pnand %p225, %p226
    %p228 = pneg %p227
    // Predicated region
    $region9: #{difnet_encoder_forward.15} parent=5 // pred_check
      _
    $region10: #{difnet_encoder_forward.15} parent=5 // pred_check_branch
      %230 = sbr.rel (%p227) target = $region12
    $region11: #{difnet_encoder_forward.15} parent=5 // pred_region
      %s231 = ssub.s32 %s13, 1
      // Predicated region
      $region13: #{difnet_encoder_forward.15} parent=11 // pred_check
        %p232 = pneg %p74
      $region14: #{difnet_encoder_forward.15} parent=11 // pred_check_branch
        %234 = sbr.rel (%p232) target = $region16
      $region15: #{difnet_encoder_forward.15} parent=11 // pred_region
        _
      $region16: #{difnet_encoder_forward.15} parent=11 // pred_fallthru
        _
      // Predicated region
      $region17: #{difnet_encoder_forward.15} parent=11 // pred_check
        %p235 = pneg %p95
      $region18: #{difnet_encoder_forward.15} parent=11 // pred_check_branch
        %237 = sbr.rel (%p235) target = $region20
      $region19: #{difnet_encoder_forward.15} parent=11 // pred_region
        _
      $region20: #{difnet_encoder_forward.15} parent=11 // pred_fallthru
        _
      // Predicated region
      $region21: #{difnet_encoder_forward.15} parent=11 // pred_check
        %p238 = pneg %p116
      $region22: #{difnet_encoder_forward.15} parent=11 // pred_check_branch
        %240 = sbr.rel (%p238) target = $region24
      $region23: #{difnet_encoder_forward.15} parent=11 // pred_region
        _
      $region24: #{difnet_encoder_forward.15} parent=11 // pred_fallthru
        _
      // Predicated region
      $region25: #{difnet_encoder_forward.15} parent=11 // pred_check
        %p241 = pneg %p137
      $region26: #{difnet_encoder_forward.15} parent=11 // pred_check_branch
        %243 = sbr.rel (%p241) target = $region28
      $region27: #{difnet_encoder_forward.15} parent=11 // pred_region
        _
      $region28: #{difnet_encoder_forward.15} parent=11 // pred_fallthru
        _
    $region12: #{difnet_encoder_forward.15} parent=5 // pred_fallthru
      _
    %p244 = scmp.lt.s32.totalorder %s13, 2
    // Predicated region
    $region29: #{difnet_encoder_forward.15} parent=5 // pred_check
      %p245 = pneg %p244
    $region30: #{difnet_encoder_forward.15} parent=5 // pred_check_branch
      %247 = sbr.rel (%p245) target = $region32
    $region31: #{difnet_encoder_forward.15} parent=5 // pred_region
      // Predicated region
      $region33: #{difnet_encoder_forward.15} parent=31 // pred_check
        %p248 = pneg %p47
      $region34: #{difnet_encoder_forward.15} parent=31 // pred_check_branch
        %250 = sbr.rel (%p248) target = $region36
      $region35: #{difnet_encoder_forward.15} parent=31 // pred_region
        %s251 = smul.u32 2, %s21
        %p252 = scmp.lt.s32.totalorder %s20, 1
        %s253 = scalar_select %p252, %s20, 1
        %p254 = scmp.lt.s32.totalorder %s251, 1
        %s255 = scalar_select %p254, %s251, 1
        %s256 = smul.addr %s253, 2
        %s257 = sadd.s32 %s255, %s256
        %s258 = smul.addr %s257, 4
        %s259 = scalar_lea.vmem %s0, %s258
        %s260 = smul.u32 2, %s21
      $region36: #{difnet_encoder_forward.15} parent=31 // pred_fallthru
        _
      // Predicated region
      $region37: #{difnet_encoder_forward.15} parent=31 // pred_check
        %p261 = pneg %p157
      $region38: #{difnet_encoder_forward.15} parent=31 // pred_check_branch
        %263 = sbr.rel (%p261) target = $region40
      $region39: #{difnet_encoder_forward.15} parent=31 // pred_region
        %p264 = scmp.lt.s32.totalorder %s20, 1
        %s265 = scalar_select %p264, %s20, 1
        %s266 = scalar_lea.vmem %s5, %s265
      $region40: #{difnet_encoder_forward.15} parent=31 // pred_fallthru
        _
      // Predicated region
      $region41: #{difnet_encoder_forward.15} parent=31 // pred_check
        %p267 = pneg %p183
      $region42: #{difnet_encoder_forward.15} parent=31 // pred_check_branch
        %269 = sbr.rel (%p267) target = $region44
      $region43: #{difnet_encoder_forward.15} parent=31 // pred_region
        %p270 = scmp.lt.s32.totalorder %s20, 1
        %s271 = scalar_select %p270, %s20, 1
        %s272 = scalar_lea.vmem %s6, %s271
      $region44: #{difnet_encoder_forward.15} parent=31 // pred_fallthru
        _
    $region32: #{difnet_encoder_forward.15} parent=5 // pred_fallthru
      _
    %p273 = scmp.le.s32.totalorder 1, %s13
    %p274 = scmp.lt.s32.totalorder %s13, 3
    %p275 = pnand %p273, %p274
    %p276 = pneg %p275
    // Predicated region
    $region45: #{difnet_encoder_forward.15} parent=5 // pred_check
      _
    $region46: #{difnet_encoder_forward.15} parent=5 // pred_check_branch
      %278 = sbr.rel (%p275) target = $region48
    $region47: #{difnet_encoder_forward.15} parent=5 // pred_region
      %s279 = ssub.s32 %s13, 1
      %s280 = smul.u32 2, %s23
      %p281 = scmp.lt.s32.totalorder %s22, 1
      %s282 = scalar_select %p281, %s22, 1
      %p283 = scmp.lt.s32.totalorder %s280, 1
      %s284 = scalar_select %p283, %s280, 1
      %s285 = smul.addr %s282, 2
      %s286 = sadd.s32 %s284, %s285
      %s287 = smul.addr %s286, 4
      %s288 = scalar_lea.vmem %s0, %s287
      %p289 = pneg %p53
      %p290 = pneg %p50
      %p291 = pneg %p74
      %p292 = pneg %p71
      %p293 = pneg %p95
      %p294 = pneg %p92
      %p295 = pneg %p116
      %p296 = pneg %p113
      %p297 = pneg %p137
      %p298 = pneg %p134
      %p299 = scmp.lt.s32.totalorder %s22, 1
      %s300 = scalar_select %p299, %s22, 1
      %s301 = scalar_lea.vmem %s5, %s300
      %p302 = pneg %p163
      %p303 = pneg %p160
      %p304 = scmp.lt.s32.totalorder %s22, 1
      %s305 = scalar_select %p304, %s22, 1
      %s306 = scalar_lea.vmem %s6, %s305
      %p307 = pneg %p189
      %p308 = pneg %p186
      %p309 = pneg %p217
      %p310 = pneg %p214
      %s311 = smul.u32 2, %s23
      %p312 = scmp.lt.s32.totalorder %s22, 1
      %s313 = scalar_select %p312, %s22, 1
      %p314 = scmp.lt.s32.totalorder %s311, 1
      %s315 = scalar_select %p314, %s311, 1
      %s316 = smul.addr %s313, 2
      %s317 = sadd.s32 %s315, %s316
      %s318 = smul.addr %s317, 4
      %s319 = scalar_lea.vmem %s7, %s318
      %s320 = smul.u32 2, %s23
      %p321 = scmp.lt.s32.totalorder %s22, 1
      %s322 = scalar_select %p321, %s22, 1
      %p323 = scmp.lt.s32.totalorder %s320, 1
      %s324 = scalar_select %p323, %s320, 1
      %s325 = smul.addr %s322, 2
      %s326 = sadd.s32 %s324, %s325
      %s327 = smul.addr %s326, 4
      %s328 = scalar_lea.vmem %s0, %s327
      %s329 = smul.u32 2, %s23
      %p330 = scmp.lt.s32.totalorder %s22, 1
      %s331 = scalar_select %p330, %s22, 1
      %s332 = scalar_lea.vmem %s5, %s331
      %p333 = scmp.lt.s32.totalorder %s22, 1
      %s334 = scalar_select %p333, %s22, 1
      %s335 = scalar_lea.vmem %s6, %s334
      %s336 = smul.u32 2, %s23
      %p337 = scmp.lt.s32.totalorder %s22, 1
      %s338 = scalar_select %p337, %s22, 1
      %p339 = scmp.lt.s32.totalorder %s336, 1
      %s340 = scalar_select %p339, %s336, 1
      %s341 = smul.addr %s338, 2
      %s342 = sadd.s32 %s340, %s341
      %s343 = smul.addr %s342, 4
      %s344 = scalar_lea.vmem %s7, %s343
      %s345 = smul.u32 2, %s23
      %v347 = vld [vmem:[%s328] sm:$0xf]
      %v348 = vld [vmem:[%s328 + $0x4] sm:$0xf]
      %v349 = vld [vmem:[%s1] sm:$0xf]
      %v350 = vld [vmem:[%s1 + $0x4] sm:$0xf]
      %v351 = vld [vmem:[%s1 + $0x8] sm:$0xf]
      %v352 = vld [vmem:[%s1 + $0xc] sm:$0xf]
      %v353 = vld [vmem:[%s2] sm:$0x1]
      %v355 = vperm.slane %v353, 0
      %v359 = vunpack.c.l.b16 %v347
      %v360 = vunpack.c.l.b16 %v348
      %v361 = vpack.c.b16 %v360, %v359
      %v366 = vunpack.c.l.b16 %v349
      %v367 = vunpack.c.l.b16 %v350
      %v368 = vunpack.c.l.b16 %v351
      %v369 = vunpack.c.l.b16 %v352
      %v370 = vpack.c.b16 %v367, %v366
      %v371 = vpack.c.b16 %v369, %v368
      %vm374 = vcmask 261120
      %v376 = vsel %vm374, %v361, 0
      %378 = vmatpush.bf16.msra.mxu0 0
      %379 = vmatpush.bf16.msra.mxu0 0
      %380 = vmatpush.bf16.msra.mxu0 0
      %381 = vmatpush.bf16.msra.mxu0 0
      %382 = vmatpush.bf16.msra.mxu0 0
      %383 = vmatpush.bf16.msra.mxu0 0
      %384 = vmatpush.bf16.msra.mxu0 %v371
      %385 = vmatpush.bf16.msra.mxu0 %v370
      %386 = vmatmul.bf16.gmra.mxu0 %v376
      %v387 = vpop.f32.mrf.mxu0
      %v388 = vadd.f32 %v355, %v387
      %v389 = vpop.f32.mrf.mxu0
      %v390 = vadd.f32 %v355, %v389
      %391 = vdwg.mxu0
      %v392 = vmax.f32 %v388, 0.0
      %v393 = vmax.f32 %v390, 0.0
      %v394 = vpack.c.bf16 %v393, %v392
      %v395 = vld [vmem:[%s3] sm:$0xf]
      %v396 = vld [vmem:[%s3 + $0x4] sm:$0xf]
      %v397 = vld [vmem:[%s3 + $0x8] sm:$0xf]
      %v398 = vld [vmem:[%s3 + $0xc] sm:$0xf]
      %v399 = vld [vmem:[%s3 + $0x10] sm:$0xf]
      %v400 = vld [vmem:[%s3 + $0x14] sm:$0xf]
      %v401 = vld [vmem:[%s3 + $0x18] sm:$0xf]
      %v402 = vld [vmem:[%s3 + $0x1c] sm:$0xf]
      %v403 = vld [vmem:[%s4] sm:$0x1]
      %v405 = vperm.slane %v403, 0
      %v415 = vunpack.c.l.b16 %v395
      %v416 = vunpack.c.l.b16 %v396
      %v417 = vunpack.c.l.b16 %v397
      %v418 = vunpack.c.l.b16 %v398
      %v419 = vunpack.c.l.b16 %v399
      %v420 = vunpack.c.l.b16 %v400
      %v421 = vunpack.c.l.b16 %v401
      %v422 = vunpack.c.l.b16 %v402
      %v423 = vpack.c.b16 %v416, %v415
      %v424 = vpack.c.b16 %v418, %v417
      %v425 = vpack.c.b16 %v420, %v419
      %v426 = vpack.c.b16 %v422, %v421
      %vm431 = vcmask 523264
      %v433 = vsel %vm431, %v394, 0
      %435 = vmatpush.bf16.msra.mxu0 0
      %436 = vmatpush.bf16.msra.mxu0 0
      %437 = vmatpush.bf16.msra.mxu0 0
      %438 = vmatpush.bf16.msra.mxu0 0
      %439 = vmatpush.bf16.msra.mxu0 %v426
      %440 = vmatpush.bf16.msra.mxu0 %v425
      %441 = vmatpush.bf16.msra.mxu0 %v424
      %442 = vmatpush.bf16.msra.mxu0 %v423
      %443 = vmatmul.bf16.gmra.mxu0 %v433
      %v444 = vpop.f32.mrf.mxu0
      %v445 = vadd.f32 %v405, %v444
      %v446 = vpop.f32.mrf.mxu0
      %v447 = vadd.f32 %v405, %v446
      %448 = vdwg.mxu0
      %v449 = vunpack.c.l.bf16 %v347
      %v450 = vunpack.c.l.bf16 %v348
      %v451 = vadd.f32 %v449, %v445
      %v452 = vadd.f32 %v450, %v447
      %v453 = vsel %vm374, %v451, 0.0
      %454 = vadd.xlane.f32.xlu0 %v453
      %v455 = vpop.xlane.xlu0 %454
      %v456 = vsel %vm374, %v452, 0.0
      %457 = vadd.xlane.f32.xlu0 %v456
      %v458 = vpop.xlane.xlu0 %457
      %v459 = vrcp.pop 32.0
      %v460 = vmul.f32 32.0, %v459
      %v461 = vsub.f32 1.0, %v460
      %v462 = vmul.f32 %v459, %v461
      %v463 = vadd.f32 %v459, %v462
      %vm464 = vweird.f32 %v459
      %v465 = vsel %vm464, %v459, %v463
      %v466 = vmul.f32 %v455, %v465
      %v467 = vmul.f32 %v458, %v465
      %v468 = vsub.f32 %v451, %v466
      %v469 = vsub.f32 %v452, %v467
      %v470 = vmul.f32 %v468, %v468
      %v471 = vmul.f32 %v469, %v469
      %v472 = vsel %vm374, %v470, 0.0
      %473 = vadd.xlane.f32.xlu0 %v472
      %v474 = vpop.xlane.xlu0 %473
      %v475 = vsel %vm374, %v471, 0.0
      %476 = vadd.xlane.f32.xlu0 %v475
      %v477 = vpop.xlane.xlu0 %476
      %v478 = vmul.f32 %v474, %v465
      %v479 = vmul.f32 %v477, %v465
      %v480 = vadd.f32 %v478, 1e-05
      %v481 = vadd.f32 %v479, 1e-05
      %v482 = vrsqrt.pop %v480
      %v483 = vmul.f32 %v482, %v480
      %v484 = vmul.f32 %v483, %v482
      %v485 = vmul.f32 0.5, %v484
      %v486 = vsub.f32 1.5, %v485
      %v487 = vmul.f32 %v482, %v486
      %vm488 = vweird.f32 %v480
      %vm489 = vweird.f32 %v482
      %vm490 = vmor %vm488, %vm489
      %v491 = vsel %vm490, %v482, %v487
      %v492 = vrsqrt.pop %v481
      %v493 = vmul.f32 %v492, %v481
      %v494 = vmul.f32 %v493, %v492
      %v495 = vmul.f32 0.5, %v494
      %v496 = vsub.f32 1.5, %v495
      %v497 = vmul.f32 %v492, %v496
      %vm498 = vweird.f32 %v481
      %vm499 = vweird.f32 %v492
      %vm500 = vmor %vm498, %vm499
      %v501 = vsel %vm500, %v492, %v497
      %v502 = vmul.f32 %v468, %v491
      %v503 = vmul.f32 %v469, %v501
      %v504 = vld [vmem:[%s332] sm:$0x1]
      %v506 = vperm.slane %v504, 0
      %v508 = vmul.f32 %v502, %v506
      %v509 = vmul.f32 %v503, %v506
      %v510 = vld [vmem:[%s335] sm:$0x1]
      %v512 = vperm.slane %v510, 0
      %v514 = vadd.f32 %v508, %v512
      %v515 = vadd.f32 %v509, %v512
      %v516 = vpack.c.bf16 %v514, %v514
      %v517 = vpack.c.bf16 %v515, %v515
      %vm518 = vcmask 257024
      %519 = vst.msk [vmem:[%s344] sm:$0xf] %vm518, %v516
      %520 = vst.msk [vmem:[%s344 + $0x4] sm:$0xf] %vm518, %v517
      %s521 = smul.u32 2, %s23
      %p522 = scmp.lt.s32.totalorder %s22, 1
      %s523 = scalar_select %p522, %s22, 1
      %p524 = scmp.lt.s32.totalorder %s521, 1
      %s525 = scalar_select %p524, %s521, 1
      %s526 = smul.addr %s523, 2
      %s527 = sadd.s32 %s525, %s526
      %s528 = smul.addr %s527, 4
      %s529 = scalar_lea.vmem %s7, %s528
      // Predicated region
      $region49: #{difnet_encoder_forward.15} parent=47 // pred_check
        %p530 = pneg %p214
      $region50: #{difnet_encoder_forward.15} parent=47 // pred_check_branch
        %532 = sbr.rel (%p530) target = $region52
      $region51: #{difnet_encoder_forward.15} parent=47 // pred_region
        %s533 = smul.u32 2, %s23
      $region52: #{difnet_encoder_forward.15} parent=47 // pred_fallthru
        _
    $region48: #{difnet_encoder_forward.15} parent=5 // pred_fallthru
      _
    %p534 = scmp.le.s32.totalorder 2, %s13
    // Predicated region
    $region53: #{difnet_encoder_forward.15} parent=5 // pred_check
      %p535 = pneg %p534
    $region54: #{difnet_encoder_forward.15} parent=5 // pred_check_branch
      %537 = sbr.rel (%p535) target = $region56
    $region55: #{difnet_encoder_forward.15} parent=5 // pred_region
      %s538 = ssub.s32 %s13, 2
      // Predicated region
      $region57: #{difnet_encoder_forward.15} parent=55 // pred_check
        %p539 = pneg %p220
      $region58: #{difnet_encoder_forward.15} parent=55 // pred_check_branch
        %541 = sbr.rel (%p539) target = $region60
      $region59: #{difnet_encoder_forward.15} parent=55 // pred_region
        %s542 = smul.u32 2, %s25
        %p543 = scmp.lt.s32.totalorder %s24, 1
        %s544 = scalar_select %p543, %s24, 1
        %p545 = scmp.lt.s32.totalorder %s542, 1
        %s546 = scalar_select %p545, %s542, 1
        %s547 = smul.addr %s544, 2
        %s548 = sadd.s32 %s546, %s547
        %s549 = smul.addr %s548, 4
        %s550 = scalar_lea.vmem %s7, %s549
      $region60: #{difnet_encoder_forward.15} parent=55 // pred_fallthru
        _
    $region56: #{difnet_encoder_forward.15} parent=5 // pred_fallthru
      _
  $region6: #{difnet_encoder_forward.15} parent=0 // loop_footer
    %s17 = sadd.s32 1, %s13
  $region7: #{difnet_encoder_forward.15} parent=0 // loop_footer_branch
    %12 = sbr.rel target = $region3
  $region8: #{difnet_encoder_forward.15} parent=0 // loop_exit
    _

// kernel: difnet_encoder_forward.20
$region0: #{difnet_encoder_forward.20}
  #allocation0 [shape = 'u32[]', space=smem, size = 0x4, offset = 0x4, fixed_abs, tag = 'smem constant byte address 0x4 - core index']
  #allocation1 [shape = 'u32[72,128]{1,0:T(1,128)}', space=vmem, size = 0x9000, scoped, tag = 'internal scratch']
  %s0 = inlined_call_operand.vmem [shape: bf16[16,32], index: 0, kind: input, shape index: {}]
  %s1 = inlined_call_operand.vmem [shape: bf16[32,96], index: 1, kind: input, shape index: {}]
  %s2 = inlined_call_operand.vmem [shape: f32[1,96], index: 2, kind: input, shape index: {}]
  %s3 = inlined_call_operand.vmem [shape: bf16[16,32], index: 3, kind: output, shape index: {0}]
  %s4 = inlined_call_operand.vmem [shape: bf16[16,32], index: 4, kind: output, shape index: {1}]
  %s5 = inlined_call_operand.vmem [shape: bf16[16,32], index: 5, kind: output, shape index: {2}]
  %6 = xla_tuple %s3, %s4, %s5
  %s7 = sld [smem:[#allocation0]]
  $region38: #{difnet_encoder_forward.20} parent=0
    _
  %s9 = ssub.s32 1, %s7
  %s10 = scalar_select 0, %s9, %s7
  // Predicated region
  $region2: #{difnet_encoder_forward.20} parent=0 // pred_check
    _
  $region3: #{difnet_encoder_forward.20} parent=0 // pred_check_branch
    %12 = sbr.rel (0) target = $region5
  $region4: #{difnet_encoder_forward.20} parent=0 // pred_region
    _
  $region5: #{difnet_encoder_forward.20} parent=0 // pred_fallthru
    _
  // Predicated region
  $region6: #{difnet_encoder_forward.20} parent=0 // pred_check
    _
  $region7: #{difnet_encoder_forward.20} parent=0 // pred_check_branch
    %14 = sbr.rel (0) target = $region9
  $region8: #{difnet_encoder_forward.20} parent=0 // pred_region
    _
  $region9: #{difnet_encoder_forward.20} parent=0 // pred_fallthru
    _
  // Predicated region
  $region10: #{difnet_encoder_forward.20} parent=0 // pred_check
    _
  $region11: #{difnet_encoder_forward.20} parent=0 // pred_check_branch
    %16 = sbr.rel (0) target = $region13
  $region12: #{difnet_encoder_forward.20} parent=0 // pred_region
    _
  $region13: #{difnet_encoder_forward.20} parent=0 // pred_fallthru
    _
  %v18 = vld [vmem:[%s0] sm:$0xf]
  %v19 = vld [vmem:[%s0 + $0x4] sm:$0xf]
  %v20 = vld [vmem:[%s1] sm:$0xf]
  %v21 = vld [vmem:[%s1 + $0x4] sm:$0xf]
  %v22 = vld [vmem:[%s1 + $0x8] sm:$0xf]
  %v23 = vld [vmem:[%s1 + $0xc] sm:$0xf]
  %v24 = vld [vmem:[%s2] sm:$0x1]
  %v26 = vperm.slane %v24, 0
  %v30 = vunpack.c.l.b16 %v18
  %v31 = vunpack.c.l.b16 %v19
  %v32 = vpack.c.b16 %v31, %v30
  %v37 = vunpack.c.l.b16 %v20
  %v38 = vunpack.c.l.b16 %v21
  %v39 = vunpack.c.l.b16 %v22
  %v40 = vunpack.c.l.b16 %v23
  %v41 = vpack.c.b16 %v38, %v37
  %v42 = vpack.c.b16 %v40, %v39
  %vm45 = vcmask 261120
  %v47 = vsel %vm45, %v32, 0
  %49 = vmatpush.bf16.msra.mxu0 0
  %50 = vmatpush.bf16.msra.mxu0 0
  %51 = vmatpush.bf16.msra.mxu0 0
  %52 = vmatpush.bf16.msra.mxu0 0
  %53 = vmatpush.bf16.msra.mxu0 0
  %54 = vmatpush.bf16.msra.mxu0 0
  %55 = vmatpush.bf16.msra.mxu0 %v42
  %56 = vmatpush.bf16.msra.mxu0 %v41
  %57 = vmatmul.bf16.gmra.mxu0 %v47
  %v58 = vpop.f32.mrf.mxu0
  %v59 = vadd.f32 %v26, %v58
  %v60 = vpop.f32.mrf.mxu0
  %v61 = vadd.f32 %v26, %v60
  %62 = vdwg.mxu0
  %v63 = vpack.c.bf16 %v59, %v59
  %v64 = vpack.c.bf16 %v61, %v61
  %vm65 = vcmask 257024
  %66 = vst.msk [vmem:[%s3] sm:$0xf] %vm65, %v63
  %67 = vst.msk [vmem:[%s3 + $0x4] sm:$0xf] %vm65, %v64
  %70 = vrot.lane.b32.xlu0 %v63, 96
  %v71 = vpop.permute.xlu0 %70
  %72 = vrot.lane.b32.xlu0 %v64, 96
  %v73 = vpop.permute.xlu0 %72
  %76 = vst.msk [vmem:[%s4] sm:$0xf] %vm65, %v71
  %77 = vst.msk [vmem:[%s4 + $0x4] sm:$0xf] %vm65, %v73
  %78 = vrot.lane.b32.xlu0 %v63, 64
  %v79 = vpop.permute.xlu0 %78
  %80 = vrot.lane.b32.xlu0 %v64, 64
  %v81 = vpop.permute.xlu0 %80
  %84 = vst.msk [vmem:[%s5] sm:$0xf] %vm65, %v79
  %85 = vst.msk [vmem:[%s5 + $0x4] sm:$0xf] %vm65, %v81
  // Predicated region
  $region14: #{difnet_encoder_forward.20} parent=0 // pred_check
    _
  $region15: #{difnet_encoder_forward.20} parent=0 // pred_check_branch
    %87 = sbr.rel (0) target = $region17
  $region16: #{difnet_encoder_forward.20} parent=0 // pred_region
    _
  $region17: #{difnet_encoder_forward.20} parent=0 // pred_fallthru
    _
  // Predicated region
  $region18: #{difnet_encoder_forward.20} parent=0 // pred_check
    _
  $region19: #{difnet_encoder_forward.20} parent=0 // pred_check_branch
    %89 = sbr.rel (0) target = $region21
  $region20: #{difnet_encoder_forward.20} parent=0 // pred_region
    _
  $region21: #{difnet_encoder_forward.20} parent=0 // pred_fallthru
    _
  // Predicated region
  $region22: #{difnet_encoder_forward.20} parent=0 // pred_check
    _
  $region23: #{difnet_encoder_forward.20} parent=0 // pred_check_branch
    %91 = sbr.rel (0) target = $region25
  $region24: #{difnet_encoder_forward.20} parent=0 // pred_region
    _
  $region25: #{difnet_encoder_forward.20} parent=0 // pred_fallthru
    _
  // Predicated region
  $region26: #{difnet_encoder_forward.20} parent=0 // pred_check
    _
  $region27: #{difnet_encoder_forward.20} parent=0 // pred_check_branch
    %93 = sbr.rel (0) target = $region29
  $region28: #{difnet_encoder_forward.20} parent=0 // pred_region
    _
  $region29: #{difnet_encoder_forward.20} parent=0 // pred_fallthru
    _
  // Predicated region
  $region30: #{difnet_encoder_forward.20} parent=0 // pred_check
    _
  $region31: #{difnet_encoder_forward.20} parent=0 // pred_check_branch
    %95 = sbr.rel (0) target = $region33
  $region32: #{difnet_encoder_forward.20} parent=0 // pred_region
    _
  $region33: #{difnet_encoder_forward.20} parent=0 // pred_fallthru
    _
  // Predicated region
  $region34: #{difnet_encoder_forward.20} parent=0 // pred_check
    _
  $region35: #{difnet_encoder_forward.20} parent=0 // pred_check_branch
    %97 = sbr.rel (0) target = $region37
  $region36: #{difnet_encoder_forward.20} parent=0 // pred_region
    _
  $region37: #{difnet_encoder_forward.20} parent=0 // pred_fallthru
    _

// kernel: difnet_encoder_forward.22
$region0: #{difnet_encoder_forward.22}
  #allocation0 [shape = 'u32[]', space=smem, size = 0x4, offset = 0x4, fixed_abs, tag = 'smem constant byte address 0x4 - core index']
  #allocation1 [shape = 'u32[72,128]{1,0:T(1,128)}', space=vmem, size = 0x9000, scoped, tag = 'internal scratch']
  %s0 = inlined_call_operand.vmem [shape: bf16[1,16,32], index: 0, kind: input, shape index: {}]
  %s1 = inlined_call_operand.vmem [shape: bf16[1,16,32], index: 1, kind: input, shape index: {}]
  %s2 = inlined_call_operand.vmem [shape: bf16[32,32], index: 2, kind: input, shape index: {}]
  %s3 = inlined_call_operand.vmem [shape: f32[1,32], index: 3, kind: input, shape index: {}]
  %s4 = inlined_call_operand.vmem [shape: f32[1,1,32], index: 4, kind: input, shape index: {}]
  %s5 = inlined_call_operand.vmem [shape: f32[1,1,32], index: 5, kind: input, shape index: {}]
  %s6 = inlined_call_operand.vmem [shape: bf16[1,16,32], index: 6, kind: output, shape index: {}]
  %s7 = sld [smem:[#allocation0]]
  $region34: #{difnet_encoder_forward.22} parent=0
    _
  %s9 = ssub.s32 1, %s7
  %s10 = scalar_select 0, %s9, %s7
  // Predicated region
  $region2: #{difnet_encoder_forward.22} parent=0 // pred_check
    _
  $region3: #{difnet_encoder_forward.22} parent=0 // pred_check_branch
    %12 = sbr.rel (0) target = $region5
  $region4: #{difnet_encoder_forward.22} parent=0 // pred_region
    _
  $region5: #{difnet_encoder_forward.22} parent=0 // pred_fallthru
    _
  // Predicated region
  $region6: #{difnet_encoder_forward.22} parent=0 // pred_check
    _
  $region7: #{difnet_encoder_forward.22} parent=0 // pred_check_branch
    %14 = sbr.rel (0) target = $region9
  $region8: #{difnet_encoder_forward.22} parent=0 // pred_region
    _
  $region9: #{difnet_encoder_forward.22} parent=0 // pred_fallthru
    _
  // Predicated region
  $region10: #{difnet_encoder_forward.22} parent=0 // pred_check
    _
  $region11: #{difnet_encoder_forward.22} parent=0 // pred_check_branch
    %16 = sbr.rel (0) target = $region13
  $region12: #{difnet_encoder_forward.22} parent=0 // pred_region
    _
  $region13: #{difnet_encoder_forward.22} parent=0 // pred_fallthru
    _
  // Predicated region
  $region14: #{difnet_encoder_forward.22} parent=0 // pred_check
    _
  $region15: #{difnet_encoder_forward.22} parent=0 // pred_check_branch
    %18 = sbr.rel (0) target = $region17
  $region16: #{difnet_encoder_forward.22} parent=0 // pred_region
    _
  $region17: #{difnet_encoder_forward.22} parent=0 // pred_fallthru
    _
  // Predicated region
  $region18: #{difnet_encoder_forward.22} parent=0 // pred_check
    _
  $region19: #{difnet_encoder_forward.22} parent=0 // pred_check_branch
    %20 = sbr.rel (0) target = $region21
  $region20: #{difnet_encoder_forward.22} parent=0 // pred_region
    _
  $region21: #{difnet_encoder_forward.22} parent=0 // pred_fallthru
    _
  // Predicated region
  $region22: #{difnet_encoder_forward.22} parent=0 // pred_check
    _
  $region23: #{difnet_encoder_forward.22} parent=0 // pred_check_branch
    %22 = sbr.rel (0) target = $region25
  $region24: #{difnet_encoder_forward.22} parent=0 // pred_region
    _
  $region25: #{difnet_encoder_forward.22} parent=0 // pred_fallthru
    _
  %v24 = vld [vmem:[%s0] sm:$0xf]
  %v25 = vld [vmem:[%s0 + $0x4] sm:$0xf]
  %v26 = vld [vmem:[%s2] sm:$0xf]
  %v27 = vld [vmem:[%s2 + $0x4] sm:$0xf]
  %v28 = vld [vmem:[%s2 + $0x8] sm:$0xf]
  %v29 = vld [vmem:[%s2 + $0xc] sm:$0xf]
  %v30 = vld [vmem:[%s3] sm:$0x1]
  %v32 = vperm.slane %v30, 0
  %v36 = vunpack.c.l.b16 %v24
  %v37 = vunpack.c.l.b16 %v25
  %v38 = vpack.c.b16 %v37, %v36
  %v43 = vunpack.c.l.b16 %v26
  %v44 = vunpack.c.l.b16 %v27
  %v45 = vunpack.c.l.b16 %v28
  %v46 = vunpack.c.l.b16 %v29
  %v47 = vpack.c.b16 %v44, %v43
  %v48 = vpack.c.b16 %v46, %v45
  %vm51 = vcmask 261120
  %v53 = vsel %vm51, %v38, 0
  %55 = vmatpush.bf16.msra.mxu0 0
  %56 = vmatpush.bf16.msra.mxu0 0
  %57 = vmatpush.bf16.msra.mxu0 0
  %58 = vmatpush.bf16.msra.mxu0 0
  %59 = vmatpush.bf16.msra.mxu0 0
  %60 = vmatpush.bf16.msra.mxu0 0
  %61 = vmatpush.bf16.msra.mxu0 %v48
  %62 = vmatpush.bf16.msra.mxu0 %v47
  %63 = vmatmul.bf16.gmra.mxu0 %v53
  %v64 = vpop.f32.mrf.mxu0
  %v65 = vadd.f32 %v32, %v64
  %v66 = vpop.f32.mrf.mxu0
  %v67 = vadd.f32 %v32, %v66
  %68 = vdwg.mxu0
  %v69 = vld [vmem:[%s1] sm:$0xf]
  %v70 = vld [vmem:[%s1 + $0x4] sm:$0xf]
  %v71 = vunpack.c.l.bf16 %v69
  %v72 = vunpack.c.l.bf16 %v70
  %v73 = vadd.f32 %v71, %v65
  %v74 = vadd.f32 %v72, %v67
  %v75 = vsel %vm51, %v73, 0.0
  %76 = vadd.xlane.f32.xlu0 %v75
  %v77 = vpop.xlane.xlu0 %76
  %v78 = vsel %vm51, %v74, 0.0
  %79 = vadd.xlane.f32.xlu0 %v78
  %v80 = vpop.xlane.xlu0 %79
  %v81 = vrcp.pop 32.0
  %v82 = vmul.f32 32.0, %v81
  %v83 = vsub.f32 1.0, %v82
  %v84 = vmul.f32 %v81, %v83
  %v85 = vadd.f32 %v81, %v84
  %vm86 = vweird.f32 %v81
  %v87 = vsel %vm86, %v81, %v85
  %v88 = vmul.f32 %v77, %v87
  %v89 = vmul.f32 %v80, %v87
  %v90 = vsub.f32 %v73, %v88
  %v91 = vsub.f32 %v74, %v89
  %v92 = vmul.f32 %v90, %v90
  %v93 = vmul.f32 %v91, %v91
  %v94 = vsel %vm51, %v92, 0.0
  %95 = vadd.xlane.f32.xlu0 %v94
  %v96 = vpop.xlane.xlu0 %95
  %v97 = vsel %vm51, %v93, 0.0
  %98 = vadd.xlane.f32.xlu0 %v97
  %v99 = vpop.xlane.xlu0 %98
  %v100 = vmul.f32 %v96, %v87
  %v101 = vmul.f32 %v99, %v87
  %v102 = vadd.f32 %v100, 1e-05
  %v103 = vadd.f32 %v101, 1e-05
  %v104 = vrsqrt.pop %v102
  %v105 = vmul.f32 %v104, %v102
  %v106 = vmul.f32 %v105, %v104
  %v107 = vmul.f32 0.5, %v106
  %v108 = vsub.f32 1.5, %v107
  %v109 = vmul.f32 %v104, %v108
  %vm110 = vweird.f32 %v102
  %vm111 = vweird.f32 %v104
  %vm112 = vmor %vm110, %vm111
  %v113 = vsel %vm112, %v104, %v109
  %v114 = vrsqrt.pop %v103
  %v115 = vmul.f32 %v114, %v103
  %v116 = vmul.f32 %v115, %v114
  %v117 = vmul.f32 0.5, %v116
  %v118 = vsub.f32 1.5, %v117
  %v119 = vmul.f32 %v114, %v118
  %vm120 = vweird.f32 %v103
  %vm121 = vweird.f32 %v114
  %vm122 = vmor %vm120, %vm121
  %v123 = vsel %vm122, %v114, %v119
  %v124 = vmul.f32 %v90, %v113
  %v125 = vmul.f32 %v91, %v123
  %v126 = vld [vmem:[%s4] sm:$0x1]
  %v128 = vperm.slane %v126, 0
  %v130 = vmul.f32 %v124, %v128
  %v131 = vmul.f32 %v125, %v128
  %v132 = vld [vmem:[%s5] sm:$0x1]
  %v134 = vperm.slane %v132, 0
  %v136 = vadd.f32 %v130, %v134
  %v137 = vadd.f32 %v131, %v134
  %v138 = vpack.c.bf16 %v136, %v136
  %v139 = vpack.c.bf16 %v137, %v137
  %vm140 = vcmask 257024
  %141 = vst.msk [vmem:[%s6] sm:$0xf] %vm140, %v138
  %142 = vst.msk [vmem:[%s6 + $0x4] sm:$0xf] %vm140, %v139
  // Predicated region
  $region26: #{difnet_encoder_forward.22} parent=0 // pred_check
    _
  $region27: #{difnet_encoder_forward.22} parent=0 // pred_check_branch
    %144 = sbr.rel (0) target = $region29
  $region28: #{difnet_encoder_forward.22} parent=0 // pred_region
    _
  $region29: #{difnet_encoder_forward.22} parent=0 // pred_fallthru
    _
  // Predicated region
  $region30: #{difnet_encoder_forward.22} parent=0 // pred_check
    _
  $region31: #{difnet_encoder_forward.22} parent=0 // pred_check_branch
    %146 = sbr.rel (0) target = $region33
  $region32: #{difnet_encoder_forward.22} parent=0 // pred_region
    _
  $region33: #{difnet_encoder_forward.22} parent=0 // pred_fallthru
    _

// kernel: difnet_encoder_forward.21
$region0: #{difnet_encoder_forward.21}
  #allocation0 [shape = 'u32[]', space=smem, size = 0x4, offset = 0x4, fixed_abs, tag = 'smem constant byte address 0x4 - core index']
  #allocation1 [shape = 'u32[72,128]{1,0:T(1,128)}', space=vmem, size = 0x9000, scoped, tag = 'internal scratch']
  %s0 = inlined_call_operand.vmem [shape: bf16[2,8,32], index: 0, kind: input, shape index: {}]
  %s1 = inlined_call_operand.vmem [shape: bf16[2,8,32], index: 1, kind: input, shape index: {}]
  %s2 = inlined_call_operand.vmem [shape: bf16[2,8,32], index: 2, kind: input, shape index: {}]
  %s3 = inlined_call_operand.vmem [shape: f32[2,1,8], index: 3, kind: input, shape index: {}]
  %s4 = inlined_call_operand.vmem [shape: bf16[2,8,32], index: 4, kind: output, shape index: {}]
  %s5 = sld [smem:[#allocation0]]
  $region49: #{difnet_encoder_forward.21} parent=0
    _
  %s7 = ssub.s32 1, %s5
  %s8 = scalar_select 0, %s7, %s5
  loop: start=0, step=1, limit=4
  $region2: #{difnet_encoder_forward.21} parent=0 // loop_pre_header
    _
  $region3: #{difnet_encoder_forward.21} parent=0 // loop_header
    %s10 = sphi 0, %s14
    %p11 = scmp.ge.s32.totalorder %s10, 4
    %s17 = sphi 0, %s29
    %s18 = sphi 0, %s25
    %s19 = sphi 0, %s17
    %s20 = sphi 0, %s18
    %s21 = sphi 0, %s19
    %s22 = sphi 0, %s20
    %s34 = sphi 0, %s36
    %s37 = sphi 0, %s34
    %s38 = sphi 0, %s37
    %s54 = sphi 0, %s38
    %s60 = sphi 0, %s62
    %s63 = sphi 0, %s60
    %s64 = sphi 0, %s63
    %s80 = sphi 0, %s64
    %s86 = sphi 0, %s88
    %s89 = sphi 0, %s86
    %s90 = sphi 0, %s89
    %s106 = sphi 0, %s90
    %s112 = sphi 0, %s114
    %s115 = sphi 0, %s112
    %s116 = sphi 0, %s115
    %s132 = sphi 0, %s116
    %s140 = sphi 0, %s142
    %s143 = sphi 0, %s140
    %s144 = sphi 0, %s143
    %s160 = sphi 0, %s144
  $region4: #{difnet_encoder_forward.21} parent=0 // loop_header_branch
    %13 = sbr.rel (%p11) target = $region8
  $region5: #{difnet_encoder_forward.21} parent=0 // loop_body
    %s15 = ssub.s32 %s10, 1
    %s16 = ssub.s32 %s10, 2
    %s23 = sadd.s32 1, %s18
    %p24 = scmp.ge.s32.totalorder %s23, 1
    %s25 = scalar_select %p24, 0, %s23
    %s26 = sadd.s32 1, %s17
    %s27 = scalar_select %p24, %s26, %s17
    %p28 = scmp.ge.s32.totalorder %s27, 2
    %s29 = scalar_select %p28, 0, %s27
    %s30 = ssub.s32 %s17, %s29
    %s31 = ssub.s32 %s18, %s25
    %s32 = sor.u32 %s30, %s31
    %p33 = scmp.eq.s32.totalorder %s32, 0
    %s35 = sadd.s32 %s34, 1
    %s36 = scalar_select %p33, %s34, %s35
    %p39 = pneg %p33
    %p40 = scmp.eq.s32.totalorder %s10, 1
    %p41 = por %p39, %p40
    %p42 = scmp.ne.s32.totalorder %s34, %s37
    %p43 = scmp.eq.s32.totalorder %s10, 0
    %p44 = por %p42, %p43
    %p45 = scmp.ne.s32.totalorder %s34, %s37
    %p46 = scmp.eq.s32.totalorder %s15, 1
    %p47 = por %p45, %p46
    %p48 = scmp.ne.s32.totalorder %s37, %s38
    %p49 = scmp.eq.s32.totalorder %s15, 0
    %p50 = por %p48, %p49
    %p51 = scmp.ne.s32.totalorder %s37, %s38
    %p52 = scmp.eq.s32.totalorder %s16, 1
    %p53 = por %p51, %p52
    %p55 = scmp.ne.s32.totalorder %s38, %s54
    %p56 = scmp.eq.s32.totalorder %s16, 0
    %p57 = por %p55, %p56
    %s58 = ssub.s32 %s17, %s29
    %p59 = scmp.eq.s32.totalorder %s58, 0
    %s61 = sadd.s32 %s60, 1
    %s62 = scalar_select %p59, %s60, %s61
    %p65 = pneg %p59
    %p66 = scmp.eq.s32.totalorder %s10, 1
    %p67 = por %p65, %p66
    %p68 = scmp.ne.s32.totalorder %s60, %s63
    %p69 = scmp.eq.s32.totalorder %s10, 0
    %p70 = por %p68, %p69
    %p71 = scmp.ne.s32.totalorder %s60, %s63
    %p72 = scmp.eq.s32.totalorder %s15, 1
    %p73 = por %p71, %p72
    %p74 = scmp.ne.s32.totalorder %s63, %s64
    %p75 = scmp.eq.s32.totalorder %s15, 0
    %p76 = por %p74, %p75
    %p77 = scmp.ne.s32.totalorder %s63, %s64
    %p78 = scmp.eq.s32.totalorder %s16, 1
    %p79 = por %p77, %p78
    %p81 = scmp.ne.s32.totalorder %s64, %s80
    %p82 = scmp.eq.s32.totalorder %s16, 0
    %p83 = por %p81, %p82
    %s84 = ssub.s32 %s17, %s29
    %p85 = scmp.eq.s32.totalorder %s84, 0
    %s87 = sadd.s32 %s86, 1
    %s88 = scalar_select %p85, %s86, %s87
    %p91 = pneg %p85
    %p92 = scmp.eq.s32.totalorder %s10, 1
    %p93 = por %p91, %p92
    %p94 = scmp.ne.s32.totalorder %s86, %s89
    %p95 = scmp.eq.s32.totalorder %s10, 0
    %p96 = por %p94, %p95
    %p97 = scmp.ne.s32.totalorder %s86, %s89
    %p98 = scmp.eq.s32.totalorder %s15, 1
    %p99 = por %p97, %p98
    %p100 = scmp.ne.s32.totalorder %s89, %s90
    %p101 = scmp.eq.s32.totalorder %s15, 0
    %p102 = por %p100, %p101
    %p103 = scmp.ne.s32.totalorder %s89, %s90
    %p104 = scmp.eq.s32.totalorder %s16, 1
    %p105 = por %p103, %p104
    %p107 = scmp.ne.s32.totalorder %s90, %s106
    %p108 = scmp.eq.s32.totalorder %s16, 0
    %p109 = por %p107, %p108
    %s110 = ssub.s32 %s17, %s29
    %p111 = scmp.eq.s32.totalorder %s110, 0
    %s113 = sadd.s32 %s112, 1
    %s114 = scalar_select %p111, %s112, %s113
    %p117 = pneg %p111
    %p118 = scmp.eq.s32.totalorder %s10, 1
    %p119 = por %p117, %p118
    %p120 = scmp.ne.s32.totalorder %s112, %s115
    %p121 = scmp.eq.s32.totalorder %s10, 0
    %p122 = por %p120, %p121
    %p123 = scmp.ne.s32.totalorder %s112, %s115
    %p124 = scmp.eq.s32.totalorder %s15, 1
    %p125 = por %p123, %p124
    %p126 = scmp.ne.s32.totalorder %s115, %s116
    %p127 = scmp.eq.s32.totalorder %s15, 0
    %p128 = por %p126, %p127
    %p129 = scmp.ne.s32.totalorder %s115, %s116
    %p130 = scmp.eq.s32.totalorder %s16, 1
    %p131 = por %p129, %p130
    %p133 = scmp.ne.s32.totalorder %s116, %s132
    %p134 = scmp.eq.s32.totalorder %s16, 0
    %p135 = por %p133, %p134
    %s136 = ssub.s32 %s17, %s29
    %s137 = ssub.s32 %s18, %s25
    %s138 = sor.u32 %s136, %s137
    %p139 = scmp.eq.s32.totalorder %s138, 0
    %s141 = sadd.s32 %s140, 1
    %s142 = scalar_select %p139, %s140, %s141
    %p145 = pneg %p139
    %p146 = scmp.eq.s32.totalorder %s10, 1
    %p147 = por %p145, %p146
    %p148 = scmp.ne.s32.totalorder %s140, %s143
    %p149 = scmp.eq.s32.totalorder %s10, 0
    %p150 = por %p148, %p149
    %p151 = scmp.ne.s32.totalorder %s140, %s143
    %p152 = scmp.eq.s32.totalorder %s15, 1
    %p153 = por %p151, %p152
    %p154 = scmp.ne.s32.totalorder %s143, %s144
    %p155 = scmp.eq.s32.totalorder %s15, 0
    %p156 = por %p154, %p155
    %p157 = scmp.ne.s32.totalorder %s143, %s144
    %p158 = scmp.eq.s32.totalorder %s16, 1
    %p159 = por %p157, %p158
    %p161 = scmp.ne.s32.totalorder %s144, %s160
    %p162 = scmp.eq.s32.totalorder %s16, 0
    %p163 = por %p161, %p162
    %p164 = scmp.le.s32.totalorder 1, %s10
    %p165 = scmp.lt.s32.totalorder %s10, 3
    %p166 = pnand %p164, %p165
    %p167 = pneg %p166
    // Predicated region
    $region9: #{difnet_encoder_forward.21} parent=5 // pred_check
      _
    $region10: #{difnet_encoder_forward.21} parent=5 // pred_check_branch
      %169 = sbr.rel (%p166) target = $region12
    $region11: #{difnet_encoder_forward.21} parent=5 // pred_region
      %s170 = ssub.s32 %s10, 1
    $region12: #{difnet_encoder_forward.21} parent=5 // pred_fallthru
      _
    %p171 = scmp.lt.s32.totalorder %s10, 2
    // Predicated region
    $region13: #{difnet_encoder_forward.21} parent=5 // pred_check
      %p172 = pneg %p171
    $region14: #{difnet_encoder_forward.21} parent=5 // pred_check_branch
      %174 = sbr.rel (%p172) target = $region16
    $region15: #{difnet_encoder_forward.21} parent=5 // pred_region
      // Predicated region
      $region17: #{difnet_encoder_forward.21} parent=15 // pred_check
        %p175 = pneg %p44
      $region18: #{difnet_encoder_forward.21} parent=15 // pred_check_branch
        %177 = sbr.rel (%p175) target = $region20
      $region19: #{difnet_encoder_forward.21} parent=15 // pred_region
        %p178 = scmp.lt.s32.totalorder %s17, 1
        %s179 = scalar_select %p178, %s17, 1
        %p180 = scmp.lt.s32.totalorder %s18, 0
        %s181 = scalar_select %p180, %s18, 0
        %s182 = sadd.s32 %s181, %s179
        %s183 = smul.addr %s182, 4
        %s184 = scalar_lea.vmem %s0, %s183
      $region20: #{difnet_encoder_forward.21} parent=15 // pred_fallthru
        _
      // Predicated region
      $region21: #{difnet_encoder_forward.21} parent=15 // pred_check
        %p185 = pneg %p70
      $region22: #{difnet_encoder_forward.21} parent=15 // pred_check_branch
        %187 = sbr.rel (%p185) target = $region24
      $region23: #{difnet_encoder_forward.21} parent=15 // pred_region
        %p188 = scmp.lt.s32.totalorder %s17, 1
        %s189 = scalar_select %p188, %s17, 1
        %s190 = smul.addr %s189, 4
        %s191 = scalar_lea.vmem %s1, %s190
      $region24: #{difnet_encoder_forward.21} parent=15 // pred_fallthru
        _
      // Predicated region
      $region25: #{difnet_encoder_forward.21} parent=15 // pred_check
        %p192 = pneg %p96
      $region26: #{difnet_encoder_forward.21} parent=15 // pred_check_branch
        %194 = sbr.rel (%p192) target = $region28
      $region27: #{difnet_encoder_forward.21} parent=15 // pred_region
        %p195 = scmp.lt.s32.totalorder %s17, 1
        %s196 = scalar_select %p195, %s17, 1
        %s197 = smul.addr %s196, 4
        %s198 = scalar_lea.vmem %s2, %s197
      $region28: #{difnet_encoder_forward.21} parent=15 // pred_fallthru
        _
      // Predicated region
      $region29: #{difnet_encoder_forward.21} parent=15 // pred_check
        %p199 = pneg %p122
      $region30: #{difnet_encoder_forward.21} parent=15 // pred_check_branch
        %201 = sbr.rel (%p199) target = $region32
      $region31: #{difnet_encoder_forward.21} parent=15 // pred_region
        %p202 = scmp.lt.s32.totalorder %s17, 1
        %s203 = scalar_select %p202, %s17, 1
        %s204 = scalar_lea.vmem %s3, %s203
      $region32: #{difnet_encoder_forward.21} parent=15 // pred_fallthru
        _
    $region16: #{difnet_encoder_forward.21} parent=5 // pred_fallthru
      _
    %p205 = scmp.le.s32.totalorder 1, %s10
    %p206 = scmp.lt.s32.totalorder %s10, 3
    %p207 = pnand %p205, %p206
    %p208 = pneg %p207
    // Predicated region
    $region33: #{difnet_encoder_forward.21} parent=5 // pred_check
      _
    $region34: #{difnet_encoder_forward.21} parent=5 // pred_check_branch
      %210 = sbr.rel (%p207) target = $region36
    $region35: #{difnet_encoder_forward.21} parent=5 // pred_region
      %s211 = ssub.s32 %s10, 1
      %p212 = scmp.lt.s32.totalorder %s19, 1
      %s213 = scalar_select %p212, %s19, 1
      %p214 = scmp.lt.s32.totalorder %s20, 0
      %s215 = scalar_select %p214, %s20, 0
      %s216 = sadd.s32 %s215, %s213
      %s217 = smul.addr %s216, 4
      %s218 = scalar_lea.vmem %s0, %s217
      %p219 = pneg %p50
      %p220 = pneg %p47
      %p221 = scmp.lt.s32.totalorder %s19, 1
      %s222 = scalar_select %p221, %s19, 1
      %s223 = smul.addr %s222, 4
      %s224 = scalar_lea.vmem %s1, %s223
      %p225 = pneg %p76
      %p226 = pneg %p73
      %p227 = scmp.lt.s32.totalorder %s19, 1
      %s228 = scalar_select %p227, %s19, 1
      %s229 = smul.addr %s228, 4
      %s230 = scalar_lea.vmem %s2, %s229
      %p231 = pneg %p102
      %p232 = pneg %p99
      %p233 = scmp.lt.s32.totalorder %s19, 1
      %s234 = scalar_select %p233, %s19, 1
      %s235 = scalar_lea.vmem %s3, %s234
      %p236 = pneg %p128
      %p237 = pneg %p125
      %p238 = pneg %p156
      %p239 = pneg %p153
      %p240 = scmp.lt.s32.totalorder %s19, 1
      %s241 = scalar_select %p240, %s19, 1
      %p242 = scmp.lt.s32.totalorder %s20, 0
      %s243 = scalar_select %p242, %s20, 0
      %s244 = sadd.s32 %s243, %s241
      %s245 = smul.addr %s244, 4
      %s246 = scalar_lea.vmem %s4, %s245
      %p247 = scmp.lt.s32.totalorder %s19, 1
      %s248 = scalar_select %p247, %s19, 1
      %p249 = scmp.lt.s32.totalorder %s20, 0
      %s250 = scalar_select %p249, %s20, 0
      %s251 = sadd.s32 %s250, %s248
      %s252 = smul.addr %s251, 4
      %s253 = scalar_lea.vmem %s0, %s252
      %p254 = scmp.lt.s32.totalorder %s19, 1
      %s255 = scalar_select %p254, %s19, 1
      %s256 = smul.addr %s255, 4
      %s257 = scalar_lea.vmem %s1, %s256
      %p258 = scmp.lt.s32.totalorder %s19, 1
      %s259 = scalar_select %p258, %s19, 1
      %s260 = smul.addr %s259, 4
      %s261 = scalar_lea.vmem %s2, %s260
      %p262 = scmp.lt.s32.totalorder %s19, 1
      %s263 = scalar_select %p262, %s19, 1
      %s264 = scalar_lea.vmem %s3, %s263
      %p265 = scmp.lt.s32.totalorder %s19, 1
      %s266 = scalar_select %p265, %s19, 1
      %p267 = scmp.lt.s32.totalorder %s20, 0
      %s268 = scalar_select %p267, %s20, 0
      %s269 = sadd.s32 %s268, %s266
      %s270 = smul.addr %s269, 4
      %s271 = scalar_lea.vmem %s4, %s270
      %v273 = vld [vmem:[%s264] sm:$0x1]
      %v274 = vld [vmem:[%s253] sm:$0xf]
      %v275 = vld [vmem:[%s257] sm:$0xf]
      %v276 = vld [vmem:[%s261] sm:$0xf]
      %v278 = vperm.slane %v273, 0
      %vm280 = vcmask 64512
      %v282 = vsel %vm280, %v274, 0
      %v285 = vsel %vm280, %v275, 0
      %287 = vmatpush.bf16.xpose.msra.mxu0 0
      %288 = vmatpush.bf16.xpose.msra.mxu0 0
      %289 = vmatpush.bf16.xpose.msra.mxu0 0
      %290 = vmatpush.bf16.xpose.msra.mxu0 0
      %291 = vmatpush.bf16.xpose.msra.mxu0 0
      %292 = vmatpush.bf16.xpose.msra.mxu0 0
      %293 = vmatpush.bf16.xpose.msra.mxu0 0
      %294 = vmatpush.bf16.xpose.msra.mxu0 %v285
      %295 = vmatmul.bf16.gmra.mxu0 %v282
      %v296 = vpop.f32.mrf.mxu0
      %v297 = vadd.f32 %v278, %v296
      %v298 = vpop.f32.mrf.mxu0
      %299 = vdwg.mxu0
      %v300 = vsel %vm280, %v297, -inf
      %301 = vmax.xlane.f32.xlu0 %v300
      %v302 = vpop.xlane.xlu0 %301
      %v303 = vsub.f32 %v297, %v302
      %v304 = vmul.f32 %v303, 1.442695
      %v305 = vpow.pop %v304
      %v306 = vsel %vm280, %v305, 0.0
      %307 = vadd.xlane.f32.xlu0 %v306
      %v308 = vpop.xlane.xlu0 %307
      %v309 = vrcp.pop %v308
      %v310 = vpack.c.bf16 %v305, %v305
      %v312 = vsel %vm280, %v310, 0
      %vm314 = vcmask 1043456
      %v316 = vsel %vm314, %v276, 0
      %318 = vmatpush.bf16.msra.mxu0 0
      %319 = vmatpush.bf16.msra.mxu0 0
      %320 = vmatpush.bf16.msra.mxu0 0
      %321 = vmatpush.bf16.msra.mxu0 0
      %322 = vmatpush.bf16.msra.mxu0 0
      %323 = vmatpush.bf16.msra.mxu0 0
      %324 = vmatpush.bf16.msra.mxu0 0
      %325 = vmatpush.bf16.msra.mxu0 %v316
      %326 = vmatmul.bf16.gmra.mxu0 %v312
      %v327 = vpop.f32.mrf.mxu0
      %v328 = vadd.f32 0.0, %v327
      %v329 = vpop.f32.mrf.mxu0
      %330 = vdwg.mxu0
      %v331 = vmul.f32 %v328, %v309
      %v332 = vpack.c.bf16 %v331, %v331
      %vm333 = vcmask 60416
      %334 = vst.msk [vmem:[%s271] sm:$0xf] %vm333, %v332
      %v335 = vld [vmem:[%s253] sm:$0xf]
      %v336 = vld [vmem:[%s257] sm:$0xf]
      %v337 = vld [vmem:[%s261] sm:$0xf]
      %v339 = vunpack.c.l.b16 %v335
      %v340 = vpack.c.b16 %v339, %v339
      %341 = vrot.lane.b32.xlu0 %v340, 120
      %v342 = vpop.permute.xlu0 %341
      %v344 = vunpack.c.l.b16 %v336
      %v345 = vpack.c.b16 %v344, %v344
      %346 = vrot.lane.b32.xlu0 %v345, 120
      %v347 = vpop.permute.xlu0 %346
      %v349 = vsel %vm280, %v342, 0
      %v352 = vsel %vm280, %v347, 0
      %354 = vmatpush.bf16.xpose.msra.mxu0 0
      %355 = vmatpush.bf16.xpose.msra.mxu0 0
      %356 = vmatpush.bf16.xpose.msra.mxu0 0
      %357 = vmatpush.bf16.xpose.msra.mxu0 0
      %358 = vmatpush.bf16.xpose.msra.mxu0 0
      %359 = vmatpush.bf16.xpose.msra.mxu0 0
      %360 = vmatpush.bf16.xpose.msra.mxu0 0
      %361 = vmatpush.bf16.xpose.msra.mxu0 %v352
      %362 = vmatmul.bf16.gmra.mxu0 %v349
      %v363 = vpop.f32.mrf.mxu0
      %v364 = vadd.f32 %v278, %v363
      %v365 = vpop.f32.mrf.mxu0
      %366 = vdwg.mxu0
      %v367 = vsel %vm280, %v364, -inf
      %368 = vmax.xlane.f32.xlu0 %v367
      %v369 = vpop.xlane.xlu0 %368
      %v370 = vsub.f32 %v364, %v369
      %v371 = vmul.f32 %v370, 1.442695
      %v372 = vpow.pop %v371
      %v373 = vsel %vm280, %v372, 0.0
      %374 = vadd.xlane.f32.xlu0 %v373
      %v375 = vpop.xlane.xlu0 %374
      %v376 = vrcp.pop %v375
      %v377 = vpack.c.bf16 %v372, %v372
      %v379 = vunpack.c.l.b16 %v337
      %v380 = vpack.c.b16 %v379, %v379
      %381 = vrot.lane.b32.xlu0 %v380, 120
      %v382 = vpop.permute.xlu0 %381
      %v384 = vsel %vm280, %v377, 0
      %v387 = vsel %vm314, %v382, 0
      %389 = vmatpush.bf16.msra.mxu0 0
      %390 = vmatpush.bf16.msra.mxu0 0
      %391 = vmatpush.bf16.msra.mxu0 0
      %392 = vmatpush.bf16.msra.mxu0 0
      %393 = vmatpush.bf16.msra.mxu0 0
      %394 = vmatpush.bf16.msra.mxu0 0
      %395 = vmatpush.bf16.msra.mxu0 0
      %396 = vmatpush.bf16.msra.mxu0 %v387
      %397 = vmatmul.bf16.gmra.mxu0 %v384
      %v398 = vpop.f32.mrf.mxu0
      %v399 = vadd.f32 0.0, %v398
      %v400 = vpop.f32.mrf.mxu0
      %401 = vdwg.mxu0
      %v402 = vmul.f32 %v399, %v376
      %v403 = vpack.c.bf16 %v402, %v402
      %405 = vrot.lane.b32.xlu0 %v403, 8
      %v406 = vpop.permute.xlu0 %405
      %vm408 = vcmask 126016
      %409 = vst.msk [vmem:[%s271] sm:$0xf] %vm408, %v406
      %v410 = vld [vmem:[%s253] sm:$0xf]
      %v411 = vld [vmem:[%s257] sm:$0xf]
      %v412 = vld [vmem:[%s261] sm:$0xf]
      %v414 = vunpack.c.l.b16 %v410
      %v415 = vpack.c.b16 %v414, %v414
      %416 = vrot.lane.b32.xlu0 %v415, 112
      %v417 = vpop.permute.xlu0 %416
      %v419 = vunpack.c.l.b16 %v411
      %v420 = vpack.c.b16 %v419, %v419
      %421 = vrot.lane.b32.xlu0 %v420, 112
      %v422 = vpop.permute.xlu0 %421
      %v424 = vsel %vm280, %v417, 0
      %v427 = vsel %vm280, %v422, 0
      %429 = vmatpush.bf16.xpose.msra.mxu0 0
      %430 = vmatpush.bf16.xpose.msra.mxu0 0
      %431 = vmatpush.bf16.xpose.msra.mxu0 0
      %432 = vmatpush.bf16.xpose.msra.mxu0 0
      %433 = vmatpush.bf16.xpose.msra.mxu0 0
      %434 = vmatpush.bf16.xpose.msra.mxu0 0
      %435 = vmatpush.bf16.xpose.msra.mxu0 0
      %436 = vmatpush.bf16.xpose.msra.mxu0 %v427
      %437 = vmatmul.bf16.gmra.mxu0 %v424
      %v438 = vpop.f32.mrf.mxu0
      %v439 = vadd.f32 %v278, %v438
      %v440 = vpop.f32.mrf.mxu0
      %441 = vdwg.mxu0
      %v442 = vsel %vm280, %v439, -inf
      %443 = vmax.xlane.f32.xlu0 %v442
      %v444 = vpop.xlane.xlu0 %443
      %v445 = vsub.f32 %v439, %v444
      %v446 = vmul.f32 %v445, 1.442695
      %v447 = vpow.pop %v446
      %v448 = vsel %vm280, %v447, 0.0
      %449 = vadd.xlane.f32.xlu0 %v448
      %v450 = vpop.xlane.xlu0 %449
      %v451 = vrcp.pop %v450
      %v452 = vpack.c.bf16 %v447, %v447
      %v454 = vunpack.c.l.b16 %v412
      %v455 = vpack.c.b16 %v454, %v454
      %456 = vrot.lane.b32.xlu0 %v455, 112
      %v457 = vpop.permute.xlu0 %456
      %v459 = vsel %vm280, %v452, 0
      %v462 = vsel %vm314, %v457, 0
      %464 = vmatpush.bf16.msra.mxu0 0
      %465 = vmatpush.bf16.msra.mxu0 0
      %466 = vmatpush.bf16.msra.mxu0 0
      %467 = vmatpush.bf16.msra.mxu0 0
      %468 = vmatpush.bf16.msra.mxu0 0
      %469 = vmatpush.bf16.msra.mxu0 0
      %470 = vmatpush.bf16.msra.mxu0 0
      %471 = vmatpush.bf16.msra.mxu0 %v462
      %472 = vmatmul.bf16.gmra.mxu0 %v459
      %v473 = vpop.f32.mrf.mxu0
      %v474 = vadd.f32 0.0, %v473
      %v475 = vpop.f32.mrf.mxu0
      %476 = vdwg.mxu0
      %v477 = vmul.f32 %v474, %v451
      %v478 = vpack.c.bf16 %v477, %v477
      %480 = vrot.lane.b32.xlu0 %v478, 16
      %v481 = vpop.permute.xlu0 %480
      %vm483 = vcmask 191616
      %484 = vst.msk [vmem:[%s271] sm:$0xf] %vm483, %v481
      %v485 = vld [vmem:[%s253] sm:$0xf]
      %v486 = vld [vmem:[%s257] sm:$0xf]
      %v487 = vld [vmem:[%s261] sm:$0xf]
      %v489 = vunpack.c.l.b16 %v485
      %v490 = vpack.c.b16 %v489, %v489
      %491 = vrot.lane.b32.xlu0 %v490, 104
      %v492 = vpop.permute.xlu0 %491
      %v494 = vunpack.c.l.b16 %v486
      %v495 = vpack.c.b16 %v494, %v494
      %496 = vrot.lane.b32.xlu0 %v495, 104
      %v497 = vpop.permute.xlu0 %496
      %v499 = vsel %vm280, %v492, 0
      %v502 = vsel %vm280, %v497, 0
      %504 = vmatpush.bf16.xpose.msra.mxu0 0
      %505 = vmatpush.bf16.xpose.msra.mxu0 0
      %506 = vmatpush.bf16.xpose.msra.mxu0 0
      %507 = vmatpush.bf16.xpose.msra.mxu0 0
      %508 = vmatpush.bf16.xpose.msra.mxu0 0
      %509 = vmatpush.bf16.xpose.msra.mxu0 0
      %510 = vmatpush.bf16.xpose.msra.mxu0 0
      %511 = vmatpush.bf16.xpose.msra.mxu0 %v502
      %512 = vmatmul.bf16.gmra.mxu0 %v499
      %v513 = vpop.f32.mrf.mxu0
      %v514 = vadd.f32 %v278, %v513
      %v515 = vpop.f32.mrf.mxu0
      %516 = vdwg.mxu0
      %v517 = vsel %vm280, %v514, -inf
      %518 = vmax.xlane.f32.xlu0 %v517
      %v519 = vpop.xlane.xlu0 %518
      %v520 = vsub.f32 %v514, %v519
      %v521 = vmul.f32 %v520, 1.442695
      %v522 = vpow.pop %v521
      %v523 = vsel %vm280, %v522, 0.0
      %524 = vadd.xlane.f32.xlu0 %v523
      %v525 = vpop.xlane.xlu0 %524
      %v526 = vrcp.pop %v525
      %v527 = vpack.c.bf16 %v522, %v522
      %v529 = vunpack.c.l.b16 %v487
      %v530 = vpack.c.b16 %v529, %v529
      %531 = vrot.lane.b32.xlu0 %v530, 104
      %v532 = vpop.permute.xlu0 %531
      %v534 = vsel %vm280, %v527, 0
      %v537 = vsel %vm314, %v532, 0
      %539 = vmatpush.bf16.msra.mxu0 0
      %540 = vmatpush.bf16.msra.mxu0 0
      %541 = vmatpush.bf16.msra.mxu0 0
      %542 = vmatpush.bf16.msra.mxu0 0
      %543 = vmatpush.bf16.msra.mxu0 0
      %544 = vmatpush.bf16.msra.mxu0 0
      %545 = vmatpush.bf16.msra.mxu0 0
      %546 = vmatpush.bf16.msra.mxu0 %v537
      %547 = vmatmul.bf16.gmra.mxu0 %v534
      %v548 = vpop.f32.mrf.mxu0
      %v549 = vadd.f32 0.0, %v548
      %v550 = vpop.f32.mrf.mxu0
      %551 = vdwg.mxu0
      %v552 = vmul.f32 %v549, %v526
      %v553 = vpack.c.bf16 %v552, %v552
      %555 = vrot.lane.b32.xlu0 %v553, 24
      %v556 = vpop.permute.xlu0 %555
      %vm558 = vcmask 257216
      %559 = vst.msk [vmem:[%s271] sm:$0xf] %vm558, %v556
      %p560 = scmp.lt.s32.totalorder %s19, 1
      %s561 = scalar_select %p560, %s19, 1
      %p562 = scmp.lt.s32.totalorder %s20, 0
      %s563 = scalar_select %p562, %s20, 0
      %s564 = sadd.s32 %s563, %s561
      %s565 = smul.addr %s564, 4
      %s566 = scalar_lea.vmem %s4, %s565
      // Predicated region
      $region37: #{difnet_encoder_forward.21} parent=35 // pred_check
        %p567 = pneg %p153
      $region38: #{difnet_encoder_forward.21} parent=35 // pred_check_branch
        %569 = sbr.rel (%p567) target = $region40
      $region39: #{difnet_encoder_forward.21} parent=35 // pred_region
        _
      $region40: #{difnet_encoder_forward.21} parent=35 // pred_fallthru
        _
    $region36: #{difnet_encoder_forward.21} parent=5 // pred_fallthru
      _
    %p570 = scmp.le.s32.totalorder 2, %s10
    // Predicated region
    $region41: #{difnet_encoder_forward.21} parent=5 // pred_check
      %p571 = pneg %p570
    $region42: #{difnet_encoder_forward.21} parent=5 // pred_check_branch
      %573 = sbr.rel (%p571) target = $region44
    $region43: #{difnet_encoder_forward.21} parent=5 // pred_region
      %s574 = ssub.s32 %s10, 2
      // Predicated region
      $region45: #{difnet_encoder_forward.21} parent=43 // pred_check
        %p575 = pneg %p159
      $region46: #{difnet_encoder_forward.21} parent=43 // pred_check_branch
        %577 = sbr.rel (%p575) target = $region48
      $region47: #{difnet_encoder_forward.21} parent=43 // pred_region
        %p578 = scmp.lt.s32.totalorder %s21, 1
        %s579 = scalar_select %p578, %s21, 1
        %p580 = scmp.lt.s32.totalorder %s22, 0
        %s581 = scalar_select %p580, %s22, 0
        %s582 = sadd.s32 %s581, %s579
        %s583 = smul.addr %s582, 4
        %s584 = scalar_lea.vmem %s4, %s583
      $region48: #{difnet_encoder_forward.21} parent=43 // pred_fallthru
        _
    $region44: #{difnet_encoder_forward.21} parent=5 // pred_fallthru
      _
  $region6: #{difnet_encoder_forward.21} parent=0 // loop_footer
    %s14 = sadd.s32 1, %s10
  $region7: #{difnet_encoder_forward.21} parent=0 // loop_footer_branch
    %9 = sbr.rel target = $region3
  $region8: #{difnet_encoder_forward.21} parent=0 // loop_exit
    _

// kernel: difnet_encoder_forward.23
$region0: #{difnet_encoder_forward.23}
  #allocation0 [shape = 'u32[]', space=smem, size = 0x4, offset = 0x4, fixed_abs, tag = 'smem constant byte address 0x4 - core index']
  #allocation1 [shape = 'u32[72,128]{1,0:T(1,128)}', space=vmem, size = 0x9000, scoped, tag = 'internal scratch']
  %s0 = inlined_call_operand.vmem [shape: bf16[1,16,32], index: 0, kind: input, shape index: {}]
  %s1 = inlined_call_operand.vmem [shape: bf16[32,64], index: 1, kind: input, shape index: {}]
  %s2 = inlined_call_operand.vmem [shape: f32[1,64], index: 2, kind: input, shape index: {}]
  %s3 = inlined_call_operand.vmem [shape: bf16[64,32], index: 3, kind: input, shape index: {}]
  %s4 = inlined_call_operand.vmem [shape: f32[1,32], index: 4, kind: input, shape index: {}]
  %s5 = inlined_call_operand.vmem [shape: f32[1,1,32], index: 5, kind: input, shape index: {}]
  %s6 = inlined_call_operand.vmem [shape: f32[1,1,32], index: 6, kind: input, shape index: {}]
  %s7 = inlined_call_operand.vmem [shape: bf16[1,16,32], index: 7, kind: output, shape index: {}]
  %s8 = sld [smem:[#allocation0]]
  $region38: #{difnet_encoder_forward.23} parent=0
    _
  %s10 = ssub.s32 1, %s8
  %s11 = scalar_select 0, %s10, %s8
  // Predicated region
  $region2: #{difnet_encoder_forward.23} parent=0 // pred_check
    _
  $region3: #{difnet_encoder_forward.23} parent=0 // pred_check_branch
    %13 = sbr.rel (0) target = $region5
  $region4: #{difnet_encoder_forward.23} parent=0 // pred_region
    _
  $region5: #{difnet_encoder_forward.23} parent=0 // pred_fallthru
    _
  // Predicated region
  $region6: #{difnet_encoder_forward.23} parent=0 // pred_check
    _
  $region7: #{difnet_encoder_forward.23} parent=0 // pred_check_branch
    %15 = sbr.rel (0) target = $region9
  $region8: #{difnet_encoder_forward.23} parent=0 // pred_region
    _
  $region9: #{difnet_encoder_forward.23} parent=0 // pred_fallthru
    _
  // Predicated region
  $region10: #{difnet_encoder_forward.23} parent=0 // pred_check
    _
  $region11: #{difnet_encoder_forward.23} parent=0 // pred_check_branch
    %17 = sbr.rel (0) target = $region13
  $region12: #{difnet_encoder_forward.23} parent=0 // pred_region
    _
  $region13: #{difnet_encoder_forward.23} parent=0 // pred_fallthru
    _
  // Predicated region
  $region14: #{difnet_encoder_forward.23} parent=0 // pred_check
    _
  $region15: #{difnet_encoder_forward.23} parent=0 // pred_check_branch
    %19 = sbr.rel (0) target = $region17
  $region16: #{difnet_encoder_forward.23} parent=0 // pred_region
    _
  $region17: #{difnet_encoder_forward.23} parent=0 // pred_fallthru
    _
  // Predicated region
  $region18: #{difnet_encoder_forward.23} parent=0 // pred_check
    _
  $region19: #{difnet_encoder_forward.23} parent=0 // pred_check_branch
    %21 = sbr.rel (0) target = $region21
  $region20: #{difnet_encoder_forward.23} parent=0 // pred_region
    _
  $region21: #{difnet_encoder_forward.23} parent=0 // pred_fallthru
    _
  // Predicated region
  $region22: #{difnet_encoder_forward.23} parent=0 // pred_check
    _
  $region23: #{difnet_encoder_forward.23} parent=0 // pred_check_branch
    %23 = sbr.rel (0) target = $region25
  $region24: #{difnet_encoder_forward.23} parent=0 // pred_region
    _
  $region25: #{difnet_encoder_forward.23} parent=0 // pred_fallthru
    _
  // Predicated region
  $region26: #{difnet_encoder_forward.23} parent=0 // pred_check
    _
  $region27: #{difnet_encoder_forward.23} parent=0 // pred_check_branch
    %25 = sbr.rel (0) target = $region29
  $region28: #{difnet_encoder_forward.23} parent=0 // pred_region
    _
  $region29: #{difnet_encoder_forward.23} parent=0 // pred_fallthru
    _
  %v27 = vld [vmem:[%s0] sm:$0xf]
  %v28 = vld [vmem:[%s0 + $0x4] sm:$0xf]
  %v29 = vld [vmem:[%s1] sm:$0xf]
  %v30 = vld [vmem:[%s1 + $0x4] sm:$0xf]
  %v31 = vld [vmem:[%s1 + $0x8] sm:$0xf]
  %v32 = vld [vmem:[%s1 + $0xc] sm:$0xf]
  %v33 = vld [vmem:[%s2] sm:$0x1]
  %v35 = vperm.slane %v33, 0
  %v39 = vunpack.c.l.b16 %v27
  %v40 = vunpack.c.l.b16 %v28
  %v41 = vpack.c.b16 %v40, %v39
  %v46 = vunpack.c.l.b16 %v29
  %v47 = vunpack.c.l.b16 %v30
  %v48 = vunpack.c.l.b16 %v31
  %v49 = vunpack.c.l.b16 %v32
  %v50 = vpack.c.b16 %v47, %v46
  %v51 = vpack.c.b16 %v49, %v48
  %vm54 = vcmask 261120
  %v56 = vsel %vm54, %v41, 0
  %58 = vmatpush.bf16.msra.mxu0 0
  %59 = vmatpush.bf16.msra.mxu0 0
  %60 = vmatpush.bf16.msra.mxu0 0
  %61 = vmatpush.bf16.msra.mxu0 0
  %62 = vmatpush.bf16.msra.mxu0 0
  %63 = vmatpush.bf16.msra.mxu0 0
  %64 = vmatpush.bf16.msra.mxu0 %v51
  %65 = vmatpush.bf16.msra.mxu0 %v50
  %66 = vmatmul.bf16.gmra.mxu0 %v56
  %v67 = vpop.f32.mrf.mxu0
  %v68 = vadd.f32 %v35, %v67
  %v69 = vpop.f32.mrf.mxu0
  %v70 = vadd.f32 %v35, %v69
  %71 = vdwg.mxu0
  %v72 = vmax.f32 %v68, 0.0
  %v73 = vmax.f32 %v70, 0.0
  %v74 = vpack.c.bf16 %v73, %v72
  %v75 = vld [vmem:[%s3] sm:$0xf]
  %v76 = vld [vmem:[%s3 + $0x4] sm:$0xf]
  %v77 = vld [vmem:[%s3 + $0x8] sm:$0xf]
  %v78 = vld [vmem:[%s3 + $0xc] sm:$0xf]
  %v79 = vld [vmem:[%s3 + $0x10] sm:$0xf]
  %v80 = vld [vmem:[%s3 + $0x14] sm:$0xf]
  %v81 = vld [vmem:[%s3 + $0x18] sm:$0xf]
  %v82 = vld [vmem:[%s3 + $0x1c] sm:$0xf]
  %v83 = vld [vmem:[%s4] sm:$0x1]
  %v85 = vperm.slane %v83, 0
  %v95 = vunpack.c.l.b16 %v75
  %v96 = vunpack.c.l.b16 %v76
  %v97 = vunpack.c.l.b16 %v77
  %v98 = vunpack.c.l.b16 %v78
  %v99 = vunpack.c.l.b16 %v79
  %v100 = vunpack.c.l.b16 %v80
  %v101 = vunpack.c.l.b16 %v81
  %v102 = vunpack.c.l.b16 %v82
  %v103 = vpack.c.b16 %v96, %v95
  %v104 = vpack.c.b16 %v98, %v97
  %v105 = vpack.c.b16 %v100, %v99
  %v106 = vpack.c.b16 %v102, %v101
  %vm111 = vcmask 523264
  %v113 = vsel %vm111, %v74, 0
  %115 = vmatpush.bf16.msra.mxu0 0
  %116 = vmatpush.bf16.msra.mxu0 0
  %117 = vmatpush.bf16.msra.mxu0 0
  %118 = vmatpush.bf16.msra.mxu0 0
  %119 = vmatpush.bf16.msra.mxu0 %v106
  %120 = vmatpush.bf16.msra.mxu0 %v105
  %121 = vmatpush.bf16.msra.mxu0 %v104
  %122 = vmatpush.bf16.msra.mxu0 %v103
  %123 = vmatmul.bf16.gmra.mxu0 %v113
  %v124 = vpop.f32.mrf.mxu0
  %v125 = vadd.f32 %v85, %v124
  %v126 = vpop.f32.mrf.mxu0
  %v127 = vadd.f32 %v85, %v126
  %128 = vdwg.mxu0
  %v129 = vunpack.c.l.bf16 %v27
  %v130 = vunpack.c.l.bf16 %v28
  %v131 = vadd.f32 %v129, %v125
  %v132 = vadd.f32 %v130, %v127
  %v133 = vsel %vm54, %v131, 0.0
  %134 = vadd.xlane.f32.xlu0 %v133
  %v135 = vpop.xlane.xlu0 %134
  %v136 = vsel %vm54, %v132, 0.0
  %137 = vadd.xlane.f32.xlu0 %v136
  %v138 = vpop.xlane.xlu0 %137
  %v139 = vrcp.pop 32.0
  %v140 = vmul.f32 32.0, %v139
  %v141 = vsub.f32 1.0, %v140
  %v142 = vmul.f32 %v139, %v141
  %v143 = vadd.f32 %v139, %v142
  %vm144 = vweird.f32 %v139
  %v145 = vsel %vm144, %v139, %v143
  %v146 = vmul.f32 %v135, %v145
  %v147 = vmul.f32 %v138, %v145
  %v148 = vsub.f32 %v131, %v146
  %v149 = vsub.f32 %v132, %v147
  %v150 = vmul.f32 %v148, %v148
  %v151 = vmul.f32 %v149, %v149
  %v152 = vsel %vm54, %v150, 0.0
  %153 = vadd.xlane.f32.xlu0 %v152
  %v154 = vpop.xlane.xlu0 %153
  %v155 = vsel %vm54, %v151, 0.0
  %156 = vadd.xlane.f32.xlu0 %v155
  %v157 = vpop.xlane.xlu0 %156
  %v158 = vmul.f32 %v154, %v145
  %v159 = vmul.f32 %v157, %v145
  %v160 = vadd.f32 %v158, 1e-05
  %v161 = vadd.f32 %v159, 1e-05
  %v162 = vrsqrt.pop %v160
  %v163 = vmul.f32 %v162, %v160
  %v164 = vmul.f32 %v163, %v162
  %v165 = vmul.f32 0.5, %v164
  %v166 = vsub.f32 1.5, %v165
  %v167 = vmul.f32 %v162, %v166
  %vm168 = vweird.f32 %v160
  %vm169 = vweird.f32 %v162
  %vm170 = vmor %vm168, %vm169
  %v171 = vsel %vm170, %v162, %v167
  %v172 = vrsqrt.pop %v161
  %v173 = vmul.f32 %v172, %v161
  %v174 = vmul.f32 %v173, %v172
  %v175 = vmul.f32 0.5, %v174
  %v176 = vsub.f32 1.5, %v175
  %v177 = vmul.f32 %v172, %v176
  %vm178 = vweird.f32 %v161
  %vm179 = vweird.f32 %v172
  %vm180 = vmor %vm178, %vm179
  %v181 = vsel %vm180, %v172, %v177
  %v182 = vmul.f32 %v148, %v171
  %v183 = vmul.f32 %v149, %v181
  %v184 = vld [vmem:[%s5] sm:$0x1]
  %v186 = vperm.slane %v184, 0
  %v188 = vmul.f32 %v182, %v186
  %v189 = vmul.f32 %v183, %v186
  %v190 = vld [vmem:[%s6] sm:$0x1]
  %v192 = vperm.slane %v190, 0
  %v194 = vadd.f32 %v188, %v192
  %v195 = vadd.f32 %v189, %v192
  %v196 = vpack.c.bf16 %v194, %v194
  %v197 = vpack.c.bf16 %v195, %v195
  %vm198 = vcmask 257024
  %199 = vst.msk [vmem:[%s7] sm:$0xf] %vm198, %v196
  %200 = vst.msk [vmem:[%s7 + $0x4] sm:$0xf] %vm198, %v197
  // Predicated region
  $region30: #{difnet_encoder_forward.23} parent=0 // pred_check
    _
  $region31: #{difnet_encoder_forward.23} parent=0 // pred_check_branch
    %202 = sbr.rel (0) target = $region33
  $region32: #{difnet_encoder_forward.23} parent=0 // pred_region
    _
  $region33: #{difnet_encoder_forward.23} parent=0 // pred_fallthru
    _
  // Predicated region
  $region34: #{difnet_encoder_forward.23} parent=0 // pred_check
    _
  $region35: #{difnet_encoder_forward.23} parent=0 // pred_check_branch
    %204 = sbr.rel (0) target = $region37
  $region36: #{difnet_encoder_forward.23} parent=0 // pred_region
    _
  $region37: #{difnet_encoder_forward.23} parent=0 // pred_fallthru
    _

</llo_original>
